<compile_context>
chip_gen: v6e
topology: v6e:2x2x1
jax: 0.10.0
libtpu: 0.0.40
codegen_flags: <defaults>
</compile_context>

<pallas_src>
import functools

import jax
import jax.numpy as jnp
from jax.experimental import pallas as pl
from jax.experimental.pallas import tpu as pltpu


def _round_up(x, m):
    return (x + m - 1) // m * m


# ----------------------------------------------------------------------------
# Stage 1 kernel: expand 1x1 matmul (BN scale folded) + bias + ReLU6 ->
# in-kernel zero pad -> depthwise KxK (BN scale folded) + bias + ReLU6,
# plus per-batch channel sums for the SE squeeze.
#   x:  (1, H*W, Cin)   ew: (Cin, Cexp_p)   dw: (K*K, Cexp_p)
#   -> dw_out: (1, H*W, Cexp_p), sum: (1, 1, Cexp_p)
# ----------------------------------------------------------------------------
def _expand_dw_kernel(x_ref, ew_ref, eb_ref, dw_ref, db_ref,
                      dw_out_ref, sum_ref, pad_ref, *, H, W, K, P):
    f32 = jnp.float32
    cexp = ew_ref.shape[-1]
    Hp, Wp = H + 2 * P, W + 2 * P
    sdt = pad_ref.dtype

    # ---- expand 1x1 conv as an MXU matmul (BN scale already in ew) ----------
    y = jnp.dot(x_ref[0], ew_ref[...], preferred_element_type=f32)   # (HW, Cexp_p)
    y = jnp.clip(y + eb_ref[...], 0.0, 6.0)

    # ---- in-kernel zero padding into the VMEM scratch ------------------------
    # Only the thin border strips are cleared each step; the centre is fully
    # overwritten.  No cross-iteration scratch state -> the batch grid axis is
    # safe to mark "parallel" (megacore / dual-TC chips).
    if P > 0:
        pad_ref[pl.ds(0, P), :, :] = jnp.zeros((P, Wp, cexp), sdt)
        pad_ref[pl.ds(P + H, P), :, :] = jnp.zeros((P, Wp, cexp), sdt)
        pad_ref[:, pl.ds(0, P), :] = jnp.zeros((Hp, P, cexp), sdt)
        pad_ref[:, pl.ds(P + W, P), :] = jnp.zeros((Hp, P, cexp), sdt)
    pad_ref[pl.ds(P, H), pl.ds(P, W), :] = y.reshape(H, W, cexp).astype(sdt)

    # ---- depthwise KxK (stride 1), f32 accumulation; taps read straight off
    #      the scratch ref, accumulator initialised with the first tap ---------
    w = dw_ref[...]                                                   # (K*K, Cexp_p) f32
    acc = pad_ref[pl.ds(0, H), pl.ds(0, W), :].astype(f32) * w[0]
    for kh in range(K):
        for kw in range(K):
            if kh == 0 and kw == 0:
                continue
            tap = pad_ref[pl.ds(kh, H), pl.ds(kw, W), :].astype(f32)
            acc = acc + tap * w[kh * K + kw]
    z = jnp.clip(acc + db_ref[0], 0.0, 6.0)                           # (H, W, Cexp_p)
    z2 = z.reshape(H * W, cexp)

    dw_out_ref[0] = z2.astype(dw_out_ref.dtype)
    sum_ref[0] = jnp.sum(z2, axis=0, keepdims=True)                   # f32 squeeze sum


# ----------------------------------------------------------------------------
# Stage 3 kernel: SE channel scale + project 1x1 matmul (BN scale folded) +
# bias, streamed in TM-row tiles (lane-dense Cout_p output stores).
# ----------------------------------------------------------------------------
def _project_kernel(dw_ref, se_ref, pw_ref, pb_ref, o_ref):
    f32 = jnp.float32
    ys = dw_ref[0].astype(f32) * se_ref[0]                            # (TM, Cexp_p)
    out = jnp.dot(ys.astype(pw_ref.dtype), pw_ref[...],
                  preferred_element_type=f32)
    out = out + pb_ref[...]                                           # (TM, Cout_p)
    o_ref[0] = out.astype(o_ref.dtype)


def _pick_row_tile(hw, cap=512):
    """Row tile for stage 3: <= cap (VMEM-friendly on v7x), multiple of 8.
    Never returns a whole-image block when hw > cap; non-divisible tails are
    handled by a cdiv grid with masked final blocks."""
    if hw <= cap:
        return hw
    for t in range(cap, 7, -1):
        if hw % t == 0 and t % 8 == 0:
            return t
    return cap


# ----------------------------------------------------------------------------
# Wrapper
# ----------------------------------------------------------------------------
def mbconv3_forward(x_nchw, params, *, kernel_size=3, padding=1, stride=1,
                    compute_dtype=jnp.float32):
    assert stride == 1, "only stride=1 supported in this kernel"
    N, Cin, H, W = x_nchw.shape
    Cexp = params["expand_w"].shape[1]
    Cout = params["proj_w"].shape[1]
    use_residual = (Cin == Cout) and (stride == 1)
    f32 = jnp.float32
    cdt = jnp.dtype(compute_dtype)
    sdt = jnp.dtype(jnp.bfloat16) if cdt == jnp.dtype(jnp.bfloat16) else jnp.dtype(f32)
    isz, ssz = cdt.itemsize, sdt.itemsize
    K, P = kernel_size, padding
    HW = H * W
    Hp, Wp = H + 2 * P, W + 2 * P
    Cexp_p = _round_up(Cexp, 128)        # lane-dense expanded channels
    Cout_p = _round_up(Cout, 128)        # lane-dense project output channels

    def pad_last(a, to):
        return jnp.pad(a, [(0, 0)] * (a.ndim - 1) + [(0, to - a.shape[-1])])

    row = lambda v: v.reshape(1, -1).astype(f32)

    # ---- fold BN scales into the weights, zero-pad channels to 128 ----------
    ew_p = pad_last(params["expand_w"].astype(f32) * params["expand_scale"][None, :],
                    Cexp_p).astype(cdt)                               # (Cin, Cexp_p)
    eb_p = pad_last(row(params["expand_bias"]), Cexp_p)               # (1, Cexp_p)
    dw_p = pad_last(params["dw_w"].astype(f32) * params["dw_scale"][None, :],
                    Cexp_p)                                           # (K*K, Cexp_p)
    db_p = pad_last(row(params["dw_bias"]), Cexp_p)                   # (1, Cexp_p)
    pw_p = jnp.pad(params["proj_w"].astype(f32) * params["proj_scale"][None, :],
                   ((0, Cexp_p - Cexp), (0, Cout_p - Cout))).astype(cdt)
    pb_p = pad_last(row(params["proj_bias"]), Cout_p)                 # (1, Cout_p)

    # NCHW -> NHWC (channels on the lane axis), pre-flattened rows for stage 1.
    x = jnp.transpose(x_nchw, (0, 2, 3, 1)).astype(cdt)               # (N, H, W, Cin)
    x2 = x.reshape(N, HW, Cin)

    # ---------------- stage 1: fused expand + pad + depthwise ----------------
    vmem1 = (2 * (HW * Cin * isz + Cin * Cexp_p * isz + 3 * Cexp_p * 4
                  + K * K * Cexp_p * 4 + HW * Cexp_p * isz)
             + Hp * Wp * Cexp_p * ssz)
    lim1 = int(min(max(int(1.5 * vmem1), 16 << 20), 48 << 20))
    flops1 = (2 * N * HW * Cin * Cexp_p + 2 * N * HW * Cexp_p * K * K
              + 6 * N * HW * Cexp_p)
    bytes1 = (N * HW * Cin * isz + N * HW * Cexp_p * isz + N * Cexp_p * 4
              + Cin * Cexp_p * isz + (K * K + 2) * Cexp_p * 4)

    dw_out, ch_sum = pl.pallas_call(
        functools.partial(_expand_dw_kernel, H=H, W=W, K=K, P=P),
        out_shape=(jax.ShapeDtypeStruct((N, HW, Cexp_p), cdt),
                   jax.ShapeDtypeStruct((N, 1, Cexp_p), f32)),
        grid=(N,),
        in_specs=[
            pl.BlockSpec((1, HW, Cin), lambda n: (n, 0, 0)),
            # constant-index operands: block index never changes -> no re-DMA
            pl.BlockSpec((Cin, Cexp_p), lambda n: (0, 0)),
            pl.BlockSpec((1, Cexp_p), lambda n: (0, 0)),
            pl.BlockSpec((K * K, Cexp_p), lambda n: (0, 0)),
            pl.BlockSpec((1, Cexp_p), lambda n: (0, 0)),
        ],
        out_specs=(pl.BlockSpec((1, HW, Cexp_p), lambda n: (n, 0, 0)),
                   pl.BlockSpec((1, 1, Cexp_p), lambda n: (n, 0, 0))),
        scratch_shapes=[pltpu.VMEM((Hp, Wp, Cexp_p), sdt)],
        compiler_params=pltpu.CompilerParams(
            dimension_semantics=("parallel",),
            vmem_limit_bytes=lim1),
        cost_estimate=pl.CostEstimate(flops=int(flops1), transcendentals=0,
                                      bytes_accessed=int(bytes1)),
    )(x2, ew_p, eb_p, dw_p, db_p)

    # ---------------- stage 2: tiny SE FCs in plain XLA ----------------------
    squeeze = ch_sum.reshape(N, Cexp_p)[:, :Cexp] * (1.0 / HW)        # f32 mean
    s = jnp.maximum(squeeze @ params["se_w1"].astype(f32)
                    + params["se_b1"].astype(f32)[None, :], 0.0)
    s = jax.nn.sigmoid(s @ params["se_w2"].astype(f32)
                       + params["se_b2"].astype(f32)[None, :])
    se_scale = pad_last(s, Cexp_p).reshape(N, 1, Cexp_p).astype(f32)

    # ---------------- stage 3: SE scale + project 1x1 + bias -----------------
    TM = _pick_row_tile(HW)
    grid3 = (N, pl.cdiv(HW, TM))

    vmem3 = 2 * (TM * Cexp_p * isz + Cexp_p * 4 + Cexp_p * Cout_p * isz
                 + Cout_p * 4 + TM * Cout_p * isz)
    lim3 = int(min(max(int(1.5 * vmem3), 16 << 20), 48 << 20))
    flops3 = 2 * N * HW * Cexp_p * Cout_p + 2 * N * HW * Cexp_p + N * HW * Cout_p
    bytes3 = (N * HW * Cexp_p * isz + N * Cexp_p * 4 + Cexp_p * Cout_p * isz
              + Cout_p * 4 + N * HW * Cout_p * isz)

    out_p = pl.pallas_call(
        _project_kernel,
        out_shape=jax.ShapeDtypeStruct((N, HW, Cout_p), cdt),
        grid=grid3,
        in_specs=[
            pl.BlockSpec((1, TM, Cexp_p), lambda n, j: (n, j, 0)),
            pl.BlockSpec((1, 1, Cexp_p), lambda n, j: (n, 0, 0)),
            pl.BlockSpec((Cexp_p, Cout_p), lambda n, j: (0, 0)),
            pl.BlockSpec((1, Cout_p), lambda n, j: (0, 0)),
        ],
        out_specs=pl.BlockSpec((1, TM, Cout_p), lambda n, j: (n, j, 0)),
        compiler_params=pltpu.CompilerParams(
            dimension_semantics=("parallel", "parallel"),
            vmem_limit_bytes=lim3),
        cost_estimate=pl.CostEstimate(flops=int(flops3), transcendentals=0,
                                      bytes_accessed=int(bytes3)),
    )(dw_out, se_scale, pw_p, pb_p)

    # Slice padded channels off, back to NCHW; residual fuses into this pass.
    out = out_p[:, :, :Cout].astype(f32).reshape(N, H, W, Cout)
    out = jnp.transpose(out, (0, 3, 1, 2))
    if use_residual:
        out = out + x_nchw.astype(f32)
    return out


# ----------------------------------------------------------------------------
# Pure-JAX reference (same math) for a correctness check
# ----------------------------------------------------------------------------
def mbconv3_reference(x_nchw, p, *, kernel_size=3, padding=1):
    N, Cin, H, W = x_nchw.shape
    x = jnp.transpose(x_nchw, (0, 2, 3, 1)).astype(jnp.float32)
    y = jnp.einsum("nhwc,cd->nhwd", x, p["expand_w"])
    y = jnp.clip(y * p["expand_scale"] + p["expand_bias"], 0.0, 6.0)
    pad = padding
    yp = jnp.pad(y, ((0, 0), (pad, pad), (pad, pad), (0, 0)))
    K = kernel_size
    acc = jnp.zeros_like(y)
    for kh in range(K):
        for kw in range(K):
            acc = acc + yp[:, kh:kh + H, kw:kw + W, :] * p["dw_w"][kh * K + kw]
    y = jnp.clip(acc * p["dw_scale"] + p["dw_bias"], 0.0, 6.0)
    sq = jnp.mean(y, axis=(1, 2), keepdims=True)
    s = jnp.maximum(jnp.einsum("nhwc,cd->nhwd", sq, p["se_w1"]) + p["se_b1"], 0.0)
    s = jax.nn.sigmoid(jnp.einsum("nhwc,cd->nhwd", s, p["se_w2"]) + p["se_b2"])
    y = y * s
    out = jnp.einsum("nhwc,cd->nhwd", y, p["proj_w"]) * p["proj_scale"] + p["proj_bias"]
    if Cin == p["proj_w"].shape[1]:
        out = out + x
    return jnp.transpose(out, (0, 3, 1, 2))


def _fold_bn(gamma, beta, mean, var, eps=1e-5):
    scale = gamma / jnp.sqrt(var + eps)
    return scale, beta - mean * scale


def make_params(key, in_ch, out_ch, kernel_size=3, expansion_ratio=6):
    cexp = in_ch * expansion_ratio
    cse = cexp // 16
    assert cse >= 1, "expanded_channels // 16 must be >= 1"
    ks = jax.random.split(key, 12)
    nrm = lambda k, s: (0.1 * jax.random.normal(k, s, jnp.float32))

    def bn(k, c):
        k1, k2, k3 = jax.random.split(k, 3)
        gamma = 1.0 + 0.1 * jax.random.normal(k1, (c,), jnp.float32)
        beta = 0.1 * jax.random.normal(k2, (c,), jnp.float32)
        mean = 0.1 * jax.random.normal(k3, (c,), jnp.float32)
        var = jnp.ones((c,), jnp.float32)
        return _fold_bn(gamma, beta, mean, var)

    es, eb = bn(ks[1], cexp)
    ds, db = bn(ks[3], cexp)
    ps, pb = bn(ks[9], out_ch)
    return dict(
        expand_w=nrm(ks[0], (in_ch, cexp)),
        expand_scale=es, expand_bias=eb,
        dw_w=nrm(ks[2], (kernel_size * kernel_size, cexp)),
        dw_scale=ds, dw_bias=db,
        se_w1=nrm(ks[4], (cexp, cse)), se_b1=nrm(ks[5], (cse,)),
        se_w2=nrm(ks[6], (cse, cexp)), se_b2=nrm(ks[7], (cexp,)),
        proj_w=nrm(ks[8], (cexp, out_ch)),
        proj_scale=ps, proj_bias=pb,
    )


if __name__ == "__main__":
    # Make the f32 matmuls numerically comparable between kernel and reference.
    jax.config.update("jax_default_matmul_precision", "highest")

    key = jax.random.PRNGKey(0)
    kx, kp = jax.random.split(key)
    N, Cin, H, W = 2, 4, 16, 16       # small shapes consistent with the module
    Cout, K = 4, 3                    # in==out, stride=1 -> residual path used
    x = jax.random.normal(kx, (N, Cin, H, W), jnp.float32)
    params = make_params(kp, Cin, Cout, kernel_size=K, expansion_ratio=6)

    ref = jax.block_until_ready(mbconv3_reference(x, params, kernel_size=K, padding=1))

    # f32 path (close to the reference)
    out = jax.block_until_ready(
        mbconv3_forward(x, params, kernel_size=K, padding=1, stride=1,
                        compute_dtype=jnp.float32))
    assert out.shape == (N, Cout, H, W)
    err = float(jnp.max(jnp.abs(out - ref)))
    assert err < 2e-2, f"f32 mismatch vs JAX reference (max abs err {err})"

    # bf16 storage for HBM intermediates / MXU operands / pad scratch
    # (f32 accumulation everywhere) — the v6e/v7x fast path.
    out_bf16 = jax.block_until_ready(
        mbconv3_forward(x, params, kernel_size=K, padding=1, stride=1,
                        compute_dtype=jnp.bfloat16))
    assert out_bf16.shape == (N, Cout, H, W)
    err_bf = float(jnp.max(jnp.abs(out_bf16 - ref)))
    assert err_bf < 2e-1, f"bf16 mismatch vs JAX reference (max abs err {err_bf})"

    print("KERNEL_OK")
</pallas_src>

<mosaic_0001>
module attributes {stable_mosaic.version = 11 : i64} {
  func.func @_expand_dw_kernel(%arg0: i32, %arg1: memref<1x256x4xf32, #tpu.memory_space<vmem>>, %arg2: memref<4x128xf32, #tpu.memory_space<vmem>>, %arg3: memref<1x128xf32, #tpu.memory_space<vmem>>, %arg4: memref<9x128xf32, #tpu.memory_space<vmem>>, %arg5: memref<1x128xf32, #tpu.memory_space<vmem>>, %arg6: memref<1x256x128xf32, #tpu.memory_space<vmem>>, %arg7: memref<1x1x128xf32, #tpu.memory_space<vmem>>, %arg8: memref<18x18x128xf32, #tpu.memory_space<vmem>>) attributes {dimension_semantics = [#tpu.dimension_semantics<parallel>], iteration_bounds = array<i64: 2>, scalar_prefetch = 0 : i64, scratch_operands = 1 : i64, tpu.core_type = #tpu.core_type<tc>, window_params = [{transform_indices = @transform_0, window_bounds = array<i64: 1, 256, 4>}, {pipeline_mode = #tpu.pipeline_mode<synchronous>, transform_indices = @transform_1, window_bounds = array<i64: 4, 128>}, {pipeline_mode = #tpu.pipeline_mode<synchronous>, transform_indices = @transform_2, window_bounds = array<i64: 1, 128>}, {pipeline_mode = #tpu.pipeline_mode<synchronous>, transform_indices = @transform_3, window_bounds = array<i64: 9, 128>}, {pipeline_mode = #tpu.pipeline_mode<synchronous>, transform_indices = @transform_4, window_bounds = array<i64: 1, 128>}, {transform_indices = @transform_5, window_bounds = array<i64: 1, 256, 128>}, {transform_indices = @transform_6, window_bounds = array<i64: 1, 1, 128>}]} {
    %c0 = arith.constant 0 : index
    %c0_0 = arith.constant 0 : index
    %c0_1 = arith.constant 0 : index
    %0 = vector.load %arg1[%c0, %c0_0, %c0_1] : memref<1x256x4xf32, #tpu.memory_space<vmem>>, vector<1x256x4xf32>
    %1 = vector.shape_cast %0 : vector<1x256x4xf32> to vector<256x4xf32>
    %c0_2 = arith.constant 0 : index
    %c0_3 = arith.constant 0 : index
    %2 = vector.load %arg2[%c0_2, %c0_3] : memref<4x128xf32, #tpu.memory_space<vmem>>, vector<4x128xf32>
    %cst = arith.constant dense<0.000000e+00> : vector<256x128xf32>
    %3 = tpu.matmul %1, %2, %cst {dimension_numbers = #tpu.dot_dimension_numbers<[1], [0], [0], [1], [0, 0, 1, 1], [], []>, precision = #tpu.contract_precision<fp32>} : vector<256x4xf32>, vector<4x128xf32>, vector<256x128xf32> -> vector<256x128xf32>
    %c0_4 = arith.constant 0 : index
    %c0_5 = arith.constant 0 : index
    %4 = vector.load %arg3[%c0_4, %c0_5] : memref<1x128xf32, #tpu.memory_space<vmem>>, vector<1x128xf32>
    %5 = vector.broadcast %4 : vector<1x128xf32> to vector<256x128xf32>
    %6 = arith.addf %3, %5 : vector<256x128xf32>
    %cst_6 = arith.constant 0.000000e+00 : f32
    %cst_7 = arith.constant 6.000000e+00 : f32
    %7 = vector.broadcast %cst_6 : f32 to vector<256x128xf32>
    %8 = arith.maximumf %7, %6 : vector<256x128xf32>
    %9 = vector.broadcast %cst_7 : f32 to vector<256x128xf32>
    %10 = arith.minimumf %9, %8 : vector<256x128xf32>
    %cst_8 = arith.constant 0.000000e+00 : f32
    %11 = vector.broadcast %cst_8 : f32 to vector<1x18x128xf32>
    %c0_9 = arith.constant 0 : index
    %c0_10 = arith.constant 0 : index
    %c0_11 = arith.constant 0 : index
    %12 = vector.load %arg8[%c0_9, %c0_10, %c0_11] : memref<18x18x128xf32, #tpu.memory_space<vmem>>, vector<1x18x128xf32>
    tpu.vector_store %arg8[%c0_9, %c0_10, %c0_11], %11 {strides = array<i32>} : memref<18x18x128xf32, #tpu.memory_space<vmem>>, vector<1x18x128xf32>,
    %cst_12 = arith.constant 0.000000e+00 : f32
    %13 = vector.broadcast %cst_12 : f32 to vector<1x18x128xf32>
    %c17 = arith.constant 17 : index
    %c0_13 = arith.constant 0 : index
    %c0_14 = arith.constant 0 : index
    %14 = vector.load %arg8[%c17, %c0_13, %c0_14] : memref<18x18x128xf32, #tpu.memory_space<vmem>>, vector<1x18x128xf32>
    tpu.vector_store %arg8[%c17, %c0_13, %c0_14], %13 {strides = array<i32>} : memref<18x18x128xf32, #tpu.memory_space<vmem>>, vector<1x18x128xf32>,
    %cst_15 = arith.constant 0.000000e+00 : f32
    %15 = vector.broadcast %cst_15 : f32 to vector<18x1x128xf32>
    %c0_16 = arith.constant 0 : index
    %c0_17 = arith.constant 0 : index
    %c0_18 = arith.constant 0 : index
    %16 = vector.load %arg8[%c0_16, %c0_17, %c0_18] : memref<18x18x128xf32, #tpu.memory_space<vmem>>, vector<18x1x128xf32>
    tpu.vector_store %arg8[%c0_16, %c0_17, %c0_18], %15 {strides = array<i32>} : memref<18x18x128xf32, #tpu.memory_space<vmem>>, vector<18x1x128xf32>,
    %cst_19 = arith.constant 0.000000e+00 : f32
    %17 = vector.broadcast %cst_19 : f32 to vector<18x1x128xf32>
    %c0_20 = arith.constant 0 : index
    %c17_21 = arith.constant 17 : index
    %c0_22 = arith.constant 0 : index
    %18 = vector.load %arg8[%c0_20, %c17_21, %c0_22] : memref<18x18x128xf32, #tpu.memory_space<vmem>>, vector<18x1x128xf32>
    tpu.vector_store %arg8[%c0_20, %c17_21, %c0_22], %17 {strides = array<i32>} : memref<18x18x128xf32, #tpu.memory_space<vmem>>, vector<18x1x128xf32>,
    %19 = vector.shape_cast %10 : vector<256x128xf32> to vector<16x16x128xf32>
    %c1 = arith.constant 1 : index
    %c1_23 = arith.constant 1 : index
    %c0_24 = arith.constant 0 : index
    %20 = vector.load %arg8[%c1, %c1_23, %c0_24] : memref<18x18x128xf32, #tpu.memory_space<vmem>>, vector<16x16x128xf32>
    tpu.vector_store %arg8[%c1, %c1_23, %c0_24], %19 {strides = array<i32>} : memref<18x18x128xf32, #tpu.memory_space<vmem>>, vector<16x16x128xf32>,
    %c0_25 = arith.constant 0 : index
    %c0_26 = arith.constant 0 : index
    %21 = vector.load %arg4[%c0_25, %c0_26] : memref<9x128xf32, #tpu.memory_space<vmem>>, vector<9x128xf32>
    %c0_27 = arith.constant 0 : index
    %c0_28 = arith.constant 0 : index
    %c0_29 = arith.constant 0 : index
    %22 = vector.load %arg8[%c0_27, %c0_28, %c0_29] : memref<18x18x128xf32, #tpu.memory_space<vmem>>, vector<16x16x128xf32>
    %23 = vector.extract_strided_slice %21 {offsets = [0, 0], sizes = [1, 128], strides = [1, 1]} : vector<9x128xf32> to vector<1x128xf32>
    %24 = vector.shape_cast %23 : vector<1x128xf32> to vector<128xf32>
    %25 = vector.shape_cast %24 : vector<128xf32> to vector<1x1x128xf32>
    %26 = vector.broadcast %25 : vector<1x1x128xf32> to vector<16x16x128xf32>
    %27 = arith.mulf %22, %26 : vector<16x16x128xf32>
    %c0_30 = arith.constant 0 : index
    %c1_31 = arith.constant 1 : index
    %c0_32 = arith.constant 0 : index
    %28 = vector.load %arg8[%c0_30, %c1_31, %c0_32] : memref<18x18x128xf32, #tpu.memory_space<vmem>>, vector<16x16x128xf32>
    %29 = vector.extract_strided_slice %21 {offsets = [1, 0], sizes = [1, 128], strides = [1, 1]} : vector<9x128xf32> to vector<1x128xf32>
    %30 = vector.shape_cast %29 : vector<1x128xf32> to vector<128xf32>
    %31 = vector.shape_cast %30 : vector<128xf32> to vector<1x1x128xf32>
    %32 = vector.broadcast %31 : vector<1x1x128xf32> to vector<16x16x128xf32>
    %33 = arith.mulf %28, %32 : vector<16x16x128xf32>
    %34 = arith.addf %27, %33 : vector<16x16x128xf32>
    %c0_33 = arith.constant 0 : index
    %c2 = arith.constant 2 : index
    %c0_34 = arith.constant 0 : index
    %35 = vector.load %arg8[%c0_33, %c2, %c0_34] : memref<18x18x128xf32, #tpu.memory_space<vmem>>, vector<16x16x128xf32>
    %36 = vector.extract_strided_slice %21 {offsets = [2, 0], sizes = [1, 128], strides = [1, 1]} : vector<9x128xf32> to vector<1x128xf32>
    %37 = vector.shape_cast %36 : vector<1x128xf32> to vector<128xf32>
    %38 = vector.shape_cast %37 : vector<128xf32> to vector<1x1x128xf32>
    %39 = vector.broadcast %38 : vector<1x1x128xf32> to vector<16x16x128xf32>
    %40 = arith.mulf %35, %39 : vector<16x16x128xf32>
    %41 = arith.addf %34, %40 : vector<16x16x128xf32>
    %c1_35 = arith.constant 1 : index
    %c0_36 = arith.constant 0 : index
    %c0_37 = arith.constant 0 : index
    %42 = vector.load %arg8[%c1_35, %c0_36, %c0_37] : memref<18x18x128xf32, #tpu.memory_space<vmem>>, vector<16x16x128xf32>
    %43 = vector.extract_strided_slice %21 {offsets = [3, 0], sizes = [1, 128], strides = [1, 1]} : vector<9x128xf32> to vector<1x128xf32>
    %44 = vector.shape_cast %43 : vector<1x128xf32> to vector<128xf32>
    %45 = vector.shape_cast %44 : vector<128xf32> to vector<1x1x128xf32>
    %46 = vector.broadcast %45 : vector<1x1x128xf32> to vector<16x16x128xf32>
    %47 = arith.mulf %42, %46 : vector<16x16x128xf32>
    %48 = arith.addf %41, %47 : vector<16x16x128xf32>
    %c1_38 = arith.constant 1 : index
    %c1_39 = arith.constant 1 : index
    %c0_40 = arith.constant 0 : index
    %49 = vector.load %arg8[%c1_38, %c1_39, %c0_40] : memref<18x18x128xf32, #tpu.memory_space<vmem>>, vector<16x16x128xf32>
    %50 = vector.extract_strided_slice %21 {offsets = [4, 0], sizes = [1, 128], strides = [1, 1]} : vector<9x128xf32> to vector<1x128xf32>
    %51 = vector.shape_cast %50 : vector<1x128xf32> to vector<128xf32>
    %52 = vector.shape_cast %51 : vector<128xf32> to vector<1x1x128xf32>
    %53 = vector.broadcast %52 : vector<1x1x128xf32> to vector<16x16x128xf32>
    %54 = arith.mulf %49, %53 : vector<16x16x128xf32>
    %55 = arith.addf %48, %54 : vector<16x16x128xf32>
    %c1_41 = arith.constant 1 : index
    %c2_42 = arith.constant 2 : index
    %c0_43 = arith.constant 0 : index
    %56 = vector.load %arg8[%c1_41, %c2_42, %c0_43] : memref<18x18x128xf32, #tpu.memory_space<vmem>>, vector<16x16x128xf32>
    %57 = vector.extract_strided_slice %21 {offsets = [5, 0], sizes = [1, 128], strides = [1, 1]} : vector<9x128xf32> to vector<1x128xf32>
    %58 = vector.shape_cast %57 : vector<1x128xf32> to vector<128xf32>
    %59 = vector.shape_cast %58 : vector<128xf32> to vector<1x1x128xf32>
    %60 = vector.broadcast %59 : vector<1x1x128xf32> to vector<16x16x128xf32>
    %61 = arith.mulf %56, %60 : vector<16x16x128xf32>
    %62 = arith.addf %55, %61 : vector<16x16x128xf32>
    %c2_44 = arith.constant 2 : index
    %c0_45 = arith.constant 0 : index
    %c0_46 = arith.constant 0 : index
    %63 = vector.load %arg8[%c2_44, %c0_45, %c0_46] : memref<18x18x128xf32, #tpu.memory_space<vmem>>, vector<16x16x128xf32>
    %64 = vector.extract_strided_slice %21 {offsets = [6, 0], sizes = [1, 128], strides = [1, 1]} : vector<9x128xf32> to vector<1x128xf32>
    %65 = vector.shape_cast %64 : vector<1x128xf32> to vector<128xf32>
    %66 = vector.shape_cast %65 : vector<128xf32> to vector<1x1x128xf32>
    %67 = vector.broadcast %66 : vector<1x1x128xf32> to vector<16x16x128xf32>
    %68 = arith.mulf %63, %67 : vector<16x16x128xf32>
    %69 = arith.addf %62, %68 : vector<16x16x128xf32>
    %c2_47 = arith.constant 2 : index
    %c1_48 = arith.constant 1 : index
    %c0_49 = arith.constant 0 : index
    %70 = vector.load %arg8[%c2_47, %c1_48, %c0_49] : memref<18x18x128xf32, #tpu.memory_space<vmem>>, vector<16x16x128xf32>
    %71 = vector.extract_strided_slice %21 {offsets = [7, 0], sizes = [1, 128], strides = [1, 1]} : vector<9x128xf32> to vector<1x128xf32>
    %72 = vector.shape_cast %71 : vector<1x128xf32> to vector<128xf32>
    %73 = vector.shape_cast %72 : vector<128xf32> to vector<1x1x128xf32>
    %74 = vector.broadcast %73 : vector<1x1x128xf32> to vector<16x16x128xf32>
    %75 = arith.mulf %70, %74 : vector<16x16x128xf32>
    %76 = arith.addf %69, %75 : vector<16x16x128xf32>
    %c2_50 = arith.constant 2 : index
    %c2_51 = arith.constant 2 : index
    %c0_52 = arith.constant 0 : index
    %77 = vector.load %arg8[%c2_50, %c2_51, %c0_52] : memref<18x18x128xf32, #tpu.memory_space<vmem>>, vector<16x16x128xf32>
    %78 = vector.extract_strided_slice %21 {offsets = [8, 0], sizes = [1, 128], strides = [1, 1]} : vector<9x128xf32> to vector<1x128xf32>
    %79 = vector.shape_cast %78 : vector<1x128xf32> to vector<128xf32>
    %80 = vector.shape_cast %79 : vector<128xf32> to vector<1x1x128xf32>
    %81 = vector.broadcast %80 : vector<1x1x128xf32> to vector<16x16x128xf32>
    %82 = arith.mulf %77, %81 : vector<16x16x128xf32>
    %83 = arith.addf %76, %82 : vector<16x16x128xf32>
    %c0_53 = arith.constant 0 : index
    %c0_54 = arith.constant 0 : index
    %84 = vector.load %arg5[%c0_53, %c0_54] : memref<1x128xf32, #tpu.memory_space<vmem>>, vector<1x128xf32>
    %85 = vector.shape_cast %84 : vector<1x128xf32> to vector<128xf32>
    %86 = vector.shape_cast %85 : vector<128xf32> to vector<1x1x128xf32>
    %87 = vector.broadcast %86 : vector<1x1x128xf32> to vector<16x16x128xf32>
    %88 = arith.addf %83, %87 : vector<16x16x128xf32>
    %cst_55 = arith.constant 0.000000e+00 : f32
    %cst_56 = arith.constant 6.000000e+00 : f32
    %89 = vector.broadcast %cst_55 : f32 to vector<16x16x128xf32>
    %90 = arith.maximumf %89, %88 : vector<16x16x128xf32>
    %91 = vector.broadcast %cst_56 : f32 to vector<16x16x128xf32>
    %92 = arith.minimumf %91, %90 : vector<16x16x128xf32>
    %93 = vector.shape_cast %92 : vector<16x16x128xf32> to vector<256x128xf32>
    %c0_57 = arith.constant 0 : index
    %c0_58 = arith.constant 0 : index
    %c0_59 = arith.constant 0 : index
    %94 = vector.load %arg6[%c0_57, %c0_58, %c0_59] : memref<1x256x128xf32, #tpu.memory_space<vmem>>, vector<1x256x128xf32>
    %95 = vector.shape_cast %94 : vector<1x256x128xf32> to vector<256x128xf32>
    %96 = vector.shape_cast %93 : vector<256x128xf32> to vector<1x256x128xf32>
    tpu.vector_store %arg6[%c0_57, %c0_58, %c0_59], %96 {strides = array<i32>} : memref<1x256x128xf32, #tpu.memory_space<vmem>>, vector<1x256x128xf32>,
    %cst_60 = arith.constant dense<0.000000e+00> : vector<128xf32>
    %97 = vector.multi_reduction <add>, %93, %cst_60 [0] : vector<256x128xf32> to vector<128xf32>
    %98 = vector.shape_cast %97 : vector<128xf32> to vector<1x128xf32>
    %c0_61 = arith.constant 0 : index
    %c0_62 = arith.constant 0 : index
    %c0_63 = arith.constant 0 : index
    %99 = vector.load %arg7[%c0_61, %c0_62, %c0_63] : memref<1x1x128xf32, #tpu.memory_space<vmem>>, vector<1x1x128xf32>
    %100 = vector.shape_cast %99 : vector<1x1x128xf32> to vector<1x128xf32>
    %101 = vector.shape_cast %98 : vector<1x128xf32> to vector<1x1x128xf32>
    tpu.vector_store %arg7[%c0_61, %c0_62, %c0_63], %101 {strides = array<i32>} : memref<1x1x128xf32, #tpu.memory_space<vmem>>, vector<1x1x128xf32>,
    return
  }
  func.func @transform_0(%arg0: i32) -> (i32, i32, i32) {
    %c0_i32 = arith.constant 0 : i32
    %c0_i32_0 = arith.constant 0 : i32
    %c0_i32_1 = arith.constant 0 : i32
    return %arg0, %c0_i32, %c0_i32_0 : i32, i32, i32
  }
  func.func @transform_1(%arg0: i32) -> (i32, i32) {
    %c0_i32 = arith.constant 0 : i32
    %c0_i32_0 = arith.constant 0 : i32
    %c0_i32_1 = arith.constant 0 : i32
    return %c0_i32, %c0_i32_0 : i32, i32
  }
  func.func @transform_2(%arg0: i32) -> (i32, i32) {
    %c0_i32 = arith.constant 0 : i32
    %c0_i32_0 = arith.constant 0 : i32
    %c0_i32_1 = arith.constant 0 : i32
    return %c0_i32, %c0_i32_0 : i32, i32
  }
  func.func @transform_3(%arg0: i32) -> (i32, i32) {
    %c0_i32 = arith.constant 0 : i32
    %c0_i32_0 = arith.constant 0 : i32
    %c0_i32_1 = arith.constant 0 : i32
    return %c0_i32, %c0_i32_0 : i32, i32
  }
  func.func @transform_4(%arg0: i32) -> (i32, i32) {
    %c0_i32 = arith.constant 0 : i32
    %c0_i32_0 = arith.constant 0 : i32
    %c0_i32_1 = arith.constant 0 : i32
    return %c0_i32, %c0_i32_0 : i32, i32
  }
  func.func @transform_5(%arg0: i32) -> (i32, i32, i32) {
    %c0_i32 = arith.constant 0 : i32
    %c0_i32_0 = arith.constant 0 : i32
    %c0_i32_1 = arith.constant 0 : i32
    return %arg0, %c0_i32, %c0_i32_0 : i32, i32, i32
  }
  func.func @transform_6(%arg0: i32) -> (i32, i32, i32) {
    %c0_i32 = arith.constant 0 : i32
    %c0_i32_0 = arith.constant 0 : i32
    %c0_i32_1 = arith.constant 0 : i32
    return %arg0, %c0_i32, %c0_i32_0 : i32, i32, i32
  }
}

</mosaic_0001>

<llo_original>
// kernel: tpu_custom_call.1
$region0: #{tpu_custom_call.1}
  #allocation0 [shape = 'u32[]', space=smem, size = 0x4, offset = 0x4, fixed_abs, tag = 'smem constant byte address 0x4 - core index']
  #allocation1 [shape = 'u32[144,128]{1,0:T(1,128)}', space=vmem, size = 0x12000, scoped, tag = 'internal scratch']
  #allocation2 [shape = 'f32[18,18,128]{2,1,0:T(8,128)}', space=vmem, size = 0x36000, scoped, tag = 'scratch operand']
  %s0 = inlined_call_operand.vmem [shape: f32[2,256,4], index: 0, kind: input, shape index: {}]
  %s1 = inlined_call_operand.vmem [shape: f32[4,128], index: 1, kind: input, shape index: {}]
  %s2 = inlined_call_operand.vmem [shape: f32[1,128], index: 2, kind: input, shape index: {}]
  %s3 = inlined_call_operand.vmem [shape: f32[9,128], index: 3, kind: input, shape index: {}]
  %s4 = inlined_call_operand.vmem [shape: f32[1,128], index: 4, kind: input, shape index: {}]
  %s5 = inlined_call_operand.hbm [shape: f32[2,256,128], index: 5, kind: output, shape index: {0}]
  %s6 = inlined_call_operand.hbm [shape: f32[2,1,128], index: 6, kind: output, shape index: {1}]
  %7 = xla_tuple %s5, %s6
  %s8 = sld [smem:[#allocation0]]
  $region61: #{tpu_custom_call.1} parent=0
    _
  %s10 = ssub.s32 1, %s8
  %s11 = scalar_select 0, %s10, %s8
  $region1: #{tpu_custom_call.1} parent=0
    #allocation3 [shape = 'u8[262144]{0}', space=vmem, size = 0x40000, scoped, tag = 'output window, operand 0']
    #allocation4 [shape = 's32[2]{0}', space=sflag, size = 0x8, scoped, tag = 'scoped memory for tpu_custom_call.1']
    #allocation5 [shape = 'u8[1024]{0}', space=vmem, size = 0x400, scoped, tag = 'output window, operand 1']
    #allocation6 [shape = 's32[2]{0}', space=sflag, size = 0x8, scoped, tag = 'scoped memory for tpu_custom_call.1']
    %12 = vsyncpa [#allocation4], 0
    %s13 = scalar_lea.sflag [#allocation4], 1
    %14 = vsyncpa %s13, 0
    %15 = vsyncpa [#allocation6], 0
    %s16 = scalar_lea.sflag [#allocation6], 1
    %17 = vsyncpa %s16, 0
    loop: start=0, step=1, limit=4
    $region2: #{tpu_custom_call.1} parent=1 // loop_pre_header
      _
    $region3: #{tpu_custom_call.1} parent=1 // loop_header
      %s19 = sphi 0, %s23
      %p20 = scmp.ge.s32.totalorder %s19, 4
      %s29 = sphi 0, %s31
      %s32 = sphi 0, %s29
      %s33 = sphi 0, %s32
      %s49 = sphi 0, %s33
      %s53 = sphi 0, %s53
      %s55 = sphi 0, %s53
      %s56 = sphi 0, %s55
      %s70 = sphi 0, %s56
      %s74 = sphi 0, %s74
      %s76 = sphi 0, %s74
      %s77 = sphi 0, %s76
      %s91 = sphi 0, %s77
      %s95 = sphi 0, %s95
      %s97 = sphi 0, %s95
      %s98 = sphi 0, %s97
      %s112 = sphi 0, %s98
      %s116 = sphi 0, %s116
      %s118 = sphi 0, %s116
      %s119 = sphi 0, %s118
      %s133 = sphi 0, %s119
      %s139 = sphi 0, %s141
      %s142 = sphi 0, %s139
      %s143 = sphi 0, %s142
      %s159 = sphi 0, %s143
      %s165 = sphi 0, %s167
      %s168 = sphi 0, %s165
      %s169 = sphi 0, %s168
      %s185 = sphi 0, %s169
    $region4: #{tpu_custom_call.1} parent=1 // loop_header_branch
      %22 = sbr.rel (%p20) target = $region8
    $region5: #{tpu_custom_call.1} parent=1 // loop_body
      %s24 = ssub.s32 %s19, 1
      %s25 = ssub.s32 %s19, 2
      %s26 = sadd.s32 %s19, 1
      %s27 = ssub.s32 %s19, %s26
      %p28 = scmp.eq.s32.totalorder %s27, 0
      %s30 = sadd.s32 %s29, 1
      %s31 = scalar_select %p28, %s29, %s30
      %p34 = pneg %p28
      %p35 = scmp.eq.s32.totalorder %s19, 1
      %p36 = por %p34, %p35
      %p37 = scmp.ne.s32.totalorder %s29, %s32
      %p38 = scmp.eq.s32.totalorder %s19, 0
      %p39 = por %p37, %p38
      %p40 = scmp.ne.s32.totalorder %s29, %s32
      %p41 = scmp.eq.s32.totalorder %s24, 1
      %p42 = por %p40, %p41
      %p43 = scmp.ne.s32.totalorder %s32, %s33
      %p44 = scmp.eq.s32.totalorder %s24, 0
      %p45 = por %p43, %p44
      %p46 = scmp.ne.s32.totalorder %s32, %s33
      %p47 = scmp.eq.s32.totalorder %s25, 1
      %p48 = por %p46, %p47
      %p50 = scmp.ne.s32.totalorder %s33, %s49
      %p51 = scmp.eq.s32.totalorder %s25, 0
      %p52 = por %p50, %p51
      %s54 = sadd.s32 %s53, 1
      %p57 = scmp.eq.s32.totalorder %s19, 1
      %p58 = scmp.ne.s32.totalorder %s53, %s55
      %p59 = scmp.eq.s32.totalorder %s19, 0
      %p60 = por %p58, %p59
      %p61 = scmp.ne.s32.totalorder %s53, %s55
      %p62 = scmp.eq.s32.totalorder %s24, 1
      %p63 = por %p61, %p62
      %p64 = scmp.ne.s32.totalorder %s55, %s56
      %p65 = scmp.eq.s32.totalorder %s24, 0
      %p66 = por %p64, %p65
      %p67 = scmp.ne.s32.totalorder %s55, %s56
      %p68 = scmp.eq.s32.totalorder %s25, 1
      %p69 = por %p67, %p68
      %p71 = scmp.ne.s32.totalorder %s56, %s70
      %p72 = scmp.eq.s32.totalorder %s25, 0
      %p73 = por %p71, %p72
      %s75 = sadd.s32 %s74, 1
      %p78 = scmp.eq.s32.totalorder %s19, 1
      %p79 = scmp.ne.s32.totalorder %s74, %s76
      %p80 = scmp.eq.s32.totalorder %s19, 0
      %p81 = por %p79, %p80
      %p82 = scmp.ne.s32.totalorder %s74, %s76
      %p83 = scmp.eq.s32.totalorder %s24, 1
      %p84 = por %p82, %p83
      %p85 = scmp.ne.s32.totalorder %s76, %s77
      %p86 = scmp.eq.s32.totalorder %s24, 0
      %p87 = por %p85, %p86
      %p88 = scmp.ne.s32.totalorder %s76, %s77
      %p89 = scmp.eq.s32.totalorder %s25, 1
      %p90 = por %p88, %p89
      %p92 = scmp.ne.s32.totalorder %s77, %s91
      %p93 = scmp.eq.s32.totalorder %s25, 0
      %p94 = por %p92, %p93
      %s96 = sadd.s32 %s95, 1
      %p99 = scmp.eq.s32.totalorder %s19, 1
      %p100 = scmp.ne.s32.totalorder %s95, %s97
      %p101 = scmp.eq.s32.totalorder %s19, 0
      %p102 = por %p100, %p101
      %p103 = scmp.ne.s32.totalorder %s95, %s97
      %p104 = scmp.eq.s32.totalorder %s24, 1
      %p105 = por %p103, %p104
      %p106 = scmp.ne.s32.totalorder %s97, %s98
      %p107 = scmp.eq.s32.totalorder %s24, 0
      %p108 = por %p106, %p107
      %p109 = scmp.ne.s32.totalorder %s97, %s98
      %p110 = scmp.eq.s32.totalorder %s25, 1
      %p111 = por %p109, %p110
      %p113 = scmp.ne.s32.totalorder %s98, %s112
      %p114 = scmp.eq.s32.totalorder %s25, 0
      %p115 = por %p113, %p114
      %s117 = sadd.s32 %s116, 1
      %p120 = scmp.eq.s32.totalorder %s19, 1
      %p121 = scmp.ne.s32.totalorder %s116, %s118
      %p122 = scmp.eq.s32.totalorder %s19, 0
      %p123 = por %p121, %p122
      %p124 = scmp.ne.s32.totalorder %s116, %s118
      %p125 = scmp.eq.s32.totalorder %s24, 1
      %p126 = por %p124, %p125
      %p127 = scmp.ne.s32.totalorder %s118, %s119
      %p128 = scmp.eq.s32.totalorder %s24, 0
      %p129 = por %p127, %p128
      %p130 = scmp.ne.s32.totalorder %s118, %s119
      %p131 = scmp.eq.s32.totalorder %s25, 1
      %p132 = por %p130, %p131
      %p134 = scmp.ne.s32.totalorder %s119, %s133
      %p135 = scmp.eq.s32.totalorder %s25, 0
      %p136 = por %p134, %p135
      %s137 = ssub.s32 %s19, %s26
      %p138 = scmp.eq.s32.totalorder %s137, 0
      %s140 = sadd.s32 %s139, 1
      %s141 = scalar_select %p138, %s139, %s140
      %p144 = pneg %p138
      %p145 = scmp.eq.s32.totalorder %s19, 1
      %p146 = por %p144, %p145
      %p147 = scmp.ne.s32.totalorder %s139, %s142
      %p148 = scmp.eq.s32.totalorder %s19, 0
      %p149 = por %p147, %p148
      %p150 = scmp.ne.s32.totalorder %s139, %s142
      %p151 = scmp.eq.s32.totalorder %s24, 1
      %p152 = por %p150, %p151
      %p153 = scmp.ne.s32.totalorder %s142, %s143
      %p154 = scmp.eq.s32.totalorder %s24, 0
      %p155 = por %p153, %p154
      %p156 = scmp.ne.s32.totalorder %s142, %s143
      %p157 = scmp.eq.s32.totalorder %s25, 1
      %p158 = por %p156, %p157
      %p160 = scmp.ne.s32.totalorder %s143, %s159
      %p161 = scmp.eq.s32.totalorder %s25, 0
      %p162 = por %p160, %p161
      %s163 = ssub.s32 %s19, %s26
      %p164 = scmp.eq.s32.totalorder %s163, 0
      %s166 = sadd.s32 %s165, 1
      %s167 = scalar_select %p164, %s165, %s166
      %p170 = pneg %p164
      %p171 = scmp.eq.s32.totalorder %s19, 1
      %p172 = por %p170, %p171
      %p173 = scmp.ne.s32.totalorder %s165, %s168
      %p174 = scmp.eq.s32.totalorder %s19, 0
      %p175 = por %p173, %p174
      %p176 = scmp.ne.s32.totalorder %s165, %s168
      %p177 = scmp.eq.s32.totalorder %s24, 1
      %p178 = por %p176, %p177
      %p179 = scmp.ne.s32.totalorder %s168, %s169
      %p180 = scmp.eq.s32.totalorder %s24, 0
      %p181 = por %p179, %p180
      %p182 = scmp.ne.s32.totalorder %s168, %s169
      %p183 = scmp.eq.s32.totalorder %s25, 1
      %p184 = por %p182, %p183
      %p186 = scmp.ne.s32.totalorder %s169, %s185
      %p187 = scmp.eq.s32.totalorder %s25, 0
      %p188 = por %p186, %p187
      %p189 = scmp.le.s32.totalorder 1, %s19
      %p190 = scmp.lt.s32.totalorder %s19, 3
      %p191 = pnand %p189, %p190
      %p192 = pneg %p191
      // Predicated region
      $region9: #{tpu_custom_call.1} parent=5 // pred_check
        _
      $region10: #{tpu_custom_call.1} parent=5 // pred_check_branch
        %194 = sbr.rel (%p191) target = $region12
      $region11: #{tpu_custom_call.1} parent=5 // pred_region
        %s195 = ssub.s32 %s19, 1
        // Predicated region
        $region13: #{tpu_custom_call.1} parent=11 // pred_check
          %p196 = pneg %p66
        $region14: #{tpu_custom_call.1} parent=11 // pred_check_branch
          %198 = sbr.rel (%p196) target = $region16
        $region15: #{tpu_custom_call.1} parent=11 // pred_region
          _
        $region16: #{tpu_custom_call.1} parent=11 // pred_fallthru
          _
        // Predicated region
        $region17: #{tpu_custom_call.1} parent=11 // pred_check
          %p199 = pneg %p87
        $region18: #{tpu_custom_call.1} parent=11 // pred_check_branch
          %201 = sbr.rel (%p199) target = $region20
        $region19: #{tpu_custom_call.1} parent=11 // pred_region
          _
        $region20: #{tpu_custom_call.1} parent=11 // pred_fallthru
          _
        // Predicated region
        $region21: #{tpu_custom_call.1} parent=11 // pred_check
          %p202 = pneg %p108
        $region22: #{tpu_custom_call.1} parent=11 // pred_check_branch
          %204 = sbr.rel (%p202) target = $region24
        $region23: #{tpu_custom_call.1} parent=11 // pred_region
          _
        $region24: #{tpu_custom_call.1} parent=11 // pred_fallthru
          _
        // Predicated region
        $region25: #{tpu_custom_call.1} parent=11 // pred_check
          %p205 = pneg %p129
        $region26: #{tpu_custom_call.1} parent=11 // pred_check_branch
          %207 = sbr.rel (%p205) target = $region28
        $region27: #{tpu_custom_call.1} parent=11 // pred_region
          _
        $region28: #{tpu_custom_call.1} parent=11 // pred_fallthru
          _
      $region12: #{tpu_custom_call.1} parent=5 // pred_fallthru
        _
      %p208 = scmp.lt.s32.totalorder %s19, 2
      // Predicated region
      $region29: #{tpu_custom_call.1} parent=5 // pred_check
        %p209 = pneg %p208
      $region30: #{tpu_custom_call.1} parent=5 // pred_check_branch
        %211 = sbr.rel (%p209) target = $region32
      $region31: #{tpu_custom_call.1} parent=5 // pred_region
        // Predicated region
        $region33: #{tpu_custom_call.1} parent=31 // pred_check
          %p212 = pneg %p39
        $region34: #{tpu_custom_call.1} parent=31 // pred_check_branch
          %214 = sbr.rel (%p212) target = $region36
        $region35: #{tpu_custom_call.1} parent=31 // pred_region
          %p215 = scmp.lt.s32.totalorder %s19, 1
          %s216 = scalar_select %p215, %s19, 1
          %s217 = smul.addr %s216, 32
          %s218 = smul.addr %s217, 8
          %s219 = scalar_lea.vmem %s0, %s218
        $region36: #{tpu_custom_call.1} parent=31 // pred_fallthru
          _
      $region32: #{tpu_custom_call.1} parent=5 // pred_fallthru
        _
      %p220 = scmp.le.s32.totalorder 1, %s19
      %p221 = scmp.lt.s32.totalorder %s19, 3
      %p222 = pnand %p220, %p221
      %p223 = pneg %p222
      // Predicated region
      $region37: #{tpu_custom_call.1} parent=5 // pred_check
        _
      $region38: #{tpu_custom_call.1} parent=5 // pred_check_branch
        %225 = sbr.rel (%p222) target = $region40
      $region39: #{tpu_custom_call.1} parent=5 // pred_region
        %s226 = ssub.s32 %s19, 1
        %p227 = scmp.lt.s32.totalorder %s24, 1
        %s228 = scalar_select %p227, %s24, 1
        %s229 = smul.addr %s228, 32
        %s230 = smul.addr %s229, 8
        %s231 = scalar_lea.vmem %s0, %s230
        %p232 = pneg %p45
        %p233 = pneg %p42
        %p234 = pneg %p66
        %p235 = pneg %p63
        %p236 = pneg %p87
        %p237 = pneg %p84
        %p238 = pneg %p108
        %p239 = pneg %p105
        %p240 = pneg %p129
        %p241 = pneg %p126
        %p242 = pneg %p155
        %p243 = pneg %p152
        %s244 = sand.u32 %s142, 1
        %s245 = scalar_lea.sflag [#allocation4], %s244
        %s246 = sand.u32 %s142, 1
        %s247 = smul.addr %s246, 256
        %s248 = scalar_lea.vmem [#allocation3], %s247
        %p249 = pneg %p181
        %p250 = pneg %p178
        %s251 = sand.u32 %s168, 1
        %s252 = scalar_lea.sflag [#allocation6], %s251
        %s253 = sand.u32 %s168, 1
        %s254 = scalar_lea.vmem [#allocation5], %s253
        %p255 = scmp.lt.s32.totalorder %s24, 1
        %s256 = scalar_select %p255, %s24, 1
        %s257 = smul.addr %s256, 32
        %s258 = smul.addr %s257, 8
        %s259 = scalar_lea.vmem %s0, %s258
        %v260 = vld [vmem:[%s259] sm:$0xff]
        %v261 = vld [vmem:[%s259 + $0x8] sm:$0xff]
        %v262 = vld [vmem:[%s259 + $0x10] sm:$0xff]
        %v263 = vld [vmem:[%s259 + $0x18] sm:$0xff]
        %v264 = vld [vmem:[%s259 + $0x20] sm:$0xff]
        %v265 = vld [vmem:[%s259 + $0x28] sm:$0xff]
        %v266 = vld [vmem:[%s259 + $0x30] sm:$0xff]
        %v267 = vld [vmem:[%s259 + $0x38] sm:$0xff]
        %v268 = vld [vmem:[%s259 + $0x40] sm:$0xff]
        %v269 = vld [vmem:[%s259 + $0x48] sm:$0xff]
        %v270 = vld [vmem:[%s259 + $0x50] sm:$0xff]
        %v271 = vld [vmem:[%s259 + $0x58] sm:$0xff]
        %v272 = vld [vmem:[%s259 + $0x60] sm:$0xff]
        %v273 = vld [vmem:[%s259 + $0x68] sm:$0xff]
        %v274 = vld [vmem:[%s259 + $0x70] sm:$0xff]
        %v275 = vld [vmem:[%s259 + $0x78] sm:$0xff]
        %v276 = vld [vmem:[%s259 + $0x80] sm:$0xff]
        %v277 = vld [vmem:[%s259 + $0x88] sm:$0xff]
        %v278 = vld [vmem:[%s259 + $0x90] sm:$0xff]
        %v279 = vld [vmem:[%s259 + $0x98] sm:$0xff]
        %v280 = vld [vmem:[%s259 + $0xa0] sm:$0xff]
        %v281 = vld [vmem:[%s259 + $0xa8] sm:$0xff]
        %v282 = vld [vmem:[%s259 + $0xb0] sm:$0xff]
        %v283 = vld [vmem:[%s259 + $0xb8] sm:$0xff]
        %v284 = vld [vmem:[%s259 + $0xc0] sm:$0xff]
        %v285 = vld [vmem:[%s259 + $0xc8] sm:$0xff]
        %v286 = vld [vmem:[%s259 + $0xd0] sm:$0xff]
        %v287 = vld [vmem:[%s259 + $0xd8] sm:$0xff]
        %v288 = vld [vmem:[%s259 + $0xe0] sm:$0xff]
        %v289 = vld [vmem:[%s259 + $0xe8] sm:$0xff]
        %v290 = vld [vmem:[%s259 + $0xf0] sm:$0xff]
        %v291 = vld [vmem:[%s259 + $0xf8] sm:$0xff]
        %v292 = vld [vmem:[%s1] sm:$0xf]
        %v293 = vld [vmem:[%s2] sm:$0x1]
        %v295 = vlaneseq
        %v296 = vshrl.u32 %v295, 7
        %v297 = vsub.s32 0, %v296
        %v298 = vrot.slane %v293, %v297
        %vm300 = vcmask 31744
        %v302 = vsel %vm300, %v260, 0
        %v305 = vsel %vm300, %v261, 0
        %v308 = vsel %vm300, %v262, 0
        %v311 = vsel %vm300, %v263, 0
        %v314 = vsel %vm300, %v264, 0
        %v317 = vsel %vm300, %v265, 0
        %v320 = vsel %vm300, %v266, 0
        %v323 = vsel %vm300, %v267, 0
        %v326 = vsel %vm300, %v268, 0
        %v329 = vsel %vm300, %v269, 0
        %v332 = vsel %vm300, %v270, 0
        %v335 = vsel %vm300, %v271, 0
        %v338 = vsel %vm300, %v272, 0
        %v341 = vsel %vm300, %v273, 0
        %v344 = vsel %vm300, %v274, 0
        %v347 = vsel %vm300, %v275, 0
        %v350 = vsel %vm300, %v276, 0
        %v353 = vsel %vm300, %v277, 0
        %v356 = vsel %vm300, %v278, 0
        %v359 = vsel %vm300, %v279, 0
        %v362 = vsel %vm300, %v280, 0
        %v365 = vsel %vm300, %v281, 0
        %v368 = vsel %vm300, %v282, 0
        %v371 = vsel %vm300, %v283, 0
        %v374 = vsel %vm300, %v284, 0
        %v377 = vsel %vm300, %v285, 0
        %v380 = vsel %vm300, %v286, 0
        %v383 = vsel %vm300, %v287, 0
        %v386 = vsel %vm300, %v288, 0
        %v389 = vsel %vm300, %v289, 0
        %v392 = vsel %vm300, %v290, 0
        %v395 = vsel %vm300, %v291, 0
        %vm397 = vcmask 1043456
        %v399 = vsel %vm397, %v292, 0
        %401 = vmatprep.subr.mxu0 0.0
        %402 = vmatpush1.msra.mxu0 0.0
        %403 = vmatprep.subr.mxu0 0.0
        %404 = vmatpush1.msra.mxu0 0.0
        %405 = vmatprep.subr.mxu0 0.0
        %406 = vmatpush1.msra.mxu0 0.0
        %407 = vmatprep.subr.mxu0 0.0
        %408 = vmatpush1.msra.mxu0 0.0
        %409 = vmatprep.subr.mxu0 0.0
        %410 = vmatpush1.msra.mxu0 0.0
        %411 = vmatprep.subr.mxu0 0.0
        %412 = vmatpush1.msra.mxu0 0.0
        %413 = vmatprep.subr.mxu0 0.0
        %414 = vmatpush1.msra.mxu0 0.0
        %415 = vmatprep.subr.mxu0 0.0
        %416 = vmatpush1.msra.mxu0 0.0
        %417 = vmatprep.subr.mxu0 0.0
        %418 = vmatpush1.msra.mxu0 0.0
        %419 = vmatprep.subr.mxu0 0.0
        %420 = vmatpush1.msra.mxu0 0.0
        %421 = vmatprep.subr.mxu0 0.0
        %422 = vmatpush1.msra.mxu0 0.0
        %423 = vmatprep.subr.mxu0 0.0
        %424 = vmatpush1.msra.mxu0 0.0
        %425 = vmatprep.subr.mxu0 0.0
        %426 = vmatpush1.msra.mxu0 0.0
        %427 = vmatprep.subr.mxu0 0.0
        %428 = vmatpush1.msra.mxu0 0.0
        %429 = vmatprep.subr.mxu0 0.0
        %430 = vmatpush1.msra.mxu0 0.0
        %431 = vmatprep.subr.mxu0 0.0
        %v432 = vand.u32 %v399, 4294901760
        %433 = vmatpush1.msra.mxu0 %v432
        %434 = vmatprep.subr.mxu0 0.0
        %435 = vmatpush2.msra.mxu0 0.0
        %436 = vmatprep.subr.mxu0 0.0
        %437 = vmatpush2.msra.mxu0 0.0
        %438 = vmatprep.subr.mxu0 0.0
        %439 = vmatpush2.msra.mxu0 0.0
        %440 = vmatprep.subr.mxu0 0.0
        %441 = vmatpush2.msra.mxu0 0.0
        %442 = vmatprep.subr.mxu0 0.0
        %443 = vmatpush2.msra.mxu0 0.0
        %444 = vmatprep.subr.mxu0 0.0
        %445 = vmatpush2.msra.mxu0 0.0
        %446 = vmatprep.subr.mxu0 0.0
        %447 = vmatpush2.msra.mxu0 0.0
        %448 = vmatprep.subr.mxu0 0.0
        %449 = vmatpush2.msra.mxu0 0.0
        %450 = vmatprep.subr.mxu0 0.0
        %451 = vmatpush2.msra.mxu0 0.0
        %452 = vmatprep.subr.mxu0 0.0
        %453 = vmatpush2.msra.mxu0 0.0
        %454 = vmatprep.subr.mxu0 0.0
        %455 = vmatpush2.msra.mxu0 0.0
        %456 = vmatprep.subr.mxu0 0.0
        %457 = vmatpush2.msra.mxu0 0.0
        %458 = vmatprep.subr.mxu0 0.0
        %459 = vmatpush2.msra.mxu0 0.0
        %460 = vmatprep.subr.mxu0 0.0
        %461 = vmatpush2.msra.mxu0 0.0
        %462 = vmatprep.subr.mxu0 0.0
        %463 = vmatpush2.msra.mxu0 0.0
        %464 = vmatprep.subr.mxu0 0.0
        %465 = vmatpush2.msra.mxu0 0.0
        %466 = vmatprep.mubr.f32.mxu0 0.0
        %v467 = vand.u32 %v302, 4294901760
        %v468 = vsub.f32 %v302, %v467
        %v469 = vand.u32 %v468, 4294901760
        %v470 = vsub.f32 %v468, %v469
        %v471 = vand.u32 %v470, 4294901760
        %472 = vmatmul.mubr.f32.gmra.mxu0 %v471
        %v473 = vpop.f32.mrf.mxu0
        %v474 = vadd.f32 %v298, %v473
        %v475 = vpop.f32.mrf.mxu0
        %476 = vmatprep.mubr.f32.mxu0 0.0
        %v477 = vand.u32 %v305, 4294901760
        %v478 = vsub.f32 %v305, %v477
        %v479 = vand.u32 %v478, 4294901760
        %v480 = vsub.f32 %v478, %v479
        %v481 = vand.u32 %v480, 4294901760
        %482 = vmatmul.mubr.f32.gmra.mxu0 %v481
        %v483 = vpop.f32.mrf.mxu0
        %v484 = vadd.f32 %v298, %v483
        %v485 = vpop.f32.mrf.mxu0
        %486 = vmatprep.mubr.f32.mxu0 0.0
        %v487 = vand.u32 %v308, 4294901760
        %v488 = vsub.f32 %v308, %v487
        %v489 = vand.u32 %v488, 4294901760
        %v490 = vsub.f32 %v488, %v489
        %v491 = vand.u32 %v490, 4294901760
        %492 = vmatmul.mubr.f32.gmra.mxu0 %v491
        %v493 = vpop.f32.mrf.mxu0
        %v494 = vadd.f32 %v298, %v493
        %v495 = vpop.f32.mrf.mxu0
        %496 = vmatprep.mubr.f32.mxu0 0.0
        %v497 = vand.u32 %v311, 4294901760
        %v498 = vsub.f32 %v311, %v497
        %v499 = vand.u32 %v498, 4294901760
        %v500 = vsub.f32 %v498, %v499
        %v501 = vand.u32 %v500, 4294901760
        %502 = vmatmul.mubr.f32.gmra.mxu0 %v501
        %v503 = vpop.f32.mrf.mxu0
        %v504 = vadd.f32 %v298, %v503
        %v505 = vpop.f32.mrf.mxu0
        %506 = vmatprep.mubr.f32.mxu0 0.0
        %v507 = vand.u32 %v314, 4294901760
        %v508 = vsub.f32 %v314, %v507
        %v509 = vand.u32 %v508, 4294901760
        %v510 = vsub.f32 %v508, %v509
        %v511 = vand.u32 %v510, 4294901760
        %512 = vmatmul.mubr.f32.gmra.mxu0 %v511
        %v513 = vpop.f32.mrf.mxu0
        %v514 = vadd.f32 %v298, %v513
        %v515 = vpop.f32.mrf.mxu0
        %516 = vmatprep.mubr.f32.mxu0 0.0
        %v517 = vand.u32 %v317, 4294901760
        %v518 = vsub.f32 %v317, %v517
        %v519 = vand.u32 %v518, 4294901760
        %v520 = vsub.f32 %v518, %v519
        %v521 = vand.u32 %v520, 4294901760
        %522 = vmatmul.mubr.f32.gmra.mxu0 %v521
        %v523 = vpop.f32.mrf.mxu0
        %v524 = vadd.f32 %v298, %v523
        %v525 = vpop.f32.mrf.mxu0
        %526 = vmatprep.mubr.f32.mxu0 0.0
        %v527 = vand.u32 %v320, 4294901760
        %v528 = vsub.f32 %v320, %v527
        %v529 = vand.u32 %v528, 4294901760
        %v530 = vsub.f32 %v528, %v529
        %v531 = vand.u32 %v530, 4294901760
        %532 = vmatmul.mubr.f32.gmra.mxu0 %v531
        %v533 = vpop.f32.mrf.mxu0
        %v534 = vadd.f32 %v298, %v533
        %v535 = vpop.f32.mrf.mxu0
        %536 = vmatprep.mubr.f32.mxu0 0.0
        %v537 = vand.u32 %v323, 4294901760
        %v538 = vsub.f32 %v323, %v537
        %v539 = vand.u32 %v538, 4294901760
        %v540 = vsub.f32 %v538, %v539
        %v541 = vand.u32 %v540, 4294901760
        %542 = vmatmul.mubr.f32.gmra.mxu0 %v541
        %v543 = vpop.f32.mrf.mxu0
        %v544 = vadd.f32 %v298, %v543
        %v545 = vpop.f32.mrf.mxu0
        %546 = vmatprep.mubr.f32.mxu0 0.0
        %v547 = vand.u32 %v326, 4294901760
        %v548 = vsub.f32 %v326, %v547
        %v549 = vand.u32 %v548, 4294901760
        %v550 = vsub.f32 %v548, %v549
        %v551 = vand.u32 %v550, 4294901760
        %552 = vmatmul.mubr.f32.gmra.mxu0 %v551
        %v553 = vpop.f32.mrf.mxu0
        %v554 = vadd.f32 %v298, %v553
        %v555 = vpop.f32.mrf.mxu0
        %556 = vmatprep.mubr.f32.mxu0 0.0
        %v557 = vand.u32 %v329, 4294901760
        %v558 = vsub.f32 %v329, %v557
        %v559 = vand.u32 %v558, 4294901760
        %v560 = vsub.f32 %v558, %v559
        %v561 = vand.u32 %v560, 4294901760
        %562 = vmatmul.mubr.f32.gmra.mxu0 %v561
        %v563 = vpop.f32.mrf.mxu0
        %v564 = vadd.f32 %v298, %v563
        %v565 = vpop.f32.mrf.mxu0
        %566 = vmatprep.mubr.f32.mxu0 0.0
        %v567 = vand.u32 %v332, 4294901760
        %v568 = vsub.f32 %v332, %v567
        %v569 = vand.u32 %v568, 4294901760
        %v570 = vsub.f32 %v568, %v569
        %v571 = vand.u32 %v570, 4294901760
        %572 = vmatmul.mubr.f32.gmra.mxu0 %v571
        %v573 = vpop.f32.mrf.mxu0
        %v574 = vadd.f32 %v298, %v573
        %v575 = vpop.f32.mrf.mxu0
        %576 = vmatprep.mubr.f32.mxu0 0.0
        %v577 = vand.u32 %v335, 4294901760
        %v578 = vsub.f32 %v335, %v577
        %v579 = vand.u32 %v578, 4294901760
        %v580 = vsub.f32 %v578, %v579
        %v581 = vand.u32 %v580, 4294901760
        %582 = vmatmul.mubr.f32.gmra.mxu0 %v581
        %v583 = vpop.f32.mrf.mxu0
        %v584 = vadd.f32 %v298, %v583
        %v585 = vpop.f32.mrf.mxu0
        %586 = vmatprep.mubr.f32.mxu0 0.0
        %v587 = vand.u32 %v338, 4294901760
        %v588 = vsub.f32 %v338, %v587
        %v589 = vand.u32 %v588, 4294901760
        %v590 = vsub.f32 %v588, %v589
        %v591 = vand.u32 %v590, 4294901760
        %592 = vmatmul.mubr.f32.gmra.mxu0 %v591
        %v593 = vpop.f32.mrf.mxu0
        %v594 = vadd.f32 %v298, %v593
        %v595 = vpop.f32.mrf.mxu0
        %596 = vmatprep.mubr.f32.mxu0 0.0
        %v597 = vand.u32 %v341, 4294901760
        %v598 = vsub.f32 %v341, %v597
        %v599 = vand.u32 %v598, 4294901760
        %v600 = vsub.f32 %v598, %v599
        %v601 = vand.u32 %v600, 4294901760
        %602 = vmatmul.mubr.f32.gmra.mxu0 %v601
        %v603 = vpop.f32.mrf.mxu0
        %v604 = vadd.f32 %v298, %v603
        %v605 = vpop.f32.mrf.mxu0
        %606 = vmatprep.mubr.f32.mxu0 0.0
        %v607 = vand.u32 %v344, 4294901760
        %v608 = vsub.f32 %v344, %v607
        %v609 = vand.u32 %v608, 4294901760
        %v610 = vsub.f32 %v608, %v609
        %v611 = vand.u32 %v610, 4294901760
        %612 = vmatmul.mubr.f32.gmra.mxu0 %v611
        %v613 = vpop.f32.mrf.mxu0
        %v614 = vadd.f32 %v298, %v613
        %v615 = vpop.f32.mrf.mxu0
        %616 = vmatprep.mubr.f32.mxu0 0.0
        %v617 = vand.u32 %v347, 4294901760
        %v618 = vsub.f32 %v347, %v617
        %v619 = vand.u32 %v618, 4294901760
        %v620 = vsub.f32 %v618, %v619
        %v621 = vand.u32 %v620, 4294901760
        %622 = vmatmul.mubr.f32.gmra.mxu0 %v621
        %v623 = vpop.f32.mrf.mxu0
        %v624 = vadd.f32 %v298, %v623
        %v625 = vpop.f32.mrf.mxu0
        %626 = vmatprep.mubr.f32.mxu0 0.0
        %v627 = vand.u32 %v350, 4294901760
        %v628 = vsub.f32 %v350, %v627
        %v629 = vand.u32 %v628, 4294901760
        %v630 = vsub.f32 %v628, %v629
        %v631 = vand.u32 %v630, 4294901760
        %632 = vmatmul.mubr.f32.gmra.mxu0 %v631
        %v633 = vpop.f32.mrf.mxu0
        %v634 = vadd.f32 %v298, %v633
        %v635 = vpop.f32.mrf.mxu0
        %636 = vmatprep.mubr.f32.mxu0 0.0
        %v637 = vand.u32 %v353, 4294901760
        %v638 = vsub.f32 %v353, %v637
        %v639 = vand.u32 %v638, 4294901760
        %v640 = vsub.f32 %v638, %v639
        %v641 = vand.u32 %v640, 4294901760
        %642 = vmatmul.mubr.f32.gmra.mxu0 %v641
        %v643 = vpop.f32.mrf.mxu0
        %v644 = vadd.f32 %v298, %v643
        %v645 = vpop.f32.mrf.mxu0
        %646 = vmatprep.mubr.f32.mxu0 0.0
        %v647 = vand.u32 %v356, 4294901760
        %v648 = vsub.f32 %v356, %v647
        %v649 = vand.u32 %v648, 4294901760
        %v650 = vsub.f32 %v648, %v649
        %v651 = vand.u32 %v650, 4294901760
        %652 = vmatmul.mubr.f32.gmra.mxu0 %v651
        %v653 = vpop.f32.mrf.mxu0
        %v654 = vadd.f32 %v298, %v653
        %v655 = vpop.f32.mrf.mxu0
        %656 = vmatprep.mubr.f32.mxu0 0.0
        %v657 = vand.u32 %v359, 4294901760
        %v658 = vsub.f32 %v359, %v657
        %v659 = vand.u32 %v658, 4294901760
        %v660 = vsub.f32 %v658, %v659
        %v661 = vand.u32 %v660, 4294901760
        %662 = vmatmul.mubr.f32.gmra.mxu0 %v661
        %v663 = vpop.f32.mrf.mxu0
        %v664 = vadd.f32 %v298, %v663
        %v665 = vpop.f32.mrf.mxu0
        %666 = vmatprep.mubr.f32.mxu0 0.0
        %v667 = vand.u32 %v362, 4294901760
        %v668 = vsub.f32 %v362, %v667
        %v669 = vand.u32 %v668, 4294901760
        %v670 = vsub.f32 %v668, %v669
        %v671 = vand.u32 %v670, 4294901760
        %672 = vmatmul.mubr.f32.gmra.mxu0 %v671
        %v673 = vpop.f32.mrf.mxu0
        %v674 = vadd.f32 %v298, %v673
        %v675 = vpop.f32.mrf.mxu0
        %676 = vmatprep.mubr.f32.mxu0 0.0
        %v677 = vand.u32 %v365, 4294901760
        %v678 = vsub.f32 %v365, %v677
        %v679 = vand.u32 %v678, 4294901760
        %v680 = vsub.f32 %v678, %v679
        %v681 = vand.u32 %v680, 4294901760
        %682 = vmatmul.mubr.f32.gmra.mxu0 %v681
        %v683 = vpop.f32.mrf.mxu0
        %v684 = vadd.f32 %v298, %v683
        %v685 = vpop.f32.mrf.mxu0
        %686 = vmatprep.mubr.f32.mxu0 0.0
        %v687 = vand.u32 %v368, 4294901760
        %v688 = vsub.f32 %v368, %v687
        %v689 = vand.u32 %v688, 4294901760
        %v690 = vsub.f32 %v688, %v689
        %v691 = vand.u32 %v690, 4294901760
        %692 = vmatmul.mubr.f32.gmra.mxu0 %v691
        %v693 = vpop.f32.mrf.mxu0
        %v694 = vadd.f32 %v298, %v693
        %v695 = vpop.f32.mrf.mxu0
        %696 = vmatprep.mubr.f32.mxu0 0.0
        %v697 = vand.u32 %v371, 4294901760
        %v698 = vsub.f32 %v371, %v697
        %v699 = vand.u32 %v698, 4294901760
        %v700 = vsub.f32 %v698, %v699
        %v701 = vand.u32 %v700, 4294901760
        %702 = vmatmul.mubr.f32.gmra.mxu0 %v701
        %v703 = vpop.f32.mrf.mxu0
        %v704 = vadd.f32 %v298, %v703
        %v705 = vpop.f32.mrf.mxu0
        %706 = vmatprep.mubr.f32.mxu0 0.0
        %v707 = vand.u32 %v374, 4294901760
        %v708 = vsub.f32 %v374, %v707
        %v709 = vand.u32 %v708, 4294901760
        %v710 = vsub.f32 %v708, %v709
        %v711 = vand.u32 %v710, 4294901760
        %712 = vmatmul.mubr.f32.gmra.mxu0 %v711
        %v713 = vpop.f32.mrf.mxu0
        %v714 = vadd.f32 %v298, %v713
        %v715 = vpop.f32.mrf.mxu0
        %716 = vmatprep.mubr.f32.mxu0 0.0
        %v717 = vand.u32 %v377, 4294901760
        %v718 = vsub.f32 %v377, %v717
        %v719 = vand.u32 %v718, 4294901760
        %v720 = vsub.f32 %v718, %v719
        %v721 = vand.u32 %v720, 4294901760
        %722 = vmatmul.mubr.f32.gmra.mxu0 %v721
        %v723 = vpop.f32.mrf.mxu0
        %v724 = vadd.f32 %v298, %v723
        %v725 = vpop.f32.mrf.mxu0
        %726 = vmatprep.mubr.f32.mxu0 0.0
        %v727 = vand.u32 %v380, 4294901760
        %v728 = vsub.f32 %v380, %v727
        %v729 = vand.u32 %v728, 4294901760
        %v730 = vsub.f32 %v728, %v729
        %v731 = vand.u32 %v730, 4294901760
        %732 = vmatmul.mubr.f32.gmra.mxu0 %v731
        %v733 = vpop.f32.mrf.mxu0
        %v734 = vadd.f32 %v298, %v733
        %v735 = vpop.f32.mrf.mxu0
        %736 = vmatprep.mubr.f32.mxu0 0.0
        %v737 = vand.u32 %v383, 4294901760
        %v738 = vsub.f32 %v383, %v737
        %v739 = vand.u32 %v738, 4294901760
        %v740 = vsub.f32 %v738, %v739
        %v741 = vand.u32 %v740, 4294901760
        %742 = vmatmul.mubr.f32.gmra.mxu0 %v741
        %v743 = vpop.f32.mrf.mxu0
        %v744 = vadd.f32 %v298, %v743
        %v745 = vpop.f32.mrf.mxu0
        %746 = vmatprep.mubr.f32.mxu0 0.0
        %v747 = vand.u32 %v386, 4294901760
        %v748 = vsub.f32 %v386, %v747
        %v749 = vand.u32 %v748, 4294901760
        %v750 = vsub.f32 %v748, %v749
        %v751 = vand.u32 %v750, 4294901760
        %752 = vmatmul.mubr.f32.gmra.mxu0 %v751
        %v753 = vpop.f32.mrf.mxu0
        %v754 = vadd.f32 %v298, %v753
        %v755 = vpop.f32.mrf.mxu0
        %756 = vmatprep.mubr.f32.mxu0 0.0
        %v757 = vand.u32 %v389, 4294901760
        %v758 = vsub.f32 %v389, %v757
        %v759 = vand.u32 %v758, 4294901760
        %v760 = vsub.f32 %v758, %v759
        %v761 = vand.u32 %v760, 4294901760
        %762 = vmatmul.mubr.f32.gmra.mxu0 %v761
        %v763 = vpop.f32.mrf.mxu0
        %v764 = vadd.f32 %v298, %v763
        %v765 = vpop.f32.mrf.mxu0
        %766 = vmatprep.mubr.f32.mxu0 0.0
        %v767 = vand.u32 %v392, 4294901760
        %v768 = vsub.f32 %v392, %v767
        %v769 = vand.u32 %v768, 4294901760
        %v770 = vsub.f32 %v768, %v769
        %v771 = vand.u32 %v770, 4294901760
        %772 = vmatmul.mubr.f32.gmra.mxu0 %v771
        %v773 = vpop.f32.mrf.mxu0
        %v774 = vadd.f32 %v298, %v773
        %v775 = vpop.f32.mrf.mxu0
        %776 = vmatprep.mubr.f32.mxu0 0.0
        %v777 = vand.u32 %v395, 4294901760
        %v778 = vsub.f32 %v395, %v777
        %v779 = vand.u32 %v778, 4294901760
        %v780 = vsub.f32 %v778, %v779
        %v781 = vand.u32 %v780, 4294901760
        %782 = vmatmul.mubr.f32.gmra.mxu0 %v781
        %v783 = vpop.f32.mrf.mxu0
        %v784 = vadd.f32 %v298, %v783
        %v785 = vpop.f32.mrf.mxu0
        %786 = vdwg.mxu0
        %787 = vmatprep.subr.mxu0 0.0
        %788 = vmatpush1.msra.mxu0 0.0
        %789 = vmatprep.subr.mxu0 0.0
        %790 = vmatpush1.msra.mxu0 0.0
        %791 = vmatprep.subr.mxu0 0.0
        %792 = vmatpush1.msra.mxu0 0.0
        %793 = vmatprep.subr.mxu0 0.0
        %794 = vmatpush1.msra.mxu0 0.0
        %795 = vmatprep.subr.mxu0 0.0
        %796 = vmatpush1.msra.mxu0 0.0
        %797 = vmatprep.subr.mxu0 0.0
        %798 = vmatpush1.msra.mxu0 0.0
        %799 = vmatprep.subr.mxu0 0.0
        %800 = vmatpush1.msra.mxu0 0.0
        %801 = vmatprep.subr.mxu0 0.0
        %802 = vmatpush1.msra.mxu0 0.0
        %803 = vmatprep.subr.mxu0 0.0
        %804 = vmatpush1.msra.mxu0 0.0
        %805 = vmatprep.subr.mxu0 0.0
        %806 = vmatpush1.msra.mxu0 0.0
        %807 = vmatprep.subr.mxu0 0.0
        %808 = vmatpush1.msra.mxu0 0.0
        %809 = vmatprep.subr.mxu0 0.0
        %810 = vmatpush1.msra.mxu0 0.0
        %811 = vmatprep.subr.mxu0 0.0
        %812 = vmatpush1.msra.mxu0 0.0
        %813 = vmatprep.subr.mxu0 0.0
        %814 = vmatpush1.msra.mxu0 0.0
        %815 = vmatprep.subr.mxu0 0.0
        %816 = vmatpush1.msra.mxu0 0.0
        %817 = vmatprep.subr.mxu0 0.0
        %v818 = vand.u32 %v399, 4294901760
        %v819 = vsub.f32 %v399, %v818
        %v820 = vand.u32 %v819, 4294901760
        %v821 = vsub.f32 %v819, %v820
        %v822 = vand.u32 %v821, 4294901760
        %823 = vmatpush1.msra.mxu0 %v822
        %824 = vmatprep.subr.mxu0 0.0
        %825 = vmatpush2.msra.mxu0 0.0
        %826 = vmatprep.subr.mxu0 0.0
        %827 = vmatpush2.msra.mxu0 0.0
        %828 = vmatprep.subr.mxu0 0.0
        %829 = vmatpush2.msra.mxu0 0.0
        %830 = vmatprep.subr.mxu0 0.0
        %831 = vmatpush2.msra.mxu0 0.0
        %832 = vmatprep.subr.mxu0 0.0
        %833 = vmatpush2.msra.mxu0 0.0
        %834 = vmatprep.subr.mxu0 0.0
        %835 = vmatpush2.msra.mxu0 0.0
        %836 = vmatprep.subr.mxu0 0.0
        %837 = vmatpush2.msra.mxu0 0.0
        %838 = vmatprep.subr.mxu0 0.0
        %839 = vmatpush2.msra.mxu0 0.0
        %840 = vmatprep.subr.mxu0 0.0
        %841 = vmatpush2.msra.mxu0 0.0
        %842 = vmatprep.subr.mxu0 0.0
        %843 = vmatpush2.msra.mxu0 0.0
        %844 = vmatprep.subr.mxu0 0.0
        %845 = vmatpush2.msra.mxu0 0.0
        %846 = vmatprep.subr.mxu0 0.0
        %847 = vmatpush2.msra.mxu0 0.0
        %848 = vmatprep.subr.mxu0 0.0
        %849 = vmatpush2.msra.mxu0 0.0
        %850 = vmatprep.subr.mxu0 0.0
        %851 = vmatpush2.msra.mxu0 0.0
        %852 = vmatprep.subr.mxu0 0.0
        %853 = vmatpush2.msra.mxu0 0.0
        %854 = vmatprep.subr.mxu0 0.0
        %855 = vmatpush2.msra.mxu0 0.0
        %856 = vmatprep.mubr.f32.mxu0 0.0
        %v857 = vand.u32 %v302, 4294901760
        %858 = vmatmul.mubr.f32.gmra.mxu0 %v857
        %v859 = vpop.f32.mrf.mxu0
        %v860 = vadd.f32 %v474, %v859
        %v861 = vpop.f32.mrf.mxu0
        %862 = vmatprep.mubr.f32.mxu0 0.0
        %v863 = vand.u32 %v305, 4294901760
        %864 = vmatmul.mubr.f32.gmra.mxu0 %v863
        %v865 = vpop.f32.mrf.mxu0
        %v866 = vadd.f32 %v484, %v865
        %v867 = vpop.f32.mrf.mxu0
        %868 = vmatprep.mubr.f32.mxu0 0.0
        %v869 = vand.u32 %v308, 4294901760
        %870 = vmatmul.mubr.f32.gmra.mxu0 %v869
        %v871 = vpop.f32.mrf.mxu0
        %v872 = vadd.f32 %v494, %v871
        %v873 = vpop.f32.mrf.mxu0
        %874 = vmatprep.mubr.f32.mxu0 0.0
        %v875 = vand.u32 %v311, 4294901760
        %876 = vmatmul.mubr.f32.gmra.mxu0 %v875
        %v877 = vpop.f32.mrf.mxu0
        %v878 = vadd.f32 %v504, %v877
        %v879 = vpop.f32.mrf.mxu0
        %880 = vmatprep.mubr.f32.mxu0 0.0
        %v881 = vand.u32 %v314, 4294901760
        %882 = vmatmul.mubr.f32.gmra.mxu0 %v881
        %v883 = vpop.f32.mrf.mxu0
        %v884 = vadd.f32 %v514, %v883
        %v885 = vpop.f32.mrf.mxu0
        %886 = vmatprep.mubr.f32.mxu0 0.0
        %v887 = vand.u32 %v317, 4294901760
        %888 = vmatmul.mubr.f32.gmra.mxu0 %v887
        %v889 = vpop.f32.mrf.mxu0
        %v890 = vadd.f32 %v524, %v889
        %v891 = vpop.f32.mrf.mxu0
        %892 = vmatprep.mubr.f32.mxu0 0.0
        %v893 = vand.u32 %v320, 4294901760
        %894 = vmatmul.mubr.f32.gmra.mxu0 %v893
        %v895 = vpop.f32.mrf.mxu0
        %v896 = vadd.f32 %v534, %v895
        %v897 = vpop.f32.mrf.mxu0
        %898 = vmatprep.mubr.f32.mxu0 0.0
        %v899 = vand.u32 %v323, 4294901760
        %900 = vmatmul.mubr.f32.gmra.mxu0 %v899
        %v901 = vpop.f32.mrf.mxu0
        %v902 = vadd.f32 %v544, %v901
        %v903 = vpop.f32.mrf.mxu0
        %904 = vmatprep.mubr.f32.mxu0 0.0
        %v905 = vand.u32 %v326, 4294901760
        %906 = vmatmul.mubr.f32.gmra.mxu0 %v905
        %v907 = vpop.f32.mrf.mxu0
        %v908 = vadd.f32 %v554, %v907
        %v909 = vpop.f32.mrf.mxu0
        %910 = vmatprep.mubr.f32.mxu0 0.0
        %v911 = vand.u32 %v329, 4294901760
        %912 = vmatmul.mubr.f32.gmra.mxu0 %v911
        %v913 = vpop.f32.mrf.mxu0
        %v914 = vadd.f32 %v564, %v913
        %v915 = vpop.f32.mrf.mxu0
        %916 = vmatprep.mubr.f32.mxu0 0.0
        %v917 = vand.u32 %v332, 4294901760
        %918 = vmatmul.mubr.f32.gmra.mxu0 %v917
        %v919 = vpop.f32.mrf.mxu0
        %v920 = vadd.f32 %v574, %v919
        %v921 = vpop.f32.mrf.mxu0
        %922 = vmatprep.mubr.f32.mxu0 0.0
        %v923 = vand.u32 %v335, 4294901760
        %924 = vmatmul.mubr.f32.gmra.mxu0 %v923
        %v925 = vpop.f32.mrf.mxu0
        %v926 = vadd.f32 %v584, %v925
        %v927 = vpop.f32.mrf.mxu0
        %928 = vmatprep.mubr.f32.mxu0 0.0
        %v929 = vand.u32 %v338, 4294901760
        %930 = vmatmul.mubr.f32.gmra.mxu0 %v929
        %v931 = vpop.f32.mrf.mxu0
        %v932 = vadd.f32 %v594, %v931
        %v933 = vpop.f32.mrf.mxu0
        %934 = vmatprep.mubr.f32.mxu0 0.0
        %v935 = vand.u32 %v341, 4294901760
        %936 = vmatmul.mubr.f32.gmra.mxu0 %v935
        %v937 = vpop.f32.mrf.mxu0
        %v938 = vadd.f32 %v604, %v937
        %v939 = vpop.f32.mrf.mxu0
        %940 = vmatprep.mubr.f32.mxu0 0.0
        %v941 = vand.u32 %v344, 4294901760
        %942 = vmatmul.mubr.f32.gmra.mxu0 %v941
        %v943 = vpop.f32.mrf.mxu0
        %v944 = vadd.f32 %v614, %v943
        %v945 = vpop.f32.mrf.mxu0
        %946 = vmatprep.mubr.f32.mxu0 0.0
        %v947 = vand.u32 %v347, 4294901760
        %948 = vmatmul.mubr.f32.gmra.mxu0 %v947
        %v949 = vpop.f32.mrf.mxu0
        %v950 = vadd.f32 %v624, %v949
        %v951 = vpop.f32.mrf.mxu0
        %952 = vmatprep.mubr.f32.mxu0 0.0
        %v953 = vand.u32 %v350, 4294901760
        %954 = vmatmul.mubr.f32.gmra.mxu0 %v953
        %v955 = vpop.f32.mrf.mxu0
        %v956 = vadd.f32 %v634, %v955
        %v957 = vpop.f32.mrf.mxu0
        %958 = vmatprep.mubr.f32.mxu0 0.0
        %v959 = vand.u32 %v353, 4294901760
        %960 = vmatmul.mubr.f32.gmra.mxu0 %v959
        %v961 = vpop.f32.mrf.mxu0
        %v962 = vadd.f32 %v644, %v961
        %v963 = vpop.f32.mrf.mxu0
        %964 = vmatprep.mubr.f32.mxu0 0.0
        %v965 = vand.u32 %v356, 4294901760
        %966 = vmatmul.mubr.f32.gmra.mxu0 %v965
        %v967 = vpop.f32.mrf.mxu0
        %v968 = vadd.f32 %v654, %v967
        %v969 = vpop.f32.mrf.mxu0
        %970 = vmatprep.mubr.f32.mxu0 0.0
        %v971 = vand.u32 %v359, 4294901760
        %972 = vmatmul.mubr.f32.gmra.mxu0 %v971
        %v973 = vpop.f32.mrf.mxu0
        %v974 = vadd.f32 %v664, %v973
        %v975 = vpop.f32.mrf.mxu0
        %976 = vmatprep.mubr.f32.mxu0 0.0
        %v977 = vand.u32 %v362, 4294901760
        %978 = vmatmul.mubr.f32.gmra.mxu0 %v977
        %v979 = vpop.f32.mrf.mxu0
        %v980 = vadd.f32 %v674, %v979
        %v981 = vpop.f32.mrf.mxu0
        %982 = vmatprep.mubr.f32.mxu0 0.0
        %v983 = vand.u32 %v365, 4294901760
        %984 = vmatmul.mubr.f32.gmra.mxu0 %v983
        %v985 = vpop.f32.mrf.mxu0
        %v986 = vadd.f32 %v684, %v985
        %v987 = vpop.f32.mrf.mxu0
        %988 = vmatprep.mubr.f32.mxu0 0.0
        %v989 = vand.u32 %v368, 4294901760
        %990 = vmatmul.mubr.f32.gmra.mxu0 %v989
        %v991 = vpop.f32.mrf.mxu0
        %v992 = vadd.f32 %v694, %v991
        %v993 = vpop.f32.mrf.mxu0
        %994 = vmatprep.mubr.f32.mxu0 0.0
        %v995 = vand.u32 %v371, 4294901760
        %996 = vmatmul.mubr.f32.gmra.mxu0 %v995
        %v997 = vpop.f32.mrf.mxu0
        %v998 = vadd.f32 %v704, %v997
        %v999 = vpop.f32.mrf.mxu0
        %1000 = vmatprep.mubr.f32.mxu0 0.0
        %v1001 = vand.u32 %v374, 4294901760
        %1002 = vmatmul.mubr.f32.gmra.mxu0 %v1001
        %v1003 = vpop.f32.mrf.mxu0
        %v1004 = vadd.f32 %v714, %v1003
        %v1005 = vpop.f32.mrf.mxu0
        %1006 = vmatprep.mubr.f32.mxu0 0.0
        %v1007 = vand.u32 %v377, 4294901760
        %1008 = vmatmul.mubr.f32.gmra.mxu0 %v1007
        %v1009 = vpop.f32.mrf.mxu0
        %v1010 = vadd.f32 %v724, %v1009
        %v1011 = vpop.f32.mrf.mxu0
        %1012 = vmatprep.mubr.f32.mxu0 0.0
        %v1013 = vand.u32 %v380, 4294901760
        %1014 = vmatmul.mubr.f32.gmra.mxu0 %v1013
        %v1015 = vpop.f32.mrf.mxu0
        %v1016 = vadd.f32 %v734, %v1015
        %v1017 = vpop.f32.mrf.mxu0
        %1018 = vmatprep.mubr.f32.mxu0 0.0
        %v1019 = vand.u32 %v383, 4294901760
        %1020 = vmatmul.mubr.f32.gmra.mxu0 %v1019
        %v1021 = vpop.f32.mrf.mxu0
        %v1022 = vadd.f32 %v744, %v1021
        %v1023 = vpop.f32.mrf.mxu0
        %1024 = vmatprep.mubr.f32.mxu0 0.0
        %v1025 = vand.u32 %v386, 4294901760
        %1026 = vmatmul.mubr.f32.gmra.mxu0 %v1025
        %v1027 = vpop.f32.mrf.mxu0
        %v1028 = vadd.f32 %v754, %v1027
        %v1029 = vpop.f32.mrf.mxu0
        %1030 = vmatprep.mubr.f32.mxu0 0.0
        %v1031 = vand.u32 %v389, 4294901760
        %1032 = vmatmul.mubr.f32.gmra.mxu0 %v1031
        %v1033 = vpop.f32.mrf.mxu0
        %v1034 = vadd.f32 %v764, %v1033
        %v1035 = vpop.f32.mrf.mxu0
        %1036 = vmatprep.mubr.f32.mxu0 0.0
        %v1037 = vand.u32 %v392, 4294901760
        %1038 = vmatmul.mubr.f32.gmra.mxu0 %v1037
        %v1039 = vpop.f32.mrf.mxu0
        %v1040 = vadd.f32 %v774, %v1039
        %v1041 = vpop.f32.mrf.mxu0
        %1042 = vmatprep.mubr.f32.mxu0 0.0
        %v1043 = vand.u32 %v395, 4294901760
        %1044 = vmatmul.mubr.f32.gmra.mxu0 %v1043
        %v1045 = vpop.f32.mrf.mxu0
        %v1046 = vadd.f32 %v784, %v1045
        %v1047 = vpop.f32.mrf.mxu0
        %1048 = vdwg.mxu0
        %1049 = vmatprep.subr.mxu0 0.0
        %1050 = vmatpush1.msra.mxu0 0.0
        %1051 = vmatprep.subr.mxu0 0.0
        %1052 = vmatpush1.msra.mxu0 0.0
        %1053 = vmatprep.subr.mxu0 0.0
        %1054 = vmatpush1.msra.mxu0 0.0
        %1055 = vmatprep.subr.mxu0 0.0
        %1056 = vmatpush1.msra.mxu0 0.0
        %1057 = vmatprep.subr.mxu0 0.0
        %1058 = vmatpush1.msra.mxu0 0.0
        %1059 = vmatprep.subr.mxu0 0.0
        %1060 = vmatpush1.msra.mxu0 0.0
        %1061 = vmatprep.subr.mxu0 0.0
        %1062 = vmatpush1.msra.mxu0 0.0
        %1063 = vmatprep.subr.mxu0 0.0
        %1064 = vmatpush1.msra.mxu0 0.0
        %1065 = vmatprep.subr.mxu0 0.0
        %1066 = vmatpush1.msra.mxu0 0.0
        %1067 = vmatprep.subr.mxu0 0.0
        %1068 = vmatpush1.msra.mxu0 0.0
        %1069 = vmatprep.subr.mxu0 0.0
        %1070 = vmatpush1.msra.mxu0 0.0
        %1071 = vmatprep.subr.mxu0 0.0
        %1072 = vmatpush1.msra.mxu0 0.0
        %1073 = vmatprep.subr.mxu0 0.0
        %1074 = vmatpush1.msra.mxu0 0.0
        %1075 = vmatprep.subr.mxu0 0.0
        %1076 = vmatpush1.msra.mxu0 0.0
        %1077 = vmatprep.subr.mxu0 0.0
        %1078 = vmatpush1.msra.mxu0 0.0
        %1079 = vmatprep.subr.mxu0 0.0
        %v1080 = vand.u32 %v399, 4294901760
        %v1081 = vsub.f32 %v399, %v1080
        %1082 = vmatpush1.msra.mxu0 %v1081
        %1083 = vmatprep.subr.mxu0 0.0
        %1084 = vmatpush2.msra.mxu0 0.0
        %1085 = vmatprep.subr.mxu0 0.0
        %1086 = vmatpush2.msra.mxu0 0.0
        %1087 = vmatprep.subr.mxu0 0.0
        %1088 = vmatpush2.msra.mxu0 0.0
        %1089 = vmatprep.subr.mxu0 0.0
        %1090 = vmatpush2.msra.mxu0 0.0
        %1091 = vmatprep.subr.mxu0 0.0
        %1092 = vmatpush2.msra.mxu0 0.0
        %1093 = vmatprep.subr.mxu0 0.0
        %1094 = vmatpush2.msra.mxu0 0.0
        %1095 = vmatprep.subr.mxu0 0.0
        %1096 = vmatpush2.msra.mxu0 0.0
        %1097 = vmatprep.subr.mxu0 0.0
        %1098 = vmatpush2.msra.mxu0 0.0
        %1099 = vmatprep.subr.mxu0 0.0
        %1100 = vmatpush2.msra.mxu0 0.0
        %1101 = vmatprep.subr.mxu0 0.0
        %1102 = vmatpush2.msra.mxu0 0.0
        %1103 = vmatprep.subr.mxu0 0.0
        %1104 = vmatpush2.msra.mxu0 0.0
        %1105 = vmatprep.subr.mxu0 0.0
        %1106 = vmatpush2.msra.mxu0 0.0
        %1107 = vmatprep.subr.mxu0 0.0
        %1108 = vmatpush2.msra.mxu0 0.0
        %1109 = vmatprep.subr.mxu0 0.0
        %1110 = vmatpush2.msra.mxu0 0.0
        %1111 = vmatprep.subr.mxu0 0.0
        %1112 = vmatpush2.msra.mxu0 0.0
        %1113 = vmatprep.subr.mxu0 0.0
        %1114 = vmatpush2.msra.mxu0 0.0
        %1115 = vmatprep.mubr.f32.mxu0 0.0
        %v1116 = vand.u32 %v302, 4294901760
        %v1117 = vsub.f32 %v302, %v1116
        %1118 = vmatmul.mubr.f32.gmra.mxu0 %v1117
        %v1119 = vpop.f32.mrf.mxu0
        %v1120 = vadd.f32 %v860, %v1119
        %v1121 = vpop.f32.mrf.mxu0
        %1122 = vmatprep.mubr.f32.mxu0 0.0
        %v1123 = vand.u32 %v305, 4294901760
        %v1124 = vsub.f32 %v305, %v1123
        %1125 = vmatmul.mubr.f32.gmra.mxu0 %v1124
        %v1126 = vpop.f32.mrf.mxu0
        %v1127 = vadd.f32 %v866, %v1126
        %v1128 = vpop.f32.mrf.mxu0
        %1129 = vmatprep.mubr.f32.mxu0 0.0
        %v1130 = vand.u32 %v308, 4294901760
        %v1131 = vsub.f32 %v308, %v1130
        %1132 = vmatmul.mubr.f32.gmra.mxu0 %v1131
        %v1133 = vpop.f32.mrf.mxu0
        %v1134 = vadd.f32 %v872, %v1133
        %v1135 = vpop.f32.mrf.mxu0
        %1136 = vmatprep.mubr.f32.mxu0 0.0
        %v1137 = vand.u32 %v311, 4294901760
        %v1138 = vsub.f32 %v311, %v1137
        %1139 = vmatmul.mubr.f32.gmra.mxu0 %v1138
        %v1140 = vpop.f32.mrf.mxu0
        %v1141 = vadd.f32 %v878, %v1140
        %v1142 = vpop.f32.mrf.mxu0
        %1143 = vmatprep.mubr.f32.mxu0 0.0
        %v1144 = vand.u32 %v314, 4294901760
        %v1145 = vsub.f32 %v314, %v1144
        %1146 = vmatmul.mubr.f32.gmra.mxu0 %v1145
        %v1147 = vpop.f32.mrf.mxu0
        %v1148 = vadd.f32 %v884, %v1147
        %v1149 = vpop.f32.mrf.mxu0
        %1150 = vmatprep.mubr.f32.mxu0 0.0
        %v1151 = vand.u32 %v317, 4294901760
        %v1152 = vsub.f32 %v317, %v1151
        %1153 = vmatmul.mubr.f32.gmra.mxu0 %v1152
        %v1154 = vpop.f32.mrf.mxu0
        %v1155 = vadd.f32 %v890, %v1154
        %v1156 = vpop.f32.mrf.mxu0
        %1157 = vmatprep.mubr.f32.mxu0 0.0
        %v1158 = vand.u32 %v320, 4294901760
        %v1159 = vsub.f32 %v320, %v1158
        %1160 = vmatmul.mubr.f32.gmra.mxu0 %v1159
        %v1161 = vpop.f32.mrf.mxu0
        %v1162 = vadd.f32 %v896, %v1161
        %v1163 = vpop.f32.mrf.mxu0
        %1164 = vmatprep.mubr.f32.mxu0 0.0
        %v1165 = vand.u32 %v323, 4294901760
        %v1166 = vsub.f32 %v323, %v1165
        %1167 = vmatmul.mubr.f32.gmra.mxu0 %v1166
        %v1168 = vpop.f32.mrf.mxu0
        %v1169 = vadd.f32 %v902, %v1168
        %v1170 = vpop.f32.mrf.mxu0
        %1171 = vmatprep.mubr.f32.mxu0 0.0
        %v1172 = vand.u32 %v326, 4294901760
        %v1173 = vsub.f32 %v326, %v1172
        %1174 = vmatmul.mubr.f32.gmra.mxu0 %v1173
        %v1175 = vpop.f32.mrf.mxu0
        %v1176 = vadd.f32 %v908, %v1175
        %v1177 = vpop.f32.mrf.mxu0
        %1178 = vmatprep.mubr.f32.mxu0 0.0
        %v1179 = vand.u32 %v329, 4294901760
        %v1180 = vsub.f32 %v329, %v1179
        %1181 = vmatmul.mubr.f32.gmra.mxu0 %v1180
        %v1182 = vpop.f32.mrf.mxu0
        %v1183 = vadd.f32 %v914, %v1182
        %v1184 = vpop.f32.mrf.mxu0
        %1185 = vmatprep.mubr.f32.mxu0 0.0
        %v1186 = vand.u32 %v332, 4294901760
        %v1187 = vsub.f32 %v332, %v1186
        %1188 = vmatmul.mubr.f32.gmra.mxu0 %v1187
        %v1189 = vpop.f32.mrf.mxu0
        %v1190 = vadd.f32 %v920, %v1189
        %v1191 = vpop.f32.mrf.mxu0
        %1192 = vmatprep.mubr.f32.mxu0 0.0
        %v1193 = vand.u32 %v335, 4294901760
        %v1194 = vsub.f32 %v335, %v1193
        %1195 = vmatmul.mubr.f32.gmra.mxu0 %v1194
        %v1196 = vpop.f32.mrf.mxu0
        %v1197 = vadd.f32 %v926, %v1196
        %v1198 = vpop.f32.mrf.mxu0
        %1199 = vmatprep.mubr.f32.mxu0 0.0
        %v1200 = vand.u32 %v338, 4294901760
        %v1201 = vsub.f32 %v338, %v1200
        %1202 = vmatmul.mubr.f32.gmra.mxu0 %v1201
        %v1203 = vpop.f32.mrf.mxu0
        %v1204 = vadd.f32 %v932, %v1203
        %v1205 = vpop.f32.mrf.mxu0
        %1206 = vmatprep.mubr.f32.mxu0 0.0
        %v1207 = vand.u32 %v341, 4294901760
        %v1208 = vsub.f32 %v341, %v1207
        %1209 = vmatmul.mubr.f32.gmra.mxu0 %v1208
        %v1210 = vpop.f32.mrf.mxu0
        %v1211 = vadd.f32 %v938, %v1210
        %v1212 = vpop.f32.mrf.mxu0
        %1213 = vmatprep.mubr.f32.mxu0 0.0
        %v1214 = vand.u32 %v344, 4294901760
        %v1215 = vsub.f32 %v344, %v1214
        %1216 = vmatmul.mubr.f32.gmra.mxu0 %v1215
        %v1217 = vpop.f32.mrf.mxu0
        %v1218 = vadd.f32 %v944, %v1217
        %v1219 = vpop.f32.mrf.mxu0
        %1220 = vmatprep.mubr.f32.mxu0 0.0
        %v1221 = vand.u32 %v347, 4294901760
        %v1222 = vsub.f32 %v347, %v1221
        %1223 = vmatmul.mubr.f32.gmra.mxu0 %v1222
        %v1224 = vpop.f32.mrf.mxu0
        %v1225 = vadd.f32 %v950, %v1224
        %v1226 = vpop.f32.mrf.mxu0
        %1227 = vmatprep.mubr.f32.mxu0 0.0
        %v1228 = vand.u32 %v350, 4294901760
        %v1229 = vsub.f32 %v350, %v1228
        %1230 = vmatmul.mubr.f32.gmra.mxu0 %v1229
        %v1231 = vpop.f32.mrf.mxu0
        %v1232 = vadd.f32 %v956, %v1231
        %v1233 = vpop.f32.mrf.mxu0
        %1234 = vmatprep.mubr.f32.mxu0 0.0
        %v1235 = vand.u32 %v353, 4294901760
        %v1236 = vsub.f32 %v353, %v1235
        %1237 = vmatmul.mubr.f32.gmra.mxu0 %v1236
        %v1238 = vpop.f32.mrf.mxu0
        %v1239 = vadd.f32 %v962, %v1238
        %v1240 = vpop.f32.mrf.mxu0
        %1241 = vmatprep.mubr.f32.mxu0 0.0
        %v1242 = vand.u32 %v356, 4294901760
        %v1243 = vsub.f32 %v356, %v1242
        %1244 = vmatmul.mubr.f32.gmra.mxu0 %v1243
        %v1245 = vpop.f32.mrf.mxu0
        %v1246 = vadd.f32 %v968, %v1245
        %v1247 = vpop.f32.mrf.mxu0
        %1248 = vmatprep.mubr.f32.mxu0 0.0
        %v1249 = vand.u32 %v359, 4294901760
        %v1250 = vsub.f32 %v359, %v1249
        %1251 = vmatmul.mubr.f32.gmra.mxu0 %v1250
        %v1252 = vpop.f32.mrf.mxu0
        %v1253 = vadd.f32 %v974, %v1252
        %v1254 = vpop.f32.mrf.mxu0
        %1255 = vmatprep.mubr.f32.mxu0 0.0
        %v1256 = vand.u32 %v362, 4294901760
        %v1257 = vsub.f32 %v362, %v1256
        %1258 = vmatmul.mubr.f32.gmra.mxu0 %v1257
        %v1259 = vpop.f32.mrf.mxu0
        %v1260 = vadd.f32 %v980, %v1259
        %v1261 = vpop.f32.mrf.mxu0
        %1262 = vmatprep.mubr.f32.mxu0 0.0
        %v1263 = vand.u32 %v365, 4294901760
        %v1264 = vsub.f32 %v365, %v1263
        %1265 = vmatmul.mubr.f32.gmra.mxu0 %v1264
        %v1266 = vpop.f32.mrf.mxu0
        %v1267 = vadd.f32 %v986, %v1266
        %v1268 = vpop.f32.mrf.mxu0
        %1269 = vmatprep.mubr.f32.mxu0 0.0
        %v1270 = vand.u32 %v368, 4294901760
        %v1271 = vsub.f32 %v368, %v1270
        %1272 = vmatmul.mubr.f32.gmra.mxu0 %v1271
        %v1273 = vpop.f32.mrf.mxu0
        %v1274 = vadd.f32 %v992, %v1273
        %v1275 = vpop.f32.mrf.mxu0
        %1276 = vmatprep.mubr.f32.mxu0 0.0
        %v1277 = vand.u32 %v371, 4294901760
        %v1278 = vsub.f32 %v371, %v1277
        %1279 = vmatmul.mubr.f32.gmra.mxu0 %v1278
        %v1280 = vpop.f32.mrf.mxu0
        %v1281 = vadd.f32 %v998, %v1280
        %v1282 = vpop.f32.mrf.mxu0
        %1283 = vmatprep.mubr.f32.mxu0 0.0
        %v1284 = vand.u32 %v374, 4294901760
        %v1285 = vsub.f32 %v374, %v1284
        %1286 = vmatmul.mubr.f32.gmra.mxu0 %v1285
        %v1287 = vpop.f32.mrf.mxu0
        %v1288 = vadd.f32 %v1004, %v1287
        %v1289 = vpop.f32.mrf.mxu0
        %1290 = vmatprep.mubr.f32.mxu0 0.0
        %v1291 = vand.u32 %v377, 4294901760
        %v1292 = vsub.f32 %v377, %v1291
        %1293 = vmatmul.mubr.f32.gmra.mxu0 %v1292
        %v1294 = vpop.f32.mrf.mxu0
        %v1295 = vadd.f32 %v1010, %v1294
        %v1296 = vpop.f32.mrf.mxu0
        %1297 = vmatprep.mubr.f32.mxu0 0.0
        %v1298 = vand.u32 %v380, 4294901760
        %v1299 = vsub.f32 %v380, %v1298
        %1300 = vmatmul.mubr.f32.gmra.mxu0 %v1299
        %v1301 = vpop.f32.mrf.mxu0
        %v1302 = vadd.f32 %v1016, %v1301
        %v1303 = vpop.f32.mrf.mxu0
        %1304 = vmatprep.mubr.f32.mxu0 0.0
        %v1305 = vand.u32 %v383, 4294901760
        %v1306 = vsub.f32 %v383, %v1305
        %1307 = vmatmul.mubr.f32.gmra.mxu0 %v1306
        %v1308 = vpop.f32.mrf.mxu0
        %v1309 = vadd.f32 %v1022, %v1308
        %v1310 = vpop.f32.mrf.mxu0
        %1311 = vmatprep.mubr.f32.mxu0 0.0
        %v1312 = vand.u32 %v386, 4294901760
        %v1313 = vsub.f32 %v386, %v1312
        %1314 = vmatmul.mubr.f32.gmra.mxu0 %v1313
        %v1315 = vpop.f32.mrf.mxu0
        %v1316 = vadd.f32 %v1028, %v1315
        %v1317 = vpop.f32.mrf.mxu0
        %1318 = vmatprep.mubr.f32.mxu0 0.0
        %v1319 = vand.u32 %v389, 4294901760
        %v1320 = vsub.f32 %v389, %v1319
        %1321 = vmatmul.mubr.f32.gmra.mxu0 %v1320
        %v1322 = vpop.f32.mrf.mxu0
        %v1323 = vadd.f32 %v1034, %v1322
        %v1324 = vpop.f32.mrf.mxu0
        %1325 = vmatprep.mubr.f32.mxu0 0.0
        %v1326 = vand.u32 %v392, 4294901760
        %v1327 = vsub.f32 %v392, %v1326
        %1328 = vmatmul.mubr.f32.gmra.mxu0 %v1327
        %v1329 = vpop.f32.mrf.mxu0
        %v1330 = vadd.f32 %v1040, %v1329
        %v1331 = vpop.f32.mrf.mxu0
        %1332 = vmatprep.mubr.f32.mxu0 0.0
        %v1333 = vand.u32 %v395, 4294901760
        %v1334 = vsub.f32 %v395, %v1333
        %1335 = vmatmul.mubr.f32.gmra.mxu0 %v1334
        %v1336 = vpop.f32.mrf.mxu0
        %v1337 = vadd.f32 %v1046, %v1336
        %v1338 = vpop.f32.mrf.mxu0
        %1339 = vdwg.mxu0
        %1340 = vmatprep.subr.mxu0 0.0
        %1341 = vmatpush1.msra.mxu0 0.0
        %1342 = vmatprep.subr.mxu0 0.0
        %1343 = vmatpush1.msra.mxu0 0.0
        %1344 = vmatprep.subr.mxu0 0.0
        %1345 = vmatpush1.msra.mxu0 0.0
        %1346 = vmatprep.subr.mxu0 0.0
        %1347 = vmatpush1.msra.mxu0 0.0
        %1348 = vmatprep.subr.mxu0 0.0
        %1349 = vmatpush1.msra.mxu0 0.0
        %1350 = vmatprep.subr.mxu0 0.0
        %1351 = vmatpush1.msra.mxu0 0.0
        %1352 = vmatprep.subr.mxu0 0.0
        %1353 = vmatpush1.msra.mxu0 0.0
        %1354 = vmatprep.subr.mxu0 0.0
        %1355 = vmatpush1.msra.mxu0 0.0
        %1356 = vmatprep.subr.mxu0 0.0
        %1357 = vmatpush1.msra.mxu0 0.0
        %1358 = vmatprep.subr.mxu0 0.0
        %1359 = vmatpush1.msra.mxu0 0.0
        %1360 = vmatprep.subr.mxu0 0.0
        %1361 = vmatpush1.msra.mxu0 0.0
        %1362 = vmatprep.subr.mxu0 0.0
        %1363 = vmatpush1.msra.mxu0 0.0
        %1364 = vmatprep.subr.mxu0 0.0
        %1365 = vmatpush1.msra.mxu0 0.0
        %1366 = vmatprep.subr.mxu0 0.0
        %1367 = vmatpush1.msra.mxu0 0.0
        %1368 = vmatprep.subr.mxu0 0.0
        %1369 = vmatpush1.msra.mxu0 0.0
        %1370 = vmatprep.subr.mxu0 0.0
        %v1371 = vand.u32 %v399, 4294901760
        %1372 = vmatpush1.msra.mxu0 %v1371
        %1373 = vmatprep.subr.mxu0 0.0
        %1374 = vmatpush2.msra.mxu0 0.0
        %1375 = vmatprep.subr.mxu0 0.0
        %1376 = vmatpush2.msra.mxu0 0.0
        %1377 = vmatprep.subr.mxu0 0.0
        %1378 = vmatpush2.msra.mxu0 0.0
        %1379 = vmatprep.subr.mxu0 0.0
        %1380 = vmatpush2.msra.mxu0 0.0
        %1381 = vmatprep.subr.mxu0 0.0
        %1382 = vmatpush2.msra.mxu0 0.0
        %1383 = vmatprep.subr.mxu0 0.0
        %1384 = vmatpush2.msra.mxu0 0.0
        %1385 = vmatprep.subr.mxu0 0.0
        %1386 = vmatpush2.msra.mxu0 0.0
        %1387 = vmatprep.subr.mxu0 0.0
        %1388 = vmatpush2.msra.mxu0 0.0
        %1389 = vmatprep.subr.mxu0 0.0
        %1390 = vmatpush2.msra.mxu0 0.0
        %1391 = vmatprep.subr.mxu0 0.0
        %1392 = vmatpush2.msra.mxu0 0.0
        %1393 = vmatprep.subr.mxu0 0.0
        %1394 = vmatpush2.msra.mxu0 0.0
        %1395 = vmatprep.subr.mxu0 0.0
        %1396 = vmatpush2.msra.mxu0 0.0
        %1397 = vmatprep.subr.mxu0 0.0
        %1398 = vmatpush2.msra.mxu0 0.0
        %1399 = vmatprep.subr.mxu0 0.0
        %1400 = vmatpush2.msra.mxu0 0.0
        %1401 = vmatprep.subr.mxu0 0.0
        %1402 = vmatpush2.msra.mxu0 0.0
        %1403 = vmatprep.subr.mxu0 0.0
        %1404 = vmatpush2.msra.mxu0 0.0
        %1405 = vmatprep.mubr.f32.mxu0 0.0
        %v1406 = vand.u32 %v302, 4294901760
        %v1407 = vsub.f32 %v302, %v1406
        %v1408 = vand.u32 %v1407, 4294901760
        %1409 = vmatmul.mubr.f32.gmra.mxu0 %v1408
        %v1410 = vpop.f32.mrf.mxu0
        %v1411 = vadd.f32 %v1120, %v1410
        %v1412 = vpop.f32.mrf.mxu0
        %1413 = vmatprep.mubr.f32.mxu0 0.0
        %v1414 = vand.u32 %v305, 4294901760
        %v1415 = vsub.f32 %v305, %v1414
        %v1416 = vand.u32 %v1415, 4294901760
        %1417 = vmatmul.mubr.f32.gmra.mxu0 %v1416
        %v1418 = vpop.f32.mrf.mxu0
        %v1419 = vadd.f32 %v1127, %v1418
        %v1420 = vpop.f32.mrf.mxu0
        %1421 = vmatprep.mubr.f32.mxu0 0.0
        %v1422 = vand.u32 %v308, 4294901760
        %v1423 = vsub.f32 %v308, %v1422
        %v1424 = vand.u32 %v1423, 4294901760
        %1425 = vmatmul.mubr.f32.gmra.mxu0 %v1424
        %v1426 = vpop.f32.mrf.mxu0
        %v1427 = vadd.f32 %v1134, %v1426
        %v1428 = vpop.f32.mrf.mxu0
        %1429 = vmatprep.mubr.f32.mxu0 0.0
        %v1430 = vand.u32 %v311, 4294901760
        %v1431 = vsub.f32 %v311, %v1430
        %v1432 = vand.u32 %v1431, 4294901760
        %1433 = vmatmul.mubr.f32.gmra.mxu0 %v1432
        %v1434 = vpop.f32.mrf.mxu0
        %v1435 = vadd.f32 %v1141, %v1434
        %v1436 = vpop.f32.mrf.mxu0
        %1437 = vmatprep.mubr.f32.mxu0 0.0
        %v1438 = vand.u32 %v314, 4294901760
        %v1439 = vsub.f32 %v314, %v1438
        %v1440 = vand.u32 %v1439, 4294901760
        %1441 = vmatmul.mubr.f32.gmra.mxu0 %v1440
        %v1442 = vpop.f32.mrf.mxu0
        %v1443 = vadd.f32 %v1148, %v1442
        %v1444 = vpop.f32.mrf.mxu0
        %1445 = vmatprep.mubr.f32.mxu0 0.0
        %v1446 = vand.u32 %v317, 4294901760
        %v1447 = vsub.f32 %v317, %v1446
        %v1448 = vand.u32 %v1447, 4294901760
        %1449 = vmatmul.mubr.f32.gmra.mxu0 %v1448
        %v1450 = vpop.f32.mrf.mxu0
        %v1451 = vadd.f32 %v1155, %v1450
        %v1452 = vpop.f32.mrf.mxu0
        %1453 = vmatprep.mubr.f32.mxu0 0.0
        %v1454 = vand.u32 %v320, 4294901760
        %v1455 = vsub.f32 %v320, %v1454
        %v1456 = vand.u32 %v1455, 4294901760
        %1457 = vmatmul.mubr.f32.gmra.mxu0 %v1456
        %v1458 = vpop.f32.mrf.mxu0
        %v1459 = vadd.f32 %v1162, %v1458
        %v1460 = vpop.f32.mrf.mxu0
        %1461 = vmatprep.mubr.f32.mxu0 0.0
        %v1462 = vand.u32 %v323, 4294901760
        %v1463 = vsub.f32 %v323, %v1462
        %v1464 = vand.u32 %v1463, 4294901760
        %1465 = vmatmul.mubr.f32.gmra.mxu0 %v1464
        %v1466 = vpop.f32.mrf.mxu0
        %v1467 = vadd.f32 %v1169, %v1466
        %v1468 = vpop.f32.mrf.mxu0
        %1469 = vmatprep.mubr.f32.mxu0 0.0
        %v1470 = vand.u32 %v326, 4294901760
        %v1471 = vsub.f32 %v326, %v1470
        %v1472 = vand.u32 %v1471, 4294901760
        %1473 = vmatmul.mubr.f32.gmra.mxu0 %v1472
        %v1474 = vpop.f32.mrf.mxu0
        %v1475 = vadd.f32 %v1176, %v1474
        %v1476 = vpop.f32.mrf.mxu0
        %1477 = vmatprep.mubr.f32.mxu0 0.0
        %v1478 = vand.u32 %v329, 4294901760
        %v1479 = vsub.f32 %v329, %v1478
        %v1480 = vand.u32 %v1479, 4294901760
        %1481 = vmatmul.mubr.f32.gmra.mxu0 %v1480
        %v1482 = vpop.f32.mrf.mxu0
        %v1483 = vadd.f32 %v1183, %v1482
        %v1484 = vpop.f32.mrf.mxu0
        %1485 = vmatprep.mubr.f32.mxu0 0.0
        %v1486 = vand.u32 %v332, 4294901760
        %v1487 = vsub.f32 %v332, %v1486
        %v1488 = vand.u32 %v1487, 4294901760
        %1489 = vmatmul.mubr.f32.gmra.mxu0 %v1488
        %v1490 = vpop.f32.mrf.mxu0
        %v1491 = vadd.f32 %v1190, %v1490
        %v1492 = vpop.f32.mrf.mxu0
        %1493 = vmatprep.mubr.f32.mxu0 0.0
        %v1494 = vand.u32 %v335, 4294901760
        %v1495 = vsub.f32 %v335, %v1494
        %v1496 = vand.u32 %v1495, 4294901760
        %1497 = vmatmul.mubr.f32.gmra.mxu0 %v1496
        %v1498 = vpop.f32.mrf.mxu0
        %v1499 = vadd.f32 %v1197, %v1498
        %v1500 = vpop.f32.mrf.mxu0
        %1501 = vmatprep.mubr.f32.mxu0 0.0
        %v1502 = vand.u32 %v338, 4294901760
        %v1503 = vsub.f32 %v338, %v1502
        %v1504 = vand.u32 %v1503, 4294901760
        %1505 = vmatmul.mubr.f32.gmra.mxu0 %v1504
        %v1506 = vpop.f32.mrf.mxu0
        %v1507 = vadd.f32 %v1204, %v1506
        %v1508 = vpop.f32.mrf.mxu0
        %1509 = vmatprep.mubr.f32.mxu0 0.0
        %v1510 = vand.u32 %v341, 4294901760
        %v1511 = vsub.f32 %v341, %v1510
        %v1512 = vand.u32 %v1511, 4294901760
        %1513 = vmatmul.mubr.f32.gmra.mxu0 %v1512
        %v1514 = vpop.f32.mrf.mxu0
        %v1515 = vadd.f32 %v1211, %v1514
        %v1516 = vpop.f32.mrf.mxu0
        %1517 = vmatprep.mubr.f32.mxu0 0.0
        %v1518 = vand.u32 %v344, 4294901760
        %v1519 = vsub.f32 %v344, %v1518
        %v1520 = vand.u32 %v1519, 4294901760
        %1521 = vmatmul.mubr.f32.gmra.mxu0 %v1520
        %v1522 = vpop.f32.mrf.mxu0
        %v1523 = vadd.f32 %v1218, %v1522
        %v1524 = vpop.f32.mrf.mxu0
        %1525 = vmatprep.mubr.f32.mxu0 0.0
        %v1526 = vand.u32 %v347, 4294901760
        %v1527 = vsub.f32 %v347, %v1526
        %v1528 = vand.u32 %v1527, 4294901760
        %1529 = vmatmul.mubr.f32.gmra.mxu0 %v1528
        %v1530 = vpop.f32.mrf.mxu0
        %v1531 = vadd.f32 %v1225, %v1530
        %v1532 = vpop.f32.mrf.mxu0
        %1533 = vmatprep.mubr.f32.mxu0 0.0
        %v1534 = vand.u32 %v350, 4294901760
        %v1535 = vsub.f32 %v350, %v1534
        %v1536 = vand.u32 %v1535, 4294901760
        %1537 = vmatmul.mubr.f32.gmra.mxu0 %v1536
        %v1538 = vpop.f32.mrf.mxu0
        %v1539 = vadd.f32 %v1232, %v1538
        %v1540 = vpop.f32.mrf.mxu0
        %1541 = vmatprep.mubr.f32.mxu0 0.0
        %v1542 = vand.u32 %v353, 4294901760
        %v1543 = vsub.f32 %v353, %v1542
        %v1544 = vand.u32 %v1543, 4294901760
        %1545 = vmatmul.mubr.f32.gmra.mxu0 %v1544
        %v1546 = vpop.f32.mrf.mxu0
        %v1547 = vadd.f32 %v1239, %v1546
        %v1548 = vpop.f32.mrf.mxu0
        %1549 = vmatprep.mubr.f32.mxu0 0.0
        %v1550 = vand.u32 %v356, 4294901760
        %v1551 = vsub.f32 %v356, %v1550
        %v1552 = vand.u32 %v1551, 4294901760
        %1553 = vmatmul.mubr.f32.gmra.mxu0 %v1552
        %v1554 = vpop.f32.mrf.mxu0
        %v1555 = vadd.f32 %v1246, %v1554
        %v1556 = vpop.f32.mrf.mxu0
        %1557 = vmatprep.mubr.f32.mxu0 0.0
        %v1558 = vand.u32 %v359, 4294901760
        %v1559 = vsub.f32 %v359, %v1558
        %v1560 = vand.u32 %v1559, 4294901760
        %1561 = vmatmul.mubr.f32.gmra.mxu0 %v1560
        %v1562 = vpop.f32.mrf.mxu0
        %v1563 = vadd.f32 %v1253, %v1562
        %v1564 = vpop.f32.mrf.mxu0
        %1565 = vmatprep.mubr.f32.mxu0 0.0
        %v1566 = vand.u32 %v362, 4294901760
        %v1567 = vsub.f32 %v362, %v1566
        %v1568 = vand.u32 %v1567, 4294901760
        %1569 = vmatmul.mubr.f32.gmra.mxu0 %v1568
        %v1570 = vpop.f32.mrf.mxu0
        %v1571 = vadd.f32 %v1260, %v1570
        %v1572 = vpop.f32.mrf.mxu0
        %1573 = vmatprep.mubr.f32.mxu0 0.0
        %v1574 = vand.u32 %v365, 4294901760
        %v1575 = vsub.f32 %v365, %v1574
        %v1576 = vand.u32 %v1575, 4294901760
        %1577 = vmatmul.mubr.f32.gmra.mxu0 %v1576
        %v1578 = vpop.f32.mrf.mxu0
        %v1579 = vadd.f32 %v1267, %v1578
        %v1580 = vpop.f32.mrf.mxu0
        %1581 = vmatprep.mubr.f32.mxu0 0.0
        %v1582 = vand.u32 %v368, 4294901760
        %v1583 = vsub.f32 %v368, %v1582
        %v1584 = vand.u32 %v1583, 4294901760
        %1585 = vmatmul.mubr.f32.gmra.mxu0 %v1584
        %v1586 = vpop.f32.mrf.mxu0
        %v1587 = vadd.f32 %v1274, %v1586
        %v1588 = vpop.f32.mrf.mxu0
        %1589 = vmatprep.mubr.f32.mxu0 0.0
        %v1590 = vand.u32 %v371, 4294901760
        %v1591 = vsub.f32 %v371, %v1590
        %v1592 = vand.u32 %v1591, 4294901760
        %1593 = vmatmul.mubr.f32.gmra.mxu0 %v1592
        %v1594 = vpop.f32.mrf.mxu0
        %v1595 = vadd.f32 %v1281, %v1594
        %v1596 = vpop.f32.mrf.mxu0
        %1597 = vmatprep.mubr.f32.mxu0 0.0
        %v1598 = vand.u32 %v374, 4294901760
        %v1599 = vsub.f32 %v374, %v1598
        %v1600 = vand.u32 %v1599, 4294901760
        %1601 = vmatmul.mubr.f32.gmra.mxu0 %v1600
        %v1602 = vpop.f32.mrf.mxu0
        %v1603 = vadd.f32 %v1288, %v1602
        %v1604 = vpop.f32.mrf.mxu0
        %1605 = vmatprep.mubr.f32.mxu0 0.0
        %v1606 = vand.u32 %v377, 4294901760
        %v1607 = vsub.f32 %v377, %v1606
        %v1608 = vand.u32 %v1607, 4294901760
        %1609 = vmatmul.mubr.f32.gmra.mxu0 %v1608
        %v1610 = vpop.f32.mrf.mxu0
        %v1611 = vadd.f32 %v1295, %v1610
        %v1612 = vpop.f32.mrf.mxu0
        %1613 = vmatprep.mubr.f32.mxu0 0.0
        %v1614 = vand.u32 %v380, 4294901760
        %v1615 = vsub.f32 %v380, %v1614
        %v1616 = vand.u32 %v1615, 4294901760
        %1617 = vmatmul.mubr.f32.gmra.mxu0 %v1616
        %v1618 = vpop.f32.mrf.mxu0
        %v1619 = vadd.f32 %v1302, %v1618
        %v1620 = vpop.f32.mrf.mxu0
        %1621 = vmatprep.mubr.f32.mxu0 0.0
        %v1622 = vand.u32 %v383, 4294901760
        %v1623 = vsub.f32 %v383, %v1622
        %v1624 = vand.u32 %v1623, 4294901760
        %1625 = vmatmul.mubr.f32.gmra.mxu0 %v1624
        %v1626 = vpop.f32.mrf.mxu0
        %v1627 = vadd.f32 %v1309, %v1626
        %v1628 = vpop.f32.mrf.mxu0
        %1629 = vmatprep.mubr.f32.mxu0 0.0
        %v1630 = vand.u32 %v386, 4294901760
        %v1631 = vsub.f32 %v386, %v1630
        %v1632 = vand.u32 %v1631, 4294901760
        %1633 = vmatmul.mubr.f32.gmra.mxu0 %v1632
        %v1634 = vpop.f32.mrf.mxu0
        %v1635 = vadd.f32 %v1316, %v1634
        %v1636 = vpop.f32.mrf.mxu0
        %1637 = vmatprep.mubr.f32.mxu0 0.0
        %v1638 = vand.u32 %v389, 4294901760
        %v1639 = vsub.f32 %v389, %v1638
        %v1640 = vand.u32 %v1639, 4294901760
        %1641 = vmatmul.mubr.f32.gmra.mxu0 %v1640
        %v1642 = vpop.f32.mrf.mxu0
        %v1643 = vadd.f32 %v1323, %v1642
        %v1644 = vpop.f32.mrf.mxu0
        %1645 = vmatprep.mubr.f32.mxu0 0.0
        %v1646 = vand.u32 %v392, 4294901760
        %v1647 = vsub.f32 %v392, %v1646
        %v1648 = vand.u32 %v1647, 4294901760
        %1649 = vmatmul.mubr.f32.gmra.mxu0 %v1648
        %v1650 = vpop.f32.mrf.mxu0
        %v1651 = vadd.f32 %v1330, %v1650
        %v1652 = vpop.f32.mrf.mxu0
        %1653 = vmatprep.mubr.f32.mxu0 0.0
        %v1654 = vand.u32 %v395, 4294901760
        %v1655 = vsub.f32 %v395, %v1654
        %v1656 = vand.u32 %v1655, 4294901760
        %1657 = vmatmul.mubr.f32.gmra.mxu0 %v1656
        %v1658 = vpop.f32.mrf.mxu0
        %v1659 = vadd.f32 %v1337, %v1658
        %v1660 = vpop.f32.mrf.mxu0
        %1661 = vdwg.mxu0
        %1662 = vmatprep.subr.mxu0 0.0
        %1663 = vmatpush1.msra.mxu0 0.0
        %1664 = vmatprep.subr.mxu0 0.0
        %1665 = vmatpush1.msra.mxu0 0.0
        %1666 = vmatprep.subr.mxu0 0.0
        %1667 = vmatpush1.msra.mxu0 0.0
        %1668 = vmatprep.subr.mxu0 0.0
        %1669 = vmatpush1.msra.mxu0 0.0
        %1670 = vmatprep.subr.mxu0 0.0
        %1671 = vmatpush1.msra.mxu0 0.0
        %1672 = vmatprep.subr.mxu0 0.0
        %1673 = vmatpush1.msra.mxu0 0.0
        %1674 = vmatprep.subr.mxu0 0.0
        %1675 = vmatpush1.msra.mxu0 0.0
        %1676 = vmatprep.subr.mxu0 0.0
        %1677 = vmatpush1.msra.mxu0 0.0
        %1678 = vmatprep.subr.mxu0 0.0
        %1679 = vmatpush1.msra.mxu0 0.0
        %1680 = vmatprep.subr.mxu0 0.0
        %1681 = vmatpush1.msra.mxu0 0.0
        %1682 = vmatprep.subr.mxu0 0.0
        %1683 = vmatpush1.msra.mxu0 0.0
        %1684 = vmatprep.subr.mxu0 0.0
        %1685 = vmatpush1.msra.mxu0 0.0
        %1686 = vmatprep.subr.mxu0 0.0
        %1687 = vmatpush1.msra.mxu0 0.0
        %1688 = vmatprep.subr.mxu0 0.0
        %1689 = vmatpush1.msra.mxu0 0.0
        %1690 = vmatprep.subr.mxu0 0.0
        %1691 = vmatpush1.msra.mxu0 0.0
        %1692 = vmatprep.subr.mxu0 0.0
        %v1693 = vand.u32 %v399, 4294901760
        %v1694 = vsub.f32 %v399, %v1693
        %v1695 = vand.u32 %v1694, 4294901760
        %1696 = vmatpush1.msra.mxu0 %v1695
        %1697 = vmatprep.subr.mxu0 0.0
        %1698 = vmatpush2.msra.mxu0 0.0
        %1699 = vmatprep.subr.mxu0 0.0
        %1700 = vmatpush2.msra.mxu0 0.0
        %1701 = vmatprep.subr.mxu0 0.0
        %1702 = vmatpush2.msra.mxu0 0.0
        %1703 = vmatprep.subr.mxu0 0.0
        %1704 = vmatpush2.msra.mxu0 0.0
        %1705 = vmatprep.subr.mxu0 0.0
        %1706 = vmatpush2.msra.mxu0 0.0
        %1707 = vmatprep.subr.mxu0 0.0
        %1708 = vmatpush2.msra.mxu0 0.0
        %1709 = vmatprep.subr.mxu0 0.0
        %1710 = vmatpush2.msra.mxu0 0.0
        %1711 = vmatprep.subr.mxu0 0.0
        %1712 = vmatpush2.msra.mxu0 0.0
        %1713 = vmatprep.subr.mxu0 0.0
        %1714 = vmatpush2.msra.mxu0 0.0
        %1715 = vmatprep.subr.mxu0 0.0
        %1716 = vmatpush2.msra.mxu0 0.0
        %1717 = vmatprep.subr.mxu0 0.0
        %1718 = vmatpush2.msra.mxu0 0.0
        %1719 = vmatprep.subr.mxu0 0.0
        %1720 = vmatpush2.msra.mxu0 0.0
        %1721 = vmatprep.subr.mxu0 0.0
        %1722 = vmatpush2.msra.mxu0 0.0
        %1723 = vmatprep.subr.mxu0 0.0
        %1724 = vmatpush2.msra.mxu0 0.0
        %1725 = vmatprep.subr.mxu0 0.0
        %1726 = vmatpush2.msra.mxu0 0.0
        %1727 = vmatprep.subr.mxu0 0.0
        %1728 = vmatpush2.msra.mxu0 0.0
        %1729 = vmatprep.mubr.f32.mxu0 0.0
        %v1730 = vand.u32 %v302, 4294901760
        %1731 = vmatmul.mubr.f32.gmra.mxu0 %v1730
        %v1732 = vpop.f32.mrf.mxu0
        %v1733 = vadd.f32 %v1411, %v1732
        %v1734 = vpop.f32.mrf.mxu0
        %1735 = vmatprep.mubr.f32.mxu0 0.0
        %v1736 = vand.u32 %v305, 4294901760
        %1737 = vmatmul.mubr.f32.gmra.mxu0 %v1736
        %v1738 = vpop.f32.mrf.mxu0
        %v1739 = vadd.f32 %v1419, %v1738
        %v1740 = vpop.f32.mrf.mxu0
        %1741 = vmatprep.mubr.f32.mxu0 0.0
        %v1742 = vand.u32 %v308, 4294901760
        %1743 = vmatmul.mubr.f32.gmra.mxu0 %v1742
        %v1744 = vpop.f32.mrf.mxu0
        %v1745 = vadd.f32 %v1427, %v1744
        %v1746 = vpop.f32.mrf.mxu0
        %1747 = vmatprep.mubr.f32.mxu0 0.0
        %v1748 = vand.u32 %v311, 4294901760
        %1749 = vmatmul.mubr.f32.gmra.mxu0 %v1748
        %v1750 = vpop.f32.mrf.mxu0
        %v1751 = vadd.f32 %v1435, %v1750
        %v1752 = vpop.f32.mrf.mxu0
        %1753 = vmatprep.mubr.f32.mxu0 0.0
        %v1754 = vand.u32 %v314, 4294901760
        %1755 = vmatmul.mubr.f32.gmra.mxu0 %v1754
        %v1756 = vpop.f32.mrf.mxu0
        %v1757 = vadd.f32 %v1443, %v1756
        %v1758 = vpop.f32.mrf.mxu0
        %1759 = vmatprep.mubr.f32.mxu0 0.0
        %v1760 = vand.u32 %v317, 4294901760
        %1761 = vmatmul.mubr.f32.gmra.mxu0 %v1760
        %v1762 = vpop.f32.mrf.mxu0
        %v1763 = vadd.f32 %v1451, %v1762
        %v1764 = vpop.f32.mrf.mxu0
        %1765 = vmatprep.mubr.f32.mxu0 0.0
        %v1766 = vand.u32 %v320, 4294901760
        %1767 = vmatmul.mubr.f32.gmra.mxu0 %v1766
        %v1768 = vpop.f32.mrf.mxu0
        %v1769 = vadd.f32 %v1459, %v1768
        %v1770 = vpop.f32.mrf.mxu0
        %1771 = vmatprep.mubr.f32.mxu0 0.0
        %v1772 = vand.u32 %v323, 4294901760
        %1773 = vmatmul.mubr.f32.gmra.mxu0 %v1772
        %v1774 = vpop.f32.mrf.mxu0
        %v1775 = vadd.f32 %v1467, %v1774
        %v1776 = vpop.f32.mrf.mxu0
        %1777 = vmatprep.mubr.f32.mxu0 0.0
        %v1778 = vand.u32 %v326, 4294901760
        %1779 = vmatmul.mubr.f32.gmra.mxu0 %v1778
        %v1780 = vpop.f32.mrf.mxu0
        %v1781 = vadd.f32 %v1475, %v1780
        %v1782 = vpop.f32.mrf.mxu0
        %1783 = vmatprep.mubr.f32.mxu0 0.0
        %v1784 = vand.u32 %v329, 4294901760
        %1785 = vmatmul.mubr.f32.gmra.mxu0 %v1784
        %v1786 = vpop.f32.mrf.mxu0
        %v1787 = vadd.f32 %v1483, %v1786
        %v1788 = vpop.f32.mrf.mxu0
        %1789 = vmatprep.mubr.f32.mxu0 0.0
        %v1790 = vand.u32 %v332, 4294901760
        %1791 = vmatmul.mubr.f32.gmra.mxu0 %v1790
        %v1792 = vpop.f32.mrf.mxu0
        %v1793 = vadd.f32 %v1491, %v1792
        %v1794 = vpop.f32.mrf.mxu0
        %1795 = vmatprep.mubr.f32.mxu0 0.0
        %v1796 = vand.u32 %v335, 4294901760
        %1797 = vmatmul.mubr.f32.gmra.mxu0 %v1796
        %v1798 = vpop.f32.mrf.mxu0
        %v1799 = vadd.f32 %v1499, %v1798
        %v1800 = vpop.f32.mrf.mxu0
        %1801 = vmatprep.mubr.f32.mxu0 0.0
        %v1802 = vand.u32 %v338, 4294901760
        %1803 = vmatmul.mubr.f32.gmra.mxu0 %v1802
        %v1804 = vpop.f32.mrf.mxu0
        %v1805 = vadd.f32 %v1507, %v1804
        %v1806 = vpop.f32.mrf.mxu0
        %1807 = vmatprep.mubr.f32.mxu0 0.0
        %v1808 = vand.u32 %v341, 4294901760
        %1809 = vmatmul.mubr.f32.gmra.mxu0 %v1808
        %v1810 = vpop.f32.mrf.mxu0
        %v1811 = vadd.f32 %v1515, %v1810
        %v1812 = vpop.f32.mrf.mxu0
        %1813 = vmatprep.mubr.f32.mxu0 0.0
        %v1814 = vand.u32 %v344, 4294901760
        %1815 = vmatmul.mubr.f32.gmra.mxu0 %v1814
        %v1816 = vpop.f32.mrf.mxu0
        %v1817 = vadd.f32 %v1523, %v1816
        %v1818 = vpop.f32.mrf.mxu0
        %1819 = vmatprep.mubr.f32.mxu0 0.0
        %v1820 = vand.u32 %v347, 4294901760
        %1821 = vmatmul.mubr.f32.gmra.mxu0 %v1820
        %v1822 = vpop.f32.mrf.mxu0
        %v1823 = vadd.f32 %v1531, %v1822
        %v1824 = vpop.f32.mrf.mxu0
        %1825 = vmatprep.mubr.f32.mxu0 0.0
        %v1826 = vand.u32 %v350, 4294901760
        %1827 = vmatmul.mubr.f32.gmra.mxu0 %v1826
        %v1828 = vpop.f32.mrf.mxu0
        %v1829 = vadd.f32 %v1539, %v1828
        %v1830 = vpop.f32.mrf.mxu0
        %1831 = vmatprep.mubr.f32.mxu0 0.0
        %v1832 = vand.u32 %v353, 4294901760
        %1833 = vmatmul.mubr.f32.gmra.mxu0 %v1832
        %v1834 = vpop.f32.mrf.mxu0
        %v1835 = vadd.f32 %v1547, %v1834
        %v1836 = vpop.f32.mrf.mxu0
        %1837 = vmatprep.mubr.f32.mxu0 0.0
        %v1838 = vand.u32 %v356, 4294901760
        %1839 = vmatmul.mubr.f32.gmra.mxu0 %v1838
        %v1840 = vpop.f32.mrf.mxu0
        %v1841 = vadd.f32 %v1555, %v1840
        %v1842 = vpop.f32.mrf.mxu0
        %1843 = vmatprep.mubr.f32.mxu0 0.0
        %v1844 = vand.u32 %v359, 4294901760
        %1845 = vmatmul.mubr.f32.gmra.mxu0 %v1844
        %v1846 = vpop.f32.mrf.mxu0
        %v1847 = vadd.f32 %v1563, %v1846
        %v1848 = vpop.f32.mrf.mxu0
        %1849 = vmatprep.mubr.f32.mxu0 0.0
        %v1850 = vand.u32 %v362, 4294901760
        %1851 = vmatmul.mubr.f32.gmra.mxu0 %v1850
        %v1852 = vpop.f32.mrf.mxu0
        %v1853 = vadd.f32 %v1571, %v1852
        %v1854 = vpop.f32.mrf.mxu0
        %1855 = vmatprep.mubr.f32.mxu0 0.0
        %v1856 = vand.u32 %v365, 4294901760
        %1857 = vmatmul.mubr.f32.gmra.mxu0 %v1856
        %v1858 = vpop.f32.mrf.mxu0
        %v1859 = vadd.f32 %v1579, %v1858
        %v1860 = vpop.f32.mrf.mxu0
        %1861 = vmatprep.mubr.f32.mxu0 0.0
        %v1862 = vand.u32 %v368, 4294901760
        %1863 = vmatmul.mubr.f32.gmra.mxu0 %v1862
        %v1864 = vpop.f32.mrf.mxu0
        %v1865 = vadd.f32 %v1587, %v1864
        %v1866 = vpop.f32.mrf.mxu0
        %1867 = vmatprep.mubr.f32.mxu0 0.0
        %v1868 = vand.u32 %v371, 4294901760
        %1869 = vmatmul.mubr.f32.gmra.mxu0 %v1868
        %v1870 = vpop.f32.mrf.mxu0
        %v1871 = vadd.f32 %v1595, %v1870
        %v1872 = vpop.f32.mrf.mxu0
        %1873 = vmatprep.mubr.f32.mxu0 0.0
        %v1874 = vand.u32 %v374, 4294901760
        %1875 = vmatmul.mubr.f32.gmra.mxu0 %v1874
        %v1876 = vpop.f32.mrf.mxu0
        %v1877 = vadd.f32 %v1603, %v1876
        %v1878 = vpop.f32.mrf.mxu0
        %1879 = vmatprep.mubr.f32.mxu0 0.0
        %v1880 = vand.u32 %v377, 4294901760
        %1881 = vmatmul.mubr.f32.gmra.mxu0 %v1880
        %v1882 = vpop.f32.mrf.mxu0
        %v1883 = vadd.f32 %v1611, %v1882
        %v1884 = vpop.f32.mrf.mxu0
        %1885 = vmatprep.mubr.f32.mxu0 0.0
        %v1886 = vand.u32 %v380, 4294901760
        %1887 = vmatmul.mubr.f32.gmra.mxu0 %v1886
        %v1888 = vpop.f32.mrf.mxu0
        %v1889 = vadd.f32 %v1619, %v1888
        %v1890 = vpop.f32.mrf.mxu0
        %1891 = vmatprep.mubr.f32.mxu0 0.0
        %v1892 = vand.u32 %v383, 4294901760
        %1893 = vmatmul.mubr.f32.gmra.mxu0 %v1892
        %v1894 = vpop.f32.mrf.mxu0
        %v1895 = vadd.f32 %v1627, %v1894
        %v1896 = vpop.f32.mrf.mxu0
        %1897 = vmatprep.mubr.f32.mxu0 0.0
        %v1898 = vand.u32 %v386, 4294901760
        %1899 = vmatmul.mubr.f32.gmra.mxu0 %v1898
        %v1900 = vpop.f32.mrf.mxu0
        %v1901 = vadd.f32 %v1635, %v1900
        %v1902 = vpop.f32.mrf.mxu0
        %1903 = vmatprep.mubr.f32.mxu0 0.0
        %v1904 = vand.u32 %v389, 4294901760
        %1905 = vmatmul.mubr.f32.gmra.mxu0 %v1904
        %v1906 = vpop.f32.mrf.mxu0
        %v1907 = vadd.f32 %v1643, %v1906
        %v1908 = vpop.f32.mrf.mxu0
        %1909 = vmatprep.mubr.f32.mxu0 0.0
        %v1910 = vand.u32 %v392, 4294901760
        %1911 = vmatmul.mubr.f32.gmra.mxu0 %v1910
        %v1912 = vpop.f32.mrf.mxu0
        %v1913 = vadd.f32 %v1651, %v1912
        %v1914 = vpop.f32.mrf.mxu0
        %1915 = vmatprep.mubr.f32.mxu0 0.0
        %v1916 = vand.u32 %v395, 4294901760
        %1917 = vmatmul.mubr.f32.gmra.mxu0 %v1916
        %v1918 = vpop.f32.mrf.mxu0
        %v1919 = vadd.f32 %v1659, %v1918
        %v1920 = vpop.f32.mrf.mxu0
        %1921 = vdwg.mxu0
        %1922 = vmatprep.subr.mxu0 0.0
        %1923 = vmatpush1.msra.mxu0 0.0
        %1924 = vmatprep.subr.mxu0 0.0
        %1925 = vmatpush1.msra.mxu0 0.0
        %1926 = vmatprep.subr.mxu0 0.0
        %1927 = vmatpush1.msra.mxu0 0.0
        %1928 = vmatprep.subr.mxu0 0.0
        %1929 = vmatpush1.msra.mxu0 0.0
        %1930 = vmatprep.subr.mxu0 0.0
        %1931 = vmatpush1.msra.mxu0 0.0
        %1932 = vmatprep.subr.mxu0 0.0
        %1933 = vmatpush1.msra.mxu0 0.0
        %1934 = vmatprep.subr.mxu0 0.0
        %1935 = vmatpush1.msra.mxu0 0.0
        %1936 = vmatprep.subr.mxu0 0.0
        %1937 = vmatpush1.msra.mxu0 0.0
        %1938 = vmatprep.subr.mxu0 0.0
        %1939 = vmatpush1.msra.mxu0 0.0
        %1940 = vmatprep.subr.mxu0 0.0
        %1941 = vmatpush1.msra.mxu0 0.0
        %1942 = vmatprep.subr.mxu0 0.0
        %1943 = vmatpush1.msra.mxu0 0.0
        %1944 = vmatprep.subr.mxu0 0.0
        %1945 = vmatpush1.msra.mxu0 0.0
        %1946 = vmatprep.subr.mxu0 0.0
        %1947 = vmatpush1.msra.mxu0 0.0
        %1948 = vmatprep.subr.mxu0 0.0
        %1949 = vmatpush1.msra.mxu0 0.0
        %1950 = vmatprep.subr.mxu0 0.0
        %1951 = vmatpush1.msra.mxu0 0.0
        %1952 = vmatprep.subr.mxu0 0.0
        %v1953 = vand.u32 %v399, 4294901760
        %1954 = vmatpush1.msra.mxu0 %v1953
        %1955 = vmatprep.subr.mxu0 0.0
        %1956 = vmatpush2.msra.mxu0 0.0
        %1957 = vmatprep.subr.mxu0 0.0
        %1958 = vmatpush2.msra.mxu0 0.0
        %1959 = vmatprep.subr.mxu0 0.0
        %1960 = vmatpush2.msra.mxu0 0.0
        %1961 = vmatprep.subr.mxu0 0.0
        %1962 = vmatpush2.msra.mxu0 0.0
        %1963 = vmatprep.subr.mxu0 0.0
        %1964 = vmatpush2.msra.mxu0 0.0
        %1965 = vmatprep.subr.mxu0 0.0
        %1966 = vmatpush2.msra.mxu0 0.0
        %1967 = vmatprep.subr.mxu0 0.0
        %1968 = vmatpush2.msra.mxu0 0.0
        %1969 = vmatprep.subr.mxu0 0.0
        %1970 = vmatpush2.msra.mxu0 0.0
        %1971 = vmatprep.subr.mxu0 0.0
        %1972 = vmatpush2.msra.mxu0 0.0
        %1973 = vmatprep.subr.mxu0 0.0
        %1974 = vmatpush2.msra.mxu0 0.0
        %1975 = vmatprep.subr.mxu0 0.0
        %1976 = vmatpush2.msra.mxu0 0.0
        %1977 = vmatprep.subr.mxu0 0.0
        %1978 = vmatpush2.msra.mxu0 0.0
        %1979 = vmatprep.subr.mxu0 0.0
        %1980 = vmatpush2.msra.mxu0 0.0
        %1981 = vmatprep.subr.mxu0 0.0
        %1982 = vmatpush2.msra.mxu0 0.0
        %1983 = vmatprep.subr.mxu0 0.0
        %1984 = vmatpush2.msra.mxu0 0.0
        %1985 = vmatprep.subr.mxu0 0.0
        %1986 = vmatpush2.msra.mxu0 0.0
        %1987 = vmatprep.mubr.f32.mxu0 0.0
        %v1988 = vand.u32 %v302, 4294901760
        %1989 = vmatmul.mubr.f32.gmra.mxu0 %v1988
        %v1990 = vpop.f32.mrf.mxu0
        %v1991 = vadd.f32 %v1733, %v1990
        %v1992 = vpop.f32.mrf.mxu0
        %1993 = vmatprep.mubr.f32.mxu0 0.0
        %v1994 = vand.u32 %v305, 4294901760
        %1995 = vmatmul.mubr.f32.gmra.mxu0 %v1994
        %v1996 = vpop.f32.mrf.mxu0
        %v1997 = vadd.f32 %v1739, %v1996
        %v1998 = vpop.f32.mrf.mxu0
        %1999 = vmatprep.mubr.f32.mxu0 0.0
        %v2000 = vand.u32 %v308, 4294901760
        %2001 = vmatmul.mubr.f32.gmra.mxu0 %v2000
        %v2002 = vpop.f32.mrf.mxu0
        %v2003 = vadd.f32 %v1745, %v2002
        %v2004 = vpop.f32.mrf.mxu0
        %2005 = vmatprep.mubr.f32.mxu0 0.0
        %v2006 = vand.u32 %v311, 4294901760
        %2007 = vmatmul.mubr.f32.gmra.mxu0 %v2006
        %v2008 = vpop.f32.mrf.mxu0
        %v2009 = vadd.f32 %v1751, %v2008
        %v2010 = vpop.f32.mrf.mxu0
        %2011 = vmatprep.mubr.f32.mxu0 0.0
        %v2012 = vand.u32 %v314, 4294901760
        %2013 = vmatmul.mubr.f32.gmra.mxu0 %v2012
        %v2014 = vpop.f32.mrf.mxu0
        %v2015 = vadd.f32 %v1757, %v2014
        %v2016 = vpop.f32.mrf.mxu0
        %2017 = vmatprep.mubr.f32.mxu0 0.0
        %v2018 = vand.u32 %v317, 4294901760
        %2019 = vmatmul.mubr.f32.gmra.mxu0 %v2018
        %v2020 = vpop.f32.mrf.mxu0
        %v2021 = vadd.f32 %v1763, %v2020
        %v2022 = vpop.f32.mrf.mxu0
        %2023 = vmatprep.mubr.f32.mxu0 0.0
        %v2024 = vand.u32 %v320, 4294901760
        %2025 = vmatmul.mubr.f32.gmra.mxu0 %v2024
        %v2026 = vpop.f32.mrf.mxu0
        %v2027 = vadd.f32 %v1769, %v2026
        %v2028 = vpop.f32.mrf.mxu0
        %2029 = vmatprep.mubr.f32.mxu0 0.0
        %v2030 = vand.u32 %v323, 4294901760
        %2031 = vmatmul.mubr.f32.gmra.mxu0 %v2030
        %v2032 = vpop.f32.mrf.mxu0
        %v2033 = vadd.f32 %v1775, %v2032
        %v2034 = vpop.f32.mrf.mxu0
        %2035 = vmatprep.mubr.f32.mxu0 0.0
        %v2036 = vand.u32 %v326, 4294901760
        %2037 = vmatmul.mubr.f32.gmra.mxu0 %v2036
        %v2038 = vpop.f32.mrf.mxu0
        %v2039 = vadd.f32 %v1781, %v2038
        %v2040 = vpop.f32.mrf.mxu0
        %2041 = vmatprep.mubr.f32.mxu0 0.0
        %v2042 = vand.u32 %v329, 4294901760
        %2043 = vmatmul.mubr.f32.gmra.mxu0 %v2042
        %v2044 = vpop.f32.mrf.mxu0
        %v2045 = vadd.f32 %v1787, %v2044
        %v2046 = vpop.f32.mrf.mxu0
        %2047 = vmatprep.mubr.f32.mxu0 0.0
        %v2048 = vand.u32 %v332, 4294901760
        %2049 = vmatmul.mubr.f32.gmra.mxu0 %v2048
        %v2050 = vpop.f32.mrf.mxu0
        %v2051 = vadd.f32 %v1793, %v2050
        %v2052 = vpop.f32.mrf.mxu0
        %2053 = vmatprep.mubr.f32.mxu0 0.0
        %v2054 = vand.u32 %v335, 4294901760
        %2055 = vmatmul.mubr.f32.gmra.mxu0 %v2054
        %v2056 = vpop.f32.mrf.mxu0
        %v2057 = vadd.f32 %v1799, %v2056
        %v2058 = vpop.f32.mrf.mxu0
        %2059 = vmatprep.mubr.f32.mxu0 0.0
        %v2060 = vand.u32 %v338, 4294901760
        %2061 = vmatmul.mubr.f32.gmra.mxu0 %v2060
        %v2062 = vpop.f32.mrf.mxu0
        %v2063 = vadd.f32 %v1805, %v2062
        %v2064 = vpop.f32.mrf.mxu0
        %2065 = vmatprep.mubr.f32.mxu0 0.0
        %v2066 = vand.u32 %v341, 4294901760
        %2067 = vmatmul.mubr.f32.gmra.mxu0 %v2066
        %v2068 = vpop.f32.mrf.mxu0
        %v2069 = vadd.f32 %v1811, %v2068
        %v2070 = vpop.f32.mrf.mxu0
        %2071 = vmatprep.mubr.f32.mxu0 0.0
        %v2072 = vand.u32 %v344, 4294901760
        %2073 = vmatmul.mubr.f32.gmra.mxu0 %v2072
        %v2074 = vpop.f32.mrf.mxu0
        %v2075 = vadd.f32 %v1817, %v2074
        %v2076 = vpop.f32.mrf.mxu0
        %2077 = vmatprep.mubr.f32.mxu0 0.0
        %v2078 = vand.u32 %v347, 4294901760
        %2079 = vmatmul.mubr.f32.gmra.mxu0 %v2078
        %v2080 = vpop.f32.mrf.mxu0
        %v2081 = vadd.f32 %v1823, %v2080
        %v2082 = vpop.f32.mrf.mxu0
        %2083 = vmatprep.mubr.f32.mxu0 0.0
        %v2084 = vand.u32 %v350, 4294901760
        %2085 = vmatmul.mubr.f32.gmra.mxu0 %v2084
        %v2086 = vpop.f32.mrf.mxu0
        %v2087 = vadd.f32 %v1829, %v2086
        %v2088 = vpop.f32.mrf.mxu0
        %2089 = vmatprep.mubr.f32.mxu0 0.0
        %v2090 = vand.u32 %v353, 4294901760
        %2091 = vmatmul.mubr.f32.gmra.mxu0 %v2090
        %v2092 = vpop.f32.mrf.mxu0
        %v2093 = vadd.f32 %v1835, %v2092
        %v2094 = vpop.f32.mrf.mxu0
        %2095 = vmatprep.mubr.f32.mxu0 0.0
        %v2096 = vand.u32 %v356, 4294901760
        %2097 = vmatmul.mubr.f32.gmra.mxu0 %v2096
        %v2098 = vpop.f32.mrf.mxu0
        %v2099 = vadd.f32 %v1841, %v2098
        %v2100 = vpop.f32.mrf.mxu0
        %2101 = vmatprep.mubr.f32.mxu0 0.0
        %v2102 = vand.u32 %v359, 4294901760
        %2103 = vmatmul.mubr.f32.gmra.mxu0 %v2102
        %v2104 = vpop.f32.mrf.mxu0
        %v2105 = vadd.f32 %v1847, %v2104
        %v2106 = vpop.f32.mrf.mxu0
        %2107 = vmatprep.mubr.f32.mxu0 0.0
        %v2108 = vand.u32 %v362, 4294901760
        %2109 = vmatmul.mubr.f32.gmra.mxu0 %v2108
        %v2110 = vpop.f32.mrf.mxu0
        %v2111 = vadd.f32 %v1853, %v2110
        %v2112 = vpop.f32.mrf.mxu0
        %2113 = vmatprep.mubr.f32.mxu0 0.0
        %v2114 = vand.u32 %v365, 4294901760
        %2115 = vmatmul.mubr.f32.gmra.mxu0 %v2114
        %v2116 = vpop.f32.mrf.mxu0
        %v2117 = vadd.f32 %v1859, %v2116
        %v2118 = vpop.f32.mrf.mxu0
        %2119 = vmatprep.mubr.f32.mxu0 0.0
        %v2120 = vand.u32 %v368, 4294901760
        %2121 = vmatmul.mubr.f32.gmra.mxu0 %v2120
        %v2122 = vpop.f32.mrf.mxu0
        %v2123 = vadd.f32 %v1865, %v2122
        %v2124 = vpop.f32.mrf.mxu0
        %2125 = vmatprep.mubr.f32.mxu0 0.0
        %v2126 = vand.u32 %v371, 4294901760
        %2127 = vmatmul.mubr.f32.gmra.mxu0 %v2126
        %v2128 = vpop.f32.mrf.mxu0
        %v2129 = vadd.f32 %v1871, %v2128
        %v2130 = vpop.f32.mrf.mxu0
        %2131 = vmatprep.mubr.f32.mxu0 0.0
        %v2132 = vand.u32 %v374, 4294901760
        %2133 = vmatmul.mubr.f32.gmra.mxu0 %v2132
        %v2134 = vpop.f32.mrf.mxu0
        %v2135 = vadd.f32 %v1877, %v2134
        %v2136 = vpop.f32.mrf.mxu0
        %2137 = vmatprep.mubr.f32.mxu0 0.0
        %v2138 = vand.u32 %v377, 4294901760
        %2139 = vmatmul.mubr.f32.gmra.mxu0 %v2138
        %v2140 = vpop.f32.mrf.mxu0
        %v2141 = vadd.f32 %v1883, %v2140
        %v2142 = vpop.f32.mrf.mxu0
        %2143 = vmatprep.mubr.f32.mxu0 0.0
        %v2144 = vand.u32 %v380, 4294901760
        %2145 = vmatmul.mubr.f32.gmra.mxu0 %v2144
        %v2146 = vpop.f32.mrf.mxu0
        %v2147 = vadd.f32 %v1889, %v2146
        %v2148 = vpop.f32.mrf.mxu0
        %2149 = vmatprep.mubr.f32.mxu0 0.0
        %v2150 = vand.u32 %v383, 4294901760
        %2151 = vmatmul.mubr.f32.gmra.mxu0 %v2150
        %v2152 = vpop.f32.mrf.mxu0
        %v2153 = vadd.f32 %v1895, %v2152
        %v2154 = vpop.f32.mrf.mxu0
        %2155 = vmatprep.mubr.f32.mxu0 0.0
        %v2156 = vand.u32 %v386, 4294901760
        %2157 = vmatmul.mubr.f32.gmra.mxu0 %v2156
        %v2158 = vpop.f32.mrf.mxu0
        %v2159 = vadd.f32 %v1901, %v2158
        %v2160 = vpop.f32.mrf.mxu0
        %2161 = vmatprep.mubr.f32.mxu0 0.0
        %v2162 = vand.u32 %v389, 4294901760
        %2163 = vmatmul.mubr.f32.gmra.mxu0 %v2162
        %v2164 = vpop.f32.mrf.mxu0
        %v2165 = vadd.f32 %v1907, %v2164
        %v2166 = vpop.f32.mrf.mxu0
        %2167 = vmatprep.mubr.f32.mxu0 0.0
        %v2168 = vand.u32 %v392, 4294901760
        %2169 = vmatmul.mubr.f32.gmra.mxu0 %v2168
        %v2170 = vpop.f32.mrf.mxu0
        %v2171 = vadd.f32 %v1913, %v2170
        %v2172 = vpop.f32.mrf.mxu0
        %2173 = vmatprep.mubr.f32.mxu0 0.0
        %v2174 = vand.u32 %v395, 4294901760
        %2175 = vmatmul.mubr.f32.gmra.mxu0 %v2174
        %v2176 = vpop.f32.mrf.mxu0
        %v2177 = vadd.f32 %v1919, %v2176
        %v2178 = vpop.f32.mrf.mxu0
        %2179 = vdwg.mxu0
        %v2180 = vmax.f32 %v1991, 0.0
        %v2181 = vmax.f32 %v1997, 0.0
        %v2182 = vmax.f32 %v2003, 0.0
        %v2183 = vmax.f32 %v2009, 0.0
        %v2184 = vmax.f32 %v2015, 0.0
        %v2185 = vmax.f32 %v2021, 0.0
        %v2186 = vmax.f32 %v2027, 0.0
        %v2187 = vmax.f32 %v2033, 0.0
        %v2188 = vmax.f32 %v2039, 0.0
        %v2189 = vmax.f32 %v2045, 0.0
        %v2190 = vmax.f32 %v2051, 0.0
        %v2191 = vmax.f32 %v2057, 0.0
        %v2192 = vmax.f32 %v2063, 0.0
        %v2193 = vmax.f32 %v2069, 0.0
        %v2194 = vmax.f32 %v2075, 0.0
        %v2195 = vmax.f32 %v2081, 0.0
        %v2196 = vmax.f32 %v2087, 0.0
        %v2197 = vmax.f32 %v2093, 0.0
        %v2198 = vmax.f32 %v2099, 0.0
        %v2199 = vmax.f32 %v2105, 0.0
        %v2200 = vmax.f32 %v2111, 0.0
        %v2201 = vmax.f32 %v2117, 0.0
        %v2202 = vmax.f32 %v2123, 0.0
        %v2203 = vmax.f32 %v2129, 0.0
        %v2204 = vmax.f32 %v2135, 0.0
        %v2205 = vmax.f32 %v2141, 0.0
        %v2206 = vmax.f32 %v2147, 0.0
        %v2207 = vmax.f32 %v2153, 0.0
        %v2208 = vmax.f32 %v2159, 0.0
        %v2209 = vmax.f32 %v2165, 0.0
        %v2210 = vmax.f32 %v2171, 0.0
        %v2211 = vmax.f32 %v2177, 0.0
        %v2212 = vmin.f32 %v2180, 6.0
        %v2213 = vmin.f32 %v2181, 6.0
        %v2214 = vmin.f32 %v2182, 6.0
        %v2215 = vmin.f32 %v2183, 6.0
        %v2216 = vmin.f32 %v2184, 6.0
        %v2217 = vmin.f32 %v2185, 6.0
        %v2218 = vmin.f32 %v2186, 6.0
        %v2219 = vmin.f32 %v2187, 6.0
        %v2220 = vmin.f32 %v2188, 6.0
        %v2221 = vmin.f32 %v2189, 6.0
        %v2222 = vmin.f32 %v2190, 6.0
        %v2223 = vmin.f32 %v2191, 6.0
        %v2224 = vmin.f32 %v2192, 6.0
        %v2225 = vmin.f32 %v2193, 6.0
        %v2226 = vmin.f32 %v2194, 6.0
        %v2227 = vmin.f32 %v2195, 6.0
        %v2228 = vmin.f32 %v2196, 6.0
        %v2229 = vmin.f32 %v2197, 6.0
        %v2230 = vmin.f32 %v2198, 6.0
        %v2231 = vmin.f32 %v2199, 6.0
        %v2232 = vmin.f32 %v2200, 6.0
        %v2233 = vmin.f32 %v2201, 6.0
        %v2234 = vmin.f32 %v2202, 6.0
        %v2235 = vmin.f32 %v2203, 6.0
        %v2236 = vmin.f32 %v2204, 6.0
        %v2237 = vmin.f32 %v2205, 6.0
        %v2238 = vmin.f32 %v2206, 6.0
        %v2239 = vmin.f32 %v2207, 6.0
        %v2240 = vmin.f32 %v2208, 6.0
        %v2241 = vmin.f32 %v2209, 6.0
        %v2242 = vmin.f32 %v2210, 6.0
        %v2243 = vmin.f32 %v2211, 6.0
        %2244 = vst [vmem:[#allocation2] sm:$0xff] 0.0
        %2245 = vst [vmem:[#allocation2 + $0x8] sm:$0xff] 0.0
        %2246 = vst [vmem:[#allocation2 + $0x10] sm:$0x3] 0.0
        %s2247 = scalar_lea.vmem [#allocation2], 408
        %2248 = vst [vmem:[%s2247] sm:$0xff] 0.0
        %2249 = vst [vmem:[%s2247 + $0x8] sm:$0xff] 0.0
        %2250 = vst [vmem:[%s2247 + $0x10] sm:$0x3] 0.0
        %2251 = vst [vmem:[#allocation2] sm:$0x1] 0.0
        %2252 = vst [vmem:[#allocation2 + $0x18] sm:$0x1] 0.0
        %2253 = vst [vmem:[#allocation2 + $0x30] sm:$0x1] 0.0
        %2254 = vst [vmem:[#allocation2 + $0x48] sm:$0x1] 0.0
        %2255 = vst [vmem:[#allocation2 + $0x60] sm:$0x1] 0.0
        %2256 = vst [vmem:[#allocation2 + $0x78] sm:$0x1] 0.0
        %2257 = vst [vmem:[#allocation2 + $0x90] sm:$0x1] 0.0
        %2258 = vst [vmem:[#allocation2 + $0xa8] sm:$0x1] 0.0
        %2259 = vst [vmem:[#allocation2 + $0xc0] sm:$0x1] 0.0
        %2260 = vst [vmem:[#allocation2 + $0xd8] sm:$0x1] 0.0
        %2261 = vst [vmem:[#allocation2 + $0xf0] sm:$0x1] 0.0
        %2262 = vst [vmem:[#allocation2 + $0x108] sm:$0x1] 0.0
        %2263 = vst [vmem:[#allocation2 + $0x120] sm:$0x1] 0.0
        %2264 = vst [vmem:[#allocation2 + $0x138] sm:$0x1] 0.0
        %2265 = vst [vmem:[#allocation2 + $0x150] sm:$0x1] 0.0
        %2266 = vst [vmem:[#allocation2 + $0x168] sm:$0x1] 0.0
        %2267 = vst [vmem:[#allocation2 + $0x180] sm:$0x1] 0.0
        %2268 = vst [vmem:[#allocation2 + $0x198] sm:$0x1] 0.0
        %2269 = vst [vmem:[#allocation2 + $0x11] sm:$0x1] 0.0
        %2270 = vst [vmem:[#allocation2 + $0x29] sm:$0x1] 0.0
        %2271 = vst [vmem:[#allocation2 + $0x41] sm:$0x1] 0.0
        %2272 = vst [vmem:[#allocation2 + $0x59] sm:$0x1] 0.0
        %2273 = vst [vmem:[#allocation2 + $0x71] sm:$0x1] 0.0
        %2274 = vst [vmem:[#allocation2 + $0x89] sm:$0x1] 0.0
        %2275 = vst [vmem:[#allocation2 + $0xa1] sm:$0x1] 0.0
        %2276 = vst [vmem:[#allocation2 + $0xb9] sm:$0x1] 0.0
        %2277 = vst [vmem:[#allocation2 + $0xd1] sm:$0x1] 0.0
        %2278 = vst [vmem:[#allocation2 + $0xe9] sm:$0x1] 0.0
        %2279 = vst [vmem:[#allocation2 + $0x101] sm:$0x1] 0.0
        %2280 = vst [vmem:[#allocation2 + $0x119] sm:$0x1] 0.0
        %2281 = vst [vmem:[#allocation2 + $0x131] sm:$0x1] 0.0
        %2282 = vst [vmem:[#allocation2 + $0x149] sm:$0x1] 0.0
        %2283 = vst [vmem:[#allocation2 + $0x161] sm:$0x1] 0.0
        %2284 = vst [vmem:[#allocation2 + $0x179] sm:$0x1] 0.0
        %2285 = vst [vmem:[#allocation2 + $0x191] sm:$0x1] 0.0
        %2286 = vst [vmem:[#allocation2 + $0x1a9] sm:$0x1] 0.0
        %s2287 = scalar_lea.vmem [#allocation2], 24
        %2288 = vst [vmem:[%s2287 + $0x1] sm:$0xff] %v2212
        %2289 = vst [vmem:[%s2287 + $0x9] sm:$0xff] %v2213
        %2290 = vst [vmem:[%s2287 + $0x19] sm:$0xff] %v2214
        %2291 = vst [vmem:[%s2287 + $0x21] sm:$0xff] %v2215
        %2292 = vst [vmem:[%s2287 + $0x31] sm:$0xff] %v2216
        %2293 = vst [vmem:[%s2287 + $0x39] sm:$0xff] %v2217
        %2294 = vst [vmem:[%s2287 + $0x49] sm:$0xff] %v2218
        %2295 = vst [vmem:[%s2287 + $0x51] sm:$0xff] %v2219
        %2296 = vst [vmem:[%s2287 + $0x61] sm:$0xff] %v2220
        %2297 = vst [vmem:[%s2287 + $0x69] sm:$0xff] %v2221
        %2298 = vst [vmem:[%s2287 + $0x79] sm:$0xff] %v2222
        %2299 = vst [vmem:[%s2287 + $0x81] sm:$0xff] %v2223
        %2300 = vst [vmem:[%s2287 + $0x91] sm:$0xff] %v2224
        %2301 = vst [vmem:[%s2287 + $0x99] sm:$0xff] %v2225
        %2302 = vst [vmem:[%s2287 + $0xa9] sm:$0xff] %v2226
        %2303 = vst [vmem:[%s2287 + $0xb1] sm:$0xff] %v2227
        %2304 = vst [vmem:[%s2287 + $0xc1] sm:$0xff] %v2228
        %2305 = vst [vmem:[%s2287 + $0xc9] sm:$0xff] %v2229
        %2306 = vst [vmem:[%s2287 + $0xd9] sm:$0xff] %v2230
        %2307 = vst [vmem:[%s2287 + $0xe1] sm:$0xff] %v2231
        %2308 = vst [vmem:[%s2287 + $0xf1] sm:$0xff] %v2232
        %2309 = vst [vmem:[%s2287 + $0xf9] sm:$0xff] %v2233
        %2310 = vst [vmem:[%s2287 + $0x109] sm:$0xff] %v2234
        %2311 = vst [vmem:[%s2287 + $0x111] sm:$0xff] %v2235
        %2312 = vst [vmem:[%s2287 + $0x121] sm:$0xff] %v2236
        %2313 = vst [vmem:[%s2287 + $0x129] sm:$0xff] %v2237
        %2314 = vst [vmem:[%s2287 + $0x139] sm:$0xff] %v2238
        %2315 = vst [vmem:[%s2287 + $0x141] sm:$0xff] %v2239
        %2316 = vst [vmem:[%s2287 + $0x151] sm:$0xff] %v2240
        %2317 = vst [vmem:[%s2287 + $0x159] sm:$0xff] %v2241
        %2318 = vst [vmem:[%s2287 + $0x169] sm:$0xff] %v2242
        %2319 = vst [vmem:[%s2287 + $0x171] sm:$0xff] %v2243
        %v2320 = vld [vmem:[%s3] sm:$0xff]
        %v2321 = vld [vmem:[%s3 + $0x8] sm:$0x1]
        %v2322 = vld [vmem:[#allocation2] sm:$0xff]
        %v2323 = vld [vmem:[#allocation2 + $0x8] sm:$0xff]
        %v2324 = vld [vmem:[#allocation2 + $0x18] sm:$0xff]
        %v2325 = vld [vmem:[#allocation2 + $0x20] sm:$0xff]
        %v2326 = vld [vmem:[#allocation2 + $0x30] sm:$0xff]
        %v2327 = vld [vmem:[#allocation2 + $0x38] sm:$0xff]
        %v2328 = vld [vmem:[#allocation2 + $0x48] sm:$0xff]
        %v2329 = vld [vmem:[#allocation2 + $0x50] sm:$0xff]
        %v2330 = vld [vmem:[#allocation2 + $0x60] sm:$0xff]
        %v2331 = vld [vmem:[#allocation2 + $0x68] sm:$0xff]
        %v2332 = vld [vmem:[#allocation2 + $0x78] sm:$0xff]
        %v2333 = vld [vmem:[#allocation2 + $0x80] sm:$0xff]
        %v2334 = vld [vmem:[#allocation2 + $0x90] sm:$0xff]
        %v2335 = vld [vmem:[#allocation2 + $0x98] sm:$0xff]
        %v2336 = vld [vmem:[#allocation2 + $0xa8] sm:$0xff]
        %v2337 = vld [vmem:[#allocation2 + $0xb0] sm:$0xff]
        %v2338 = vld [vmem:[#allocation2 + $0xc0] sm:$0xff]
        %v2339 = vld [vmem:[#allocation2 + $0xc8] sm:$0xff]
        %v2340 = vld [vmem:[#allocation2 + $0xd8] sm:$0xff]
        %v2341 = vld [vmem:[#allocation2 + $0xe0] sm:$0xff]
        %v2342 = vld [vmem:[#allocation2 + $0xf0] sm:$0xff]
        %v2343 = vld [vmem:[#allocation2 + $0xf8] sm:$0xff]
        %v2344 = vld [vmem:[#allocation2 + $0x108] sm:$0xff]
        %v2345 = vld [vmem:[#allocation2 + $0x110] sm:$0xff]
        %v2346 = vld [vmem:[#allocation2 + $0x120] sm:$0xff]
        %v2347 = vld [vmem:[#allocation2 + $0x128] sm:$0xff]
        %v2348 = vld [vmem:[#allocation2 + $0x138] sm:$0xff]
        %v2349 = vld [vmem:[#allocation2 + $0x140] sm:$0xff]
        %v2350 = vld [vmem:[#allocation2 + $0x150] sm:$0xff]
        %v2351 = vld [vmem:[#allocation2 + $0x158] sm:$0xff]
        %v2352 = vld [vmem:[#allocation2 + $0x168] sm:$0xff]
        %v2353 = vld [vmem:[#allocation2 + $0x170] sm:$0xff]
        %v2354 = vlaneseq
        %v2355 = vshrl.u32 %v2354, 7
        %v2356 = vsub.s32 0, %v2355
        %v2357 = vrot.slane %v2320, %v2356
        %v2358 = vmul.f32 %v2322, %v2357
        %v2359 = vmul.f32 %v2323, %v2357
        %v2360 = vmul.f32 %v2324, %v2357
        %v2361 = vmul.f32 %v2325, %v2357
        %v2362 = vmul.f32 %v2326, %v2357
        %v2363 = vmul.f32 %v2327, %v2357
        %v2364 = vmul.f32 %v2328, %v2357
        %v2365 = vmul.f32 %v2329, %v2357
        %v2366 = vmul.f32 %v2330, %v2357
        %v2367 = vmul.f32 %v2331, %v2357
        %v2368 = vmul.f32 %v2332, %v2357
        %v2369 = vmul.f32 %v2333, %v2357
        %v2370 = vmul.f32 %v2334, %v2357
        %v2371 = vmul.f32 %v2335, %v2357
        %v2372 = vmul.f32 %v2336, %v2357
        %v2373 = vmul.f32 %v2337, %v2357
        %v2374 = vmul.f32 %v2338, %v2357
        %v2375 = vmul.f32 %v2339, %v2357
        %v2376 = vmul.f32 %v2340, %v2357
        %v2377 = vmul.f32 %v2341, %v2357
        %v2378 = vmul.f32 %v2342, %v2357
        %v2379 = vmul.f32 %v2343, %v2357
        %v2380 = vmul.f32 %v2344, %v2357
        %v2381 = vmul.f32 %v2345, %v2357
        %v2382 = vmul.f32 %v2346, %v2357
        %v2383 = vmul.f32 %v2347, %v2357
        %v2384 = vmul.f32 %v2348, %v2357
        %v2385 = vmul.f32 %v2349, %v2357
        %v2386 = vmul.f32 %v2350, %v2357
        %v2387 = vmul.f32 %v2351, %v2357
        %v2388 = vmul.f32 %v2352, %v2357
        %v2389 = vmul.f32 %v2353, %v2357
        %v2390 = vld [vmem:[#allocation2 + $0x1] sm:$0xff]
        %v2391 = vld [vmem:[#allocation2 + $0x9] sm:$0xff]
        %v2392 = vld [vmem:[#allocation2 + $0x19] sm:$0xff]
        %v2393 = vld [vmem:[#allocation2 + $0x21] sm:$0xff]
        %v2394 = vld [vmem:[#allocation2 + $0x31] sm:$0xff]
        %v2395 = vld [vmem:[#allocation2 + $0x39] sm:$0xff]
        %v2396 = vld [vmem:[#allocation2 + $0x49] sm:$0xff]
        %v2397 = vld [vmem:[#allocation2 + $0x51] sm:$0xff]
        %v2398 = vld [vmem:[#allocation2 + $0x61] sm:$0xff]
        %v2399 = vld [vmem:[#allocation2 + $0x69] sm:$0xff]
        %v2400 = vld [vmem:[#allocation2 + $0x79] sm:$0xff]
        %v2401 = vld [vmem:[#allocation2 + $0x81] sm:$0xff]
        %v2402 = vld [vmem:[#allocation2 + $0x91] sm:$0xff]
        %v2403 = vld [vmem:[#allocation2 + $0x99] sm:$0xff]
        %v2404 = vld [vmem:[#allocation2 + $0xa9] sm:$0xff]
        %v2405 = vld [vmem:[#allocation2 + $0xb1] sm:$0xff]
        %v2406 = vld [vmem:[#allocation2 + $0xc1] sm:$0xff]
        %v2407 = vld [vmem:[#allocation2 + $0xc9] sm:$0xff]
        %v2408 = vld [vmem:[#allocation2 + $0xd9] sm:$0xff]
        %v2409 = vld [vmem:[#allocation2 + $0xe1] sm:$0xff]
        %v2410 = vld [vmem:[#allocation2 + $0xf1] sm:$0xff]
        %v2411 = vld [vmem:[#allocation2 + $0xf9] sm:$0xff]
        %v2412 = vld [vmem:[#allocation2 + $0x109] sm:$0xff]
        %v2413 = vld [vmem:[#allocation2 + $0x111] sm:$0xff]
        %v2414 = vld [vmem:[#allocation2 + $0x121] sm:$0xff]
        %v2415 = vld [vmem:[#allocation2 + $0x129] sm:$0xff]
        %v2416 = vld [vmem:[#allocation2 + $0x139] sm:$0xff]
        %v2417 = vld [vmem:[#allocation2 + $0x141] sm:$0xff]
        %v2418 = vld [vmem:[#allocation2 + $0x151] sm:$0xff]
        %v2419 = vld [vmem:[#allocation2 + $0x159] sm:$0xff]
        %v2420 = vld [vmem:[#allocation2 + $0x169] sm:$0xff]
        %v2421 = vld [vmem:[#allocation2 + $0x171] sm:$0xff]
        %v2422 = vlaneseq
        %v2423 = vshrl.u32 %v2422, 7
        %v2424 = vsub.s32 1, %v2423
        %v2425 = vrot.slane %v2320, %v2424
        %v2426 = vmul.f32 %v2390, %v2425
        %v2427 = vmul.f32 %v2391, %v2425
        %v2428 = vmul.f32 %v2392, %v2425
        %v2429 = vmul.f32 %v2393, %v2425
        %v2430 = vmul.f32 %v2394, %v2425
        %v2431 = vmul.f32 %v2395, %v2425
        %v2432 = vmul.f32 %v2396, %v2425
        %v2433 = vmul.f32 %v2397, %v2425
        %v2434 = vmul.f32 %v2398, %v2425
        %v2435 = vmul.f32 %v2399, %v2425
        %v2436 = vmul.f32 %v2400, %v2425
        %v2437 = vmul.f32 %v2401, %v2425
        %v2438 = vmul.f32 %v2402, %v2425
        %v2439 = vmul.f32 %v2403, %v2425
        %v2440 = vmul.f32 %v2404, %v2425
        %v2441 = vmul.f32 %v2405, %v2425
        %v2442 = vmul.f32 %v2406, %v2425
        %v2443 = vmul.f32 %v2407, %v2425
        %v2444 = vmul.f32 %v2408, %v2425
        %v2445 = vmul.f32 %v2409, %v2425
        %v2446 = vmul.f32 %v2410, %v2425
        %v2447 = vmul.f32 %v2411, %v2425
        %v2448 = vmul.f32 %v2412, %v2425
        %v2449 = vmul.f32 %v2413, %v2425
        %v2450 = vmul.f32 %v2414, %v2425
        %v2451 = vmul.f32 %v2415, %v2425
        %v2452 = vmul.f32 %v2416, %v2425
        %v2453 = vmul.f32 %v2417, %v2425
        %v2454 = vmul.f32 %v2418, %v2425
        %v2455 = vmul.f32 %v2419, %v2425
        %v2456 = vmul.f32 %v2420, %v2425
        %v2457 = vmul.f32 %v2421, %v2425
        %v2458 = vadd.f32 %v2358, %v2426
        %v2459 = vadd.f32 %v2359, %v2427
        %v2460 = vadd.f32 %v2360, %v2428
        %v2461 = vadd.f32 %v2361, %v2429
        %v2462 = vadd.f32 %v2362, %v2430
        %v2463 = vadd.f32 %v2363, %v2431
        %v2464 = vadd.f32 %v2364, %v2432
        %v2465 = vadd.f32 %v2365, %v2433
        %v2466 = vadd.f32 %v2366, %v2434
        %v2467 = vadd.f32 %v2367, %v2435
        %v2468 = vadd.f32 %v2368, %v2436
        %v2469 = vadd.f32 %v2369, %v2437
        %v2470 = vadd.f32 %v2370, %v2438
        %v2471 = vadd.f32 %v2371, %v2439
        %v2472 = vadd.f32 %v2372, %v2440
        %v2473 = vadd.f32 %v2373, %v2441
        %v2474 = vadd.f32 %v2374, %v2442
        %v2475 = vadd.f32 %v2375, %v2443
        %v2476 = vadd.f32 %v2376, %v2444
        %v2477 = vadd.f32 %v2377, %v2445
        %v2478 = vadd.f32 %v2378, %v2446
        %v2479 = vadd.f32 %v2379, %v2447
        %v2480 = vadd.f32 %v2380, %v2448
        %v2481 = vadd.f32 %v2381, %v2449
        %v2482 = vadd.f32 %v2382, %v2450
        %v2483 = vadd.f32 %v2383, %v2451
        %v2484 = vadd.f32 %v2384, %v2452
        %v2485 = vadd.f32 %v2385, %v2453
        %v2486 = vadd.f32 %v2386, %v2454
        %v2487 = vadd.f32 %v2387, %v2455
        %v2488 = vadd.f32 %v2388, %v2456
        %v2489 = vadd.f32 %v2389, %v2457
        %v2490 = vld [vmem:[#allocation2 + $0x2] sm:$0xff]
        %v2491 = vld [vmem:[#allocation2 + $0xa] sm:$0xff]
        %v2492 = vld [vmem:[#allocation2 + $0x1a] sm:$0xff]
        %v2493 = vld [vmem:[#allocation2 + $0x22] sm:$0xff]
        %v2494 = vld [vmem:[#allocation2 + $0x32] sm:$0xff]
        %v2495 = vld [vmem:[#allocation2 + $0x3a] sm:$0xff]
        %v2496 = vld [vmem:[#allocation2 + $0x4a] sm:$0xff]
        %v2497 = vld [vmem:[#allocation2 + $0x52] sm:$0xff]
        %v2498 = vld [vmem:[#allocation2 + $0x62] sm:$0xff]
        %v2499 = vld [vmem:[#allocation2 + $0x6a] sm:$0xff]
        %v2500 = vld [vmem:[#allocation2 + $0x7a] sm:$0xff]
        %v2501 = vld [vmem:[#allocation2 + $0x82] sm:$0xff]
        %v2502 = vld [vmem:[#allocation2 + $0x92] sm:$0xff]
        %v2503 = vld [vmem:[#allocation2 + $0x9a] sm:$0xff]
        %v2504 = vld [vmem:[#allocation2 + $0xaa] sm:$0xff]
        %v2505 = vld [vmem:[#allocation2 + $0xb2] sm:$0xff]
        %v2506 = vld [vmem:[#allocation2 + $0xc2] sm:$0xff]
        %v2507 = vld [vmem:[#allocation2 + $0xca] sm:$0xff]
        %v2508 = vld [vmem:[#allocation2 + $0xda] sm:$0xff]
        %v2509 = vld [vmem:[#allocation2 + $0xe2] sm:$0xff]
        %v2510 = vld [vmem:[#allocation2 + $0xf2] sm:$0xff]
        %v2511 = vld [vmem:[#allocation2 + $0xfa] sm:$0xff]
        %v2512 = vld [vmem:[#allocation2 + $0x10a] sm:$0xff]
        %v2513 = vld [vmem:[#allocation2 + $0x112] sm:$0xff]
        %v2514 = vld [vmem:[#allocation2 + $0x122] sm:$0xff]
        %v2515 = vld [vmem:[#allocation2 + $0x12a] sm:$0xff]
        %v2516 = vld [vmem:[#allocation2 + $0x13a] sm:$0xff]
        %v2517 = vld [vmem:[#allocation2 + $0x142] sm:$0xff]
        %v2518 = vld [vmem:[#allocation2 + $0x152] sm:$0xff]
        %v2519 = vld [vmem:[#allocation2 + $0x15a] sm:$0xff]
        %v2520 = vld [vmem:[#allocation2 + $0x16a] sm:$0xff]
        %v2521 = vld [vmem:[#allocation2 + $0x172] sm:$0xff]
        %v2522 = vlaneseq
        %v2523 = vshrl.u32 %v2522, 7
        %v2524 = vsub.s32 2, %v2523
        %v2525 = vrot.slane %v2320, %v2524
        %v2526 = vmul.f32 %v2490, %v2525
        %v2527 = vmul.f32 %v2491, %v2525
        %v2528 = vmul.f32 %v2492, %v2525
        %v2529 = vmul.f32 %v2493, %v2525
        %v2530 = vmul.f32 %v2494, %v2525
        %v2531 = vmul.f32 %v2495, %v2525
        %v2532 = vmul.f32 %v2496, %v2525
        %v2533 = vmul.f32 %v2497, %v2525
        %v2534 = vmul.f32 %v2498, %v2525
        %v2535 = vmul.f32 %v2499, %v2525
        %v2536 = vmul.f32 %v2500, %v2525
        %v2537 = vmul.f32 %v2501, %v2525
        %v2538 = vmul.f32 %v2502, %v2525
        %v2539 = vmul.f32 %v2503, %v2525
        %v2540 = vmul.f32 %v2504, %v2525
        %v2541 = vmul.f32 %v2505, %v2525
        %v2542 = vmul.f32 %v2506, %v2525
        %v2543 = vmul.f32 %v2507, %v2525
        %v2544 = vmul.f32 %v2508, %v2525
        %v2545 = vmul.f32 %v2509, %v2525
        %v2546 = vmul.f32 %v2510, %v2525
        %v2547 = vmul.f32 %v2511, %v2525
        %v2548 = vmul.f32 %v2512, %v2525
        %v2549 = vmul.f32 %v2513, %v2525
        %v2550 = vmul.f32 %v2514, %v2525
        %v2551 = vmul.f32 %v2515, %v2525
        %v2552 = vmul.f32 %v2516, %v2525
        %v2553 = vmul.f32 %v2517, %v2525
        %v2554 = vmul.f32 %v2518, %v2525
        %v2555 = vmul.f32 %v2519, %v2525
        %v2556 = vmul.f32 %v2520, %v2525
        %v2557 = vmul.f32 %v2521, %v2525
        %v2558 = vadd.f32 %v2458, %v2526
        %v2559 = vadd.f32 %v2459, %v2527
        %v2560 = vadd.f32 %v2460, %v2528
        %v2561 = vadd.f32 %v2461, %v2529
        %v2562 = vadd.f32 %v2462, %v2530
        %v2563 = vadd.f32 %v2463, %v2531
        %v2564 = vadd.f32 %v2464, %v2532
        %v2565 = vadd.f32 %v2465, %v2533
        %v2566 = vadd.f32 %v2466, %v2534
        %v2567 = vadd.f32 %v2467, %v2535
        %v2568 = vadd.f32 %v2468, %v2536
        %v2569 = vadd.f32 %v2469, %v2537
        %v2570 = vadd.f32 %v2470, %v2538
        %v2571 = vadd.f32 %v2471, %v2539
        %v2572 = vadd.f32 %v2472, %v2540
        %v2573 = vadd.f32 %v2473, %v2541
        %v2574 = vadd.f32 %v2474, %v2542
        %v2575 = vadd.f32 %v2475, %v2543
        %v2576 = vadd.f32 %v2476, %v2544
        %v2577 = vadd.f32 %v2477, %v2545
        %v2578 = vadd.f32 %v2478, %v2546
        %v2579 = vadd.f32 %v2479, %v2547
        %v2580 = vadd.f32 %v2480, %v2548
        %v2581 = vadd.f32 %v2481, %v2549
        %v2582 = vadd.f32 %v2482, %v2550
        %v2583 = vadd.f32 %v2483, %v2551
        %v2584 = vadd.f32 %v2484, %v2552
        %v2585 = vadd.f32 %v2485, %v2553
        %v2586 = vadd.f32 %v2486, %v2554
        %v2587 = vadd.f32 %v2487, %v2555
        %v2588 = vadd.f32 %v2488, %v2556
        %v2589 = vadd.f32 %v2489, %v2557
        %v2590 = vld [vmem:[%s2287] sm:$0xff]
        %v2591 = vld [vmem:[%s2287 + $0x8] sm:$0xff]
        %v2592 = vld [vmem:[%s2287 + $0x18] sm:$0xff]
        %v2593 = vld [vmem:[%s2287 + $0x20] sm:$0xff]
        %v2594 = vld [vmem:[%s2287 + $0x30] sm:$0xff]
        %v2595 = vld [vmem:[%s2287 + $0x38] sm:$0xff]
        %v2596 = vld [vmem:[%s2287 + $0x48] sm:$0xff]
        %v2597 = vld [vmem:[%s2287 + $0x50] sm:$0xff]
        %v2598 = vld [vmem:[%s2287 + $0x60] sm:$0xff]
        %v2599 = vld [vmem:[%s2287 + $0x68] sm:$0xff]
        %v2600 = vld [vmem:[%s2287 + $0x78] sm:$0xff]
        %v2601 = vld [vmem:[%s2287 + $0x80] sm:$0xff]
        %v2602 = vld [vmem:[%s2287 + $0x90] sm:$0xff]
        %v2603 = vld [vmem:[%s2287 + $0x98] sm:$0xff]
        %v2604 = vld [vmem:[%s2287 + $0xa8] sm:$0xff]
        %v2605 = vld [vmem:[%s2287 + $0xb0] sm:$0xff]
        %v2606 = vld [vmem:[%s2287 + $0xc0] sm:$0xff]
        %v2607 = vld [vmem:[%s2287 + $0xc8] sm:$0xff]
        %v2608 = vld [vmem:[%s2287 + $0xd8] sm:$0xff]
        %v2609 = vld [vmem:[%s2287 + $0xe0] sm:$0xff]
        %v2610 = vld [vmem:[%s2287 + $0xf0] sm:$0xff]
        %v2611 = vld [vmem:[%s2287 + $0xf8] sm:$0xff]
        %v2612 = vld [vmem:[%s2287 + $0x108] sm:$0xff]
        %v2613 = vld [vmem:[%s2287 + $0x110] sm:$0xff]
        %v2614 = vld [vmem:[%s2287 + $0x120] sm:$0xff]
        %v2615 = vld [vmem:[%s2287 + $0x128] sm:$0xff]
        %v2616 = vld [vmem:[%s2287 + $0x138] sm:$0xff]
        %v2617 = vld [vmem:[%s2287 + $0x140] sm:$0xff]
        %v2618 = vld [vmem:[%s2287 + $0x150] sm:$0xff]
        %v2619 = vld [vmem:[%s2287 + $0x158] sm:$0xff]
        %v2620 = vld [vmem:[%s2287 + $0x168] sm:$0xff]
        %v2621 = vld [vmem:[%s2287 + $0x170] sm:$0xff]
        %v2622 = vlaneseq
        %v2623 = vshrl.u32 %v2622, 7
        %v2624 = vsub.s32 3, %v2623
        %v2625 = vrot.slane %v2320, %v2624
        %v2626 = vmul.f32 %v2590, %v2625
        %v2627 = vmul.f32 %v2591, %v2625
        %v2628 = vmul.f32 %v2592, %v2625
        %v2629 = vmul.f32 %v2593, %v2625
        %v2630 = vmul.f32 %v2594, %v2625
        %v2631 = vmul.f32 %v2595, %v2625
        %v2632 = vmul.f32 %v2596, %v2625
        %v2633 = vmul.f32 %v2597, %v2625
        %v2634 = vmul.f32 %v2598, %v2625
        %v2635 = vmul.f32 %v2599, %v2625
        %v2636 = vmul.f32 %v2600, %v2625
        %v2637 = vmul.f32 %v2601, %v2625
        %v2638 = vmul.f32 %v2602, %v2625
        %v2639 = vmul.f32 %v2603, %v2625
        %v2640 = vmul.f32 %v2604, %v2625
        %v2641 = vmul.f32 %v2605, %v2625
        %v2642 = vmul.f32 %v2606, %v2625
        %v2643 = vmul.f32 %v2607, %v2625
        %v2644 = vmul.f32 %v2608, %v2625
        %v2645 = vmul.f32 %v2609, %v2625
        %v2646 = vmul.f32 %v2610, %v2625
        %v2647 = vmul.f32 %v2611, %v2625
        %v2648 = vmul.f32 %v2612, %v2625
        %v2649 = vmul.f32 %v2613, %v2625
        %v2650 = vmul.f32 %v2614, %v2625
        %v2651 = vmul.f32 %v2615, %v2625
        %v2652 = vmul.f32 %v2616, %v2625
        %v2653 = vmul.f32 %v2617, %v2625
        %v2654 = vmul.f32 %v2618, %v2625
        %v2655 = vmul.f32 %v2619, %v2625
        %v2656 = vmul.f32 %v2620, %v2625
        %v2657 = vmul.f32 %v2621, %v2625
        %v2658 = vadd.f32 %v2558, %v2626
        %v2659 = vadd.f32 %v2559, %v2627
        %v2660 = vadd.f32 %v2560, %v2628
        %v2661 = vadd.f32 %v2561, %v2629
        %v2662 = vadd.f32 %v2562, %v2630
        %v2663 = vadd.f32 %v2563, %v2631
        %v2664 = vadd.f32 %v2564, %v2632
        %v2665 = vadd.f32 %v2565, %v2633
        %v2666 = vadd.f32 %v2566, %v2634
        %v2667 = vadd.f32 %v2567, %v2635
        %v2668 = vadd.f32 %v2568, %v2636
        %v2669 = vadd.f32 %v2569, %v2637
        %v2670 = vadd.f32 %v2570, %v2638
        %v2671 = vadd.f32 %v2571, %v2639
        %v2672 = vadd.f32 %v2572, %v2640
        %v2673 = vadd.f32 %v2573, %v2641
        %v2674 = vadd.f32 %v2574, %v2642
        %v2675 = vadd.f32 %v2575, %v2643
        %v2676 = vadd.f32 %v2576, %v2644
        %v2677 = vadd.f32 %v2577, %v2645
        %v2678 = vadd.f32 %v2578, %v2646
        %v2679 = vadd.f32 %v2579, %v2647
        %v2680 = vadd.f32 %v2580, %v2648
        %v2681 = vadd.f32 %v2581, %v2649
        %v2682 = vadd.f32 %v2582, %v2650
        %v2683 = vadd.f32 %v2583, %v2651
        %v2684 = vadd.f32 %v2584, %v2652
        %v2685 = vadd.f32 %v2585, %v2653
        %v2686 = vadd.f32 %v2586, %v2654
        %v2687 = vadd.f32 %v2587, %v2655
        %v2688 = vadd.f32 %v2588, %v2656
        %v2689 = vadd.f32 %v2589, %v2657
        %v2690 = vld [vmem:[%s2287 + $0x1] sm:$0xff]
        %v2691 = vld [vmem:[%s2287 + $0x9] sm:$0xff]
        %v2692 = vld [vmem:[%s2287 + $0x19] sm:$0xff]
        %v2693 = vld [vmem:[%s2287 + $0x21] sm:$0xff]
        %v2694 = vld [vmem:[%s2287 + $0x31] sm:$0xff]
        %v2695 = vld [vmem:[%s2287 + $0x39] sm:$0xff]
        %v2696 = vld [vmem:[%s2287 + $0x49] sm:$0xff]
        %v2697 = vld [vmem:[%s2287 + $0x51] sm:$0xff]
        %v2698 = vld [vmem:[%s2287 + $0x61] sm:$0xff]
        %v2699 = vld [vmem:[%s2287 + $0x69] sm:$0xff]
        %v2700 = vld [vmem:[%s2287 + $0x79] sm:$0xff]
        %v2701 = vld [vmem:[%s2287 + $0x81] sm:$0xff]
        %v2702 = vld [vmem:[%s2287 + $0x91] sm:$0xff]
        %v2703 = vld [vmem:[%s2287 + $0x99] sm:$0xff]
        %v2704 = vld [vmem:[%s2287 + $0xa9] sm:$0xff]
        %v2705 = vld [vmem:[%s2287 + $0xb1] sm:$0xff]
        %v2706 = vld [vmem:[%s2287 + $0xc1] sm:$0xff]
        %v2707 = vld [vmem:[%s2287 + $0xc9] sm:$0xff]
        %v2708 = vld [vmem:[%s2287 + $0xd9] sm:$0xff]
        %v2709 = vld [vmem:[%s2287 + $0xe1] sm:$0xff]
        %v2710 = vld [vmem:[%s2287 + $0xf1] sm:$0xff]
        %v2711 = vld [vmem:[%s2287 + $0xf9] sm:$0xff]
        %v2712 = vld [vmem:[%s2287 + $0x109] sm:$0xff]
        %v2713 = vld [vmem:[%s2287 + $0x111] sm:$0xff]
        %v2714 = vld [vmem:[%s2287 + $0x121] sm:$0xff]
        %v2715 = vld [vmem:[%s2287 + $0x129] sm:$0xff]
        %v2716 = vld [vmem:[%s2287 + $0x139] sm:$0xff]
        %v2717 = vld [vmem:[%s2287 + $0x141] sm:$0xff]
        %v2718 = vld [vmem:[%s2287 + $0x151] sm:$0xff]
        %v2719 = vld [vmem:[%s2287 + $0x159] sm:$0xff]
        %v2720 = vld [vmem:[%s2287 + $0x169] sm:$0xff]
        %v2721 = vld [vmem:[%s2287 + $0x171] sm:$0xff]
        %v2722 = vlaneseq
        %v2723 = vshrl.u32 %v2722, 7
        %v2724 = vsub.s32 4, %v2723
        %v2725 = vrot.slane %v2320, %v2724
        %v2726 = vmul.f32 %v2690, %v2725
        %v2727 = vmul.f32 %v2691, %v2725
        %v2728 = vmul.f32 %v2692, %v2725
        %v2729 = vmul.f32 %v2693, %v2725
        %v2730 = vmul.f32 %v2694, %v2725
        %v2731 = vmul.f32 %v2695, %v2725
        %v2732 = vmul.f32 %v2696, %v2725
        %v2733 = vmul.f32 %v2697, %v2725
        %v2734 = vmul.f32 %v2698, %v2725
        %v2735 = vmul.f32 %v2699, %v2725
        %v2736 = vmul.f32 %v2700, %v2725
        %v2737 = vmul.f32 %v2701, %v2725
        %v2738 = vmul.f32 %v2702, %v2725
        %v2739 = vmul.f32 %v2703, %v2725
        %v2740 = vmul.f32 %v2704, %v2725
        %v2741 = vmul.f32 %v2705, %v2725
        %v2742 = vmul.f32 %v2706, %v2725
        %v2743 = vmul.f32 %v2707, %v2725
        %v2744 = vmul.f32 %v2708, %v2725
        %v2745 = vmul.f32 %v2709, %v2725
        %v2746 = vmul.f32 %v2710, %v2725
        %v2747 = vmul.f32 %v2711, %v2725
        %v2748 = vmul.f32 %v2712, %v2725
        %v2749 = vmul.f32 %v2713, %v2725
        %v2750 = vmul.f32 %v2714, %v2725
        %v2751 = vmul.f32 %v2715, %v2725
        %v2752 = vmul.f32 %v2716, %v2725
        %v2753 = vmul.f32 %v2717, %v2725
        %v2754 = vmul.f32 %v2718, %v2725
        %v2755 = vmul.f32 %v2719, %v2725
        %v2756 = vmul.f32 %v2720, %v2725
        %v2757 = vmul.f32 %v2721, %v2725
        %v2758 = vadd.f32 %v2658, %v2726
        %v2759 = vadd.f32 %v2659, %v2727
        %v2760 = vadd.f32 %v2660, %v2728
        %v2761 = vadd.f32 %v2661, %v2729
        %v2762 = vadd.f32 %v2662, %v2730
        %v2763 = vadd.f32 %v2663, %v2731
        %v2764 = vadd.f32 %v2664, %v2732
        %v2765 = vadd.f32 %v2665, %v2733
        %v2766 = vadd.f32 %v2666, %v2734
        %v2767 = vadd.f32 %v2667, %v2735
        %v2768 = vadd.f32 %v2668, %v2736
        %v2769 = vadd.f32 %v2669, %v2737
        %v2770 = vadd.f32 %v2670, %v2738
        %v2771 = vadd.f32 %v2671, %v2739
        %v2772 = vadd.f32 %v2672, %v2740
        %v2773 = vadd.f32 %v2673, %v2741
        %v2774 = vadd.f32 %v2674, %v2742
        %v2775 = vadd.f32 %v2675, %v2743
        %v2776 = vadd.f32 %v2676, %v2744
        %v2777 = vadd.f32 %v2677, %v2745
        %v2778 = vadd.f32 %v2678, %v2746
        %v2779 = vadd.f32 %v2679, %v2747
        %v2780 = vadd.f32 %v2680, %v2748
        %v2781 = vadd.f32 %v2681, %v2749
        %v2782 = vadd.f32 %v2682, %v2750
        %v2783 = vadd.f32 %v2683, %v2751
        %v2784 = vadd.f32 %v2684, %v2752
        %v2785 = vadd.f32 %v2685, %v2753
        %v2786 = vadd.f32 %v2686, %v2754
        %v2787 = vadd.f32 %v2687, %v2755
        %v2788 = vadd.f32 %v2688, %v2756
        %v2789 = vadd.f32 %v2689, %v2757
        %v2790 = vld [vmem:[%s2287 + $0x2] sm:$0xff]
        %v2791 = vld [vmem:[%s2287 + $0xa] sm:$0xff]
        %v2792 = vld [vmem:[%s2287 + $0x1a] sm:$0xff]
        %v2793 = vld [vmem:[%s2287 + $0x22] sm:$0xff]
        %v2794 = vld [vmem:[%s2287 + $0x32] sm:$0xff]
        %v2795 = vld [vmem:[%s2287 + $0x3a] sm:$0xff]
        %v2796 = vld [vmem:[%s2287 + $0x4a] sm:$0xff]
        %v2797 = vld [vmem:[%s2287 + $0x52] sm:$0xff]
        %v2798 = vld [vmem:[%s2287 + $0x62] sm:$0xff]
        %v2799 = vld [vmem:[%s2287 + $0x6a] sm:$0xff]
        %v2800 = vld [vmem:[%s2287 + $0x7a] sm:$0xff]
        %v2801 = vld [vmem:[%s2287 + $0x82] sm:$0xff]
        %v2802 = vld [vmem:[%s2287 + $0x92] sm:$0xff]
        %v2803 = vld [vmem:[%s2287 + $0x9a] sm:$0xff]
        %v2804 = vld [vmem:[%s2287 + $0xaa] sm:$0xff]
        %v2805 = vld [vmem:[%s2287 + $0xb2] sm:$0xff]
        %v2806 = vld [vmem:[%s2287 + $0xc2] sm:$0xff]
        %v2807 = vld [vmem:[%s2287 + $0xca] sm:$0xff]
        %v2808 = vld [vmem:[%s2287 + $0xda] sm:$0xff]
        %v2809 = vld [vmem:[%s2287 + $0xe2] sm:$0xff]
        %v2810 = vld [vmem:[%s2287 + $0xf2] sm:$0xff]
        %v2811 = vld [vmem:[%s2287 + $0xfa] sm:$0xff]
        %v2812 = vld [vmem:[%s2287 + $0x10a] sm:$0xff]
        %v2813 = vld [vmem:[%s2287 + $0x112] sm:$0xff]
        %v2814 = vld [vmem:[%s2287 + $0x122] sm:$0xff]
        %v2815 = vld [vmem:[%s2287 + $0x12a] sm:$0xff]
        %v2816 = vld [vmem:[%s2287 + $0x13a] sm:$0xff]
        %v2817 = vld [vmem:[%s2287 + $0x142] sm:$0xff]
        %v2818 = vld [vmem:[%s2287 + $0x152] sm:$0xff]
        %v2819 = vld [vmem:[%s2287 + $0x15a] sm:$0xff]
        %v2820 = vld [vmem:[%s2287 + $0x16a] sm:$0xff]
        %v2821 = vld [vmem:[%s2287 + $0x172] sm:$0xff]
        %v2822 = vlaneseq
        %v2823 = vshrl.u32 %v2822, 7
        %v2824 = vsub.s32 5, %v2823
        %v2825 = vrot.slane %v2320, %v2824
        %v2826 = vmul.f32 %v2790, %v2825
        %v2827 = vmul.f32 %v2791, %v2825
        %v2828 = vmul.f32 %v2792, %v2825
        %v2829 = vmul.f32 %v2793, %v2825
        %v2830 = vmul.f32 %v2794, %v2825
        %v2831 = vmul.f32 %v2795, %v2825
        %v2832 = vmul.f32 %v2796, %v2825
        %v2833 = vmul.f32 %v2797, %v2825
        %v2834 = vmul.f32 %v2798, %v2825
        %v2835 = vmul.f32 %v2799, %v2825
        %v2836 = vmul.f32 %v2800, %v2825
        %v2837 = vmul.f32 %v2801, %v2825
        %v2838 = vmul.f32 %v2802, %v2825
        %v2839 = vmul.f32 %v2803, %v2825
        %v2840 = vmul.f32 %v2804, %v2825
        %v2841 = vmul.f32 %v2805, %v2825
        %v2842 = vmul.f32 %v2806, %v2825
        %v2843 = vmul.f32 %v2807, %v2825
        %v2844 = vmul.f32 %v2808, %v2825
        %v2845 = vmul.f32 %v2809, %v2825
        %v2846 = vmul.f32 %v2810, %v2825
        %v2847 = vmul.f32 %v2811, %v2825
        %v2848 = vmul.f32 %v2812, %v2825
        %v2849 = vmul.f32 %v2813, %v2825
        %v2850 = vmul.f32 %v2814, %v2825
        %v2851 = vmul.f32 %v2815, %v2825
        %v2852 = vmul.f32 %v2816, %v2825
        %v2853 = vmul.f32 %v2817, %v2825
        %v2854 = vmul.f32 %v2818, %v2825
        %v2855 = vmul.f32 %v2819, %v2825
        %v2856 = vmul.f32 %v2820, %v2825
        %v2857 = vmul.f32 %v2821, %v2825
        %v2858 = vadd.f32 %v2758, %v2826
        %v2859 = vadd.f32 %v2759, %v2827
        %v2860 = vadd.f32 %v2760, %v2828
        %v2861 = vadd.f32 %v2761, %v2829
        %v2862 = vadd.f32 %v2762, %v2830
        %v2863 = vadd.f32 %v2763, %v2831
        %v2864 = vadd.f32 %v2764, %v2832
        %v2865 = vadd.f32 %v2765, %v2833
        %v2866 = vadd.f32 %v2766, %v2834
        %v2867 = vadd.f32 %v2767, %v2835
        %v2868 = vadd.f32 %v2768, %v2836
        %v2869 = vadd.f32 %v2769, %v2837
        %v2870 = vadd.f32 %v2770, %v2838
        %v2871 = vadd.f32 %v2771, %v2839
        %v2872 = vadd.f32 %v2772, %v2840
        %v2873 = vadd.f32 %v2773, %v2841
        %v2874 = vadd.f32 %v2774, %v2842
        %v2875 = vadd.f32 %v2775, %v2843
        %v2876 = vadd.f32 %v2776, %v2844
        %v2877 = vadd.f32 %v2777, %v2845
        %v2878 = vadd.f32 %v2778, %v2846
        %v2879 = vadd.f32 %v2779, %v2847
        %v2880 = vadd.f32 %v2780, %v2848
        %v2881 = vadd.f32 %v2781, %v2849
        %v2882 = vadd.f32 %v2782, %v2850
        %v2883 = vadd.f32 %v2783, %v2851
        %v2884 = vadd.f32 %v2784, %v2852
        %v2885 = vadd.f32 %v2785, %v2853
        %v2886 = vadd.f32 %v2786, %v2854
        %v2887 = vadd.f32 %v2787, %v2855
        %v2888 = vadd.f32 %v2788, %v2856
        %v2889 = vadd.f32 %v2789, %v2857
        %s2890 = scalar_lea.vmem [#allocation2], 48
        %v2891 = vld [vmem:[%s2890] sm:$0xff]
        %v2892 = vld [vmem:[%s2890 + $0x8] sm:$0xff]
        %v2893 = vld [vmem:[%s2890 + $0x18] sm:$0xff]
        %v2894 = vld [vmem:[%s2890 + $0x20] sm:$0xff]
        %v2895 = vld [vmem:[%s2890 + $0x30] sm:$0xff]
        %v2896 = vld [vmem:[%s2890 + $0x38] sm:$0xff]
        %v2897 = vld [vmem:[%s2890 + $0x48] sm:$0xff]
        %v2898 = vld [vmem:[%s2890 + $0x50] sm:$0xff]
        %v2899 = vld [vmem:[%s2890 + $0x60] sm:$0xff]
        %v2900 = vld [vmem:[%s2890 + $0x68] sm:$0xff]
        %v2901 = vld [vmem:[%s2890 + $0x78] sm:$0xff]
        %v2902 = vld [vmem:[%s2890 + $0x80] sm:$0xff]
        %v2903 = vld [vmem:[%s2890 + $0x90] sm:$0xff]
        %v2904 = vld [vmem:[%s2890 + $0x98] sm:$0xff]
        %v2905 = vld [vmem:[%s2890 + $0xa8] sm:$0xff]
        %v2906 = vld [vmem:[%s2890 + $0xb0] sm:$0xff]
        %v2907 = vld [vmem:[%s2890 + $0xc0] sm:$0xff]
        %v2908 = vld [vmem:[%s2890 + $0xc8] sm:$0xff]
        %v2909 = vld [vmem:[%s2890 + $0xd8] sm:$0xff]
        %v2910 = vld [vmem:[%s2890 + $0xe0] sm:$0xff]
        %v2911 = vld [vmem:[%s2890 + $0xf0] sm:$0xff]
        %v2912 = vld [vmem:[%s2890 + $0xf8] sm:$0xff]
        %v2913 = vld [vmem:[%s2890 + $0x108] sm:$0xff]
        %v2914 = vld [vmem:[%s2890 + $0x110] sm:$0xff]
        %v2915 = vld [vmem:[%s2890 + $0x120] sm:$0xff]
        %v2916 = vld [vmem:[%s2890 + $0x128] sm:$0xff]
        %v2917 = vld [vmem:[%s2890 + $0x138] sm:$0xff]
        %v2918 = vld [vmem:[%s2890 + $0x140] sm:$0xff]
        %v2919 = vld [vmem:[%s2890 + $0x150] sm:$0xff]
        %v2920 = vld [vmem:[%s2890 + $0x158] sm:$0xff]
        %v2921 = vld [vmem:[%s2890 + $0x168] sm:$0xff]
        %v2922 = vld [vmem:[%s2890 + $0x170] sm:$0xff]
        %v2923 = vlaneseq
        %v2924 = vshrl.u32 %v2923, 7
        %v2925 = vsub.s32 6, %v2924
        %v2926 = vrot.slane %v2320, %v2925
        %v2927 = vmul.f32 %v2891, %v2926
        %v2928 = vmul.f32 %v2892, %v2926
        %v2929 = vmul.f32 %v2893, %v2926
        %v2930 = vmul.f32 %v2894, %v2926
        %v2931 = vmul.f32 %v2895, %v2926
        %v2932 = vmul.f32 %v2896, %v2926
        %v2933 = vmul.f32 %v2897, %v2926
        %v2934 = vmul.f32 %v2898, %v2926
        %v2935 = vmul.f32 %v2899, %v2926
        %v2936 = vmul.f32 %v2900, %v2926
        %v2937 = vmul.f32 %v2901, %v2926
        %v2938 = vmul.f32 %v2902, %v2926
        %v2939 = vmul.f32 %v2903, %v2926
        %v2940 = vmul.f32 %v2904, %v2926
        %v2941 = vmul.f32 %v2905, %v2926
        %v2942 = vmul.f32 %v2906, %v2926
        %v2943 = vmul.f32 %v2907, %v2926
        %v2944 = vmul.f32 %v2908, %v2926
        %v2945 = vmul.f32 %v2909, %v2926
        %v2946 = vmul.f32 %v2910, %v2926
        %v2947 = vmul.f32 %v2911, %v2926
        %v2948 = vmul.f32 %v2912, %v2926
        %v2949 = vmul.f32 %v2913, %v2926
        %v2950 = vmul.f32 %v2914, %v2926
        %v2951 = vmul.f32 %v2915, %v2926
        %v2952 = vmul.f32 %v2916, %v2926
        %v2953 = vmul.f32 %v2917, %v2926
        %v2954 = vmul.f32 %v2918, %v2926
        %v2955 = vmul.f32 %v2919, %v2926
        %v2956 = vmul.f32 %v2920, %v2926
        %v2957 = vmul.f32 %v2921, %v2926
        %v2958 = vmul.f32 %v2922, %v2926
        %v2959 = vadd.f32 %v2858, %v2927
        %v2960 = vadd.f32 %v2859, %v2928
        %v2961 = vadd.f32 %v2860, %v2929
        %v2962 = vadd.f32 %v2861, %v2930
        %v2963 = vadd.f32 %v2862, %v2931
        %v2964 = vadd.f32 %v2863, %v2932
        %v2965 = vadd.f32 %v2864, %v2933
        %v2966 = vadd.f32 %v2865, %v2934
        %v2967 = vadd.f32 %v2866, %v2935
        %v2968 = vadd.f32 %v2867, %v2936
        %v2969 = vadd.f32 %v2868, %v2937
        %v2970 = vadd.f32 %v2869, %v2938
        %v2971 = vadd.f32 %v2870, %v2939
        %v2972 = vadd.f32 %v2871, %v2940
        %v2973 = vadd.f32 %v2872, %v2941
        %v2974 = vadd.f32 %v2873, %v2942
        %v2975 = vadd.f32 %v2874, %v2943
        %v2976 = vadd.f32 %v2875, %v2944
        %v2977 = vadd.f32 %v2876, %v2945
        %v2978 = vadd.f32 %v2877, %v2946
        %v2979 = vadd.f32 %v2878, %v2947
        %v2980 = vadd.f32 %v2879, %v2948
        %v2981 = vadd.f32 %v2880, %v2949
        %v2982 = vadd.f32 %v2881, %v2950
        %v2983 = vadd.f32 %v2882, %v2951
        %v2984 = vadd.f32 %v2883, %v2952
        %v2985 = vadd.f32 %v2884, %v2953
        %v2986 = vadd.f32 %v2885, %v2954
        %v2987 = vadd.f32 %v2886, %v2955
        %v2988 = vadd.f32 %v2887, %v2956
        %v2989 = vadd.f32 %v2888, %v2957
        %v2990 = vadd.f32 %v2889, %v2958
        %v2991 = vld [vmem:[%s2890 + $0x1] sm:$0xff]
        %v2992 = vld [vmem:[%s2890 + $0x9] sm:$0xff]
        %v2993 = vld [vmem:[%s2890 + $0x19] sm:$0xff]
        %v2994 = vld [vmem:[%s2890 + $0x21] sm:$0xff]
        %v2995 = vld [vmem:[%s2890 + $0x31] sm:$0xff]
        %v2996 = vld [vmem:[%s2890 + $0x39] sm:$0xff]
        %v2997 = vld [vmem:[%s2890 + $0x49] sm:$0xff]
        %v2998 = vld [vmem:[%s2890 + $0x51] sm:$0xff]
        %v2999 = vld [vmem:[%s2890 + $0x61] sm:$0xff]
        %v3000 = vld [vmem:[%s2890 + $0x69] sm:$0xff]
        %v3001 = vld [vmem:[%s2890 + $0x79] sm:$0xff]
        %v3002 = vld [vmem:[%s2890 + $0x81] sm:$0xff]
        %v3003 = vld [vmem:[%s2890 + $0x91] sm:$0xff]
        %v3004 = vld [vmem:[%s2890 + $0x99] sm:$0xff]
        %v3005 = vld [vmem:[%s2890 + $0xa9] sm:$0xff]
        %v3006 = vld [vmem:[%s2890 + $0xb1] sm:$0xff]
        %v3007 = vld [vmem:[%s2890 + $0xc1] sm:$0xff]
        %v3008 = vld [vmem:[%s2890 + $0xc9] sm:$0xff]
        %v3009 = vld [vmem:[%s2890 + $0xd9] sm:$0xff]
        %v3010 = vld [vmem:[%s2890 + $0xe1] sm:$0xff]
        %v3011 = vld [vmem:[%s2890 + $0xf1] sm:$0xff]
        %v3012 = vld [vmem:[%s2890 + $0xf9] sm:$0xff]
        %v3013 = vld [vmem:[%s2890 + $0x109] sm:$0xff]
        %v3014 = vld [vmem:[%s2890 + $0x111] sm:$0xff]
        %v3015 = vld [vmem:[%s2890 + $0x121] sm:$0xff]
        %v3016 = vld [vmem:[%s2890 + $0x129] sm:$0xff]
        %v3017 = vld [vmem:[%s2890 + $0x139] sm:$0xff]
        %v3018 = vld [vmem:[%s2890 + $0x141] sm:$0xff]
        %v3019 = vld [vmem:[%s2890 + $0x151] sm:$0xff]
        %v3020 = vld [vmem:[%s2890 + $0x159] sm:$0xff]
        %v3021 = vld [vmem:[%s2890 + $0x169] sm:$0xff]
        %v3022 = vld [vmem:[%s2890 + $0x171] sm:$0xff]
        %v3023 = vlaneseq
        %v3024 = vshrl.u32 %v3023, 7
        %v3025 = vsub.s32 7, %v3024
        %v3026 = vrot.slane %v2320, %v3025
        %v3027 = vmul.f32 %v2991, %v3026
        %v3028 = vmul.f32 %v2992, %v3026
        %v3029 = vmul.f32 %v2993, %v3026
        %v3030 = vmul.f32 %v2994, %v3026
        %v3031 = vmul.f32 %v2995, %v3026
        %v3032 = vmul.f32 %v2996, %v3026
        %v3033 = vmul.f32 %v2997, %v3026
        %v3034 = vmul.f32 %v2998, %v3026
        %v3035 = vmul.f32 %v2999, %v3026
        %v3036 = vmul.f32 %v3000, %v3026
        %v3037 = vmul.f32 %v3001, %v3026
        %v3038 = vmul.f32 %v3002, %v3026
        %v3039 = vmul.f32 %v3003, %v3026
        %v3040 = vmul.f32 %v3004, %v3026
        %v3041 = vmul.f32 %v3005, %v3026
        %v3042 = vmul.f32 %v3006, %v3026
        %v3043 = vmul.f32 %v3007, %v3026
        %v3044 = vmul.f32 %v3008, %v3026
        %v3045 = vmul.f32 %v3009, %v3026
        %v3046 = vmul.f32 %v3010, %v3026
        %v3047 = vmul.f32 %v3011, %v3026
        %v3048 = vmul.f32 %v3012, %v3026
        %v3049 = vmul.f32 %v3013, %v3026
        %v3050 = vmul.f32 %v3014, %v3026
        %v3051 = vmul.f32 %v3015, %v3026
        %v3052 = vmul.f32 %v3016, %v3026
        %v3053 = vmul.f32 %v3017, %v3026
        %v3054 = vmul.f32 %v3018, %v3026
        %v3055 = vmul.f32 %v3019, %v3026
        %v3056 = vmul.f32 %v3020, %v3026
        %v3057 = vmul.f32 %v3021, %v3026
        %v3058 = vmul.f32 %v3022, %v3026
        %v3059 = vadd.f32 %v2959, %v3027
        %v3060 = vadd.f32 %v2960, %v3028
        %v3061 = vadd.f32 %v2961, %v3029
        %v3062 = vadd.f32 %v2962, %v3030
        %v3063 = vadd.f32 %v2963, %v3031
        %v3064 = vadd.f32 %v2964, %v3032
        %v3065 = vadd.f32 %v2965, %v3033
        %v3066 = vadd.f32 %v2966, %v3034
        %v3067 = vadd.f32 %v2967, %v3035
        %v3068 = vadd.f32 %v2968, %v3036
        %v3069 = vadd.f32 %v2969, %v3037
        %v3070 = vadd.f32 %v2970, %v3038
        %v3071 = vadd.f32 %v2971, %v3039
        %v3072 = vadd.f32 %v2972, %v3040
        %v3073 = vadd.f32 %v2973, %v3041
        %v3074 = vadd.f32 %v2974, %v3042
        %v3075 = vadd.f32 %v2975, %v3043
        %v3076 = vadd.f32 %v2976, %v3044
        %v3077 = vadd.f32 %v2977, %v3045
        %v3078 = vadd.f32 %v2978, %v3046
        %v3079 = vadd.f32 %v2979, %v3047
        %v3080 = vadd.f32 %v2980, %v3048
        %v3081 = vadd.f32 %v2981, %v3049
        %v3082 = vadd.f32 %v2982, %v3050
        %v3083 = vadd.f32 %v2983, %v3051
        %v3084 = vadd.f32 %v2984, %v3052
        %v3085 = vadd.f32 %v2985, %v3053
        %v3086 = vadd.f32 %v2986, %v3054
        %v3087 = vadd.f32 %v2987, %v3055
        %v3088 = vadd.f32 %v2988, %v3056
        %v3089 = vadd.f32 %v2989, %v3057
        %v3090 = vadd.f32 %v2990, %v3058
        %v3091 = vld [vmem:[%s2890 + $0x2] sm:$0xff]
        %v3092 = vld [vmem:[%s2890 + $0xa] sm:$0xff]
        %v3093 = vld [vmem:[%s2890 + $0x1a] sm:$0xff]
        %v3094 = vld [vmem:[%s2890 + $0x22] sm:$0xff]
        %v3095 = vld [vmem:[%s2890 + $0x32] sm:$0xff]
        %v3096 = vld [vmem:[%s2890 + $0x3a] sm:$0xff]
        %v3097 = vld [vmem:[%s2890 + $0x4a] sm:$0xff]
        %v3098 = vld [vmem:[%s2890 + $0x52] sm:$0xff]
        %v3099 = vld [vmem:[%s2890 + $0x62] sm:$0xff]
        %v3100 = vld [vmem:[%s2890 + $0x6a] sm:$0xff]
        %v3101 = vld [vmem:[%s2890 + $0x7a] sm:$0xff]
        %v3102 = vld [vmem:[%s2890 + $0x82] sm:$0xff]
        %v3103 = vld [vmem:[%s2890 + $0x92] sm:$0xff]
        %v3104 = vld [vmem:[%s2890 + $0x9a] sm:$0xff]
        %v3105 = vld [vmem:[%s2890 + $0xaa] sm:$0xff]
        %v3106 = vld [vmem:[%s2890 + $0xb2] sm:$0xff]
        %v3107 = vld [vmem:[%s2890 + $0xc2] sm:$0xff]
        %v3108 = vld [vmem:[%s2890 + $0xca] sm:$0xff]
        %v3109 = vld [vmem:[%s2890 + $0xda] sm:$0xff]
        %v3110 = vld [vmem:[%s2890 + $0xe2] sm:$0xff]
        %v3111 = vld [vmem:[%s2890 + $0xf2] sm:$0xff]
        %v3112 = vld [vmem:[%s2890 + $0xfa] sm:$0xff]
        %v3113 = vld [vmem:[%s2890 + $0x10a] sm:$0xff]
        %v3114 = vld [vmem:[%s2890 + $0x112] sm:$0xff]
        %v3115 = vld [vmem:[%s2890 + $0x122] sm:$0xff]
        %v3116 = vld [vmem:[%s2890 + $0x12a] sm:$0xff]
        %v3117 = vld [vmem:[%s2890 + $0x13a] sm:$0xff]
        %v3118 = vld [vmem:[%s2890 + $0x142] sm:$0xff]
        %v3119 = vld [vmem:[%s2890 + $0x152] sm:$0xff]
        %v3120 = vld [vmem:[%s2890 + $0x15a] sm:$0xff]
        %v3121 = vld [vmem:[%s2890 + $0x16a] sm:$0xff]
        %v3122 = vld [vmem:[%s2890 + $0x172] sm:$0xff]
        %v3123 = vlaneseq
        %v3124 = vshrl.u32 %v3123, 7
        %v3125 = vsub.s32 0, %v3124
        %v3126 = vrot.slane %v2321, %v3125
        %v3127 = vmul.f32 %v3091, %v3126
        %v3128 = vmul.f32 %v3092, %v3126
        %v3129 = vmul.f32 %v3093, %v3126
        %v3130 = vmul.f32 %v3094, %v3126
        %v3131 = vmul.f32 %v3095, %v3126
        %v3132 = vmul.f32 %v3096, %v3126
        %v3133 = vmul.f32 %v3097, %v3126
        %v3134 = vmul.f32 %v3098, %v3126
        %v3135 = vmul.f32 %v3099, %v3126
        %v3136 = vmul.f32 %v3100, %v3126
        %v3137 = vmul.f32 %v3101, %v3126
        %v3138 = vmul.f32 %v3102, %v3126
        %v3139 = vmul.f32 %v3103, %v3126
        %v3140 = vmul.f32 %v3104, %v3126
        %v3141 = vmul.f32 %v3105, %v3126
        %v3142 = vmul.f32 %v3106, %v3126
        %v3143 = vmul.f32 %v3107, %v3126
        %v3144 = vmul.f32 %v3108, %v3126
        %v3145 = vmul.f32 %v3109, %v3126
        %v3146 = vmul.f32 %v3110, %v3126
        %v3147 = vmul.f32 %v3111, %v3126
        %v3148 = vmul.f32 %v3112, %v3126
        %v3149 = vmul.f32 %v3113, %v3126
        %v3150 = vmul.f32 %v3114, %v3126
        %v3151 = vmul.f32 %v3115, %v3126
        %v3152 = vmul.f32 %v3116, %v3126
        %v3153 = vmul.f32 %v3117, %v3126
        %v3154 = vmul.f32 %v3118, %v3126
        %v3155 = vmul.f32 %v3119, %v3126
        %v3156 = vmul.f32 %v3120, %v3126
        %v3157 = vmul.f32 %v3121, %v3126
        %v3158 = vmul.f32 %v3122, %v3126
        %v3159 = vadd.f32 %v3059, %v3127
        %v3160 = vadd.f32 %v3060, %v3128
        %v3161 = vadd.f32 %v3061, %v3129
        %v3162 = vadd.f32 %v3062, %v3130
        %v3163 = vadd.f32 %v3063, %v3131
        %v3164 = vadd.f32 %v3064, %v3132
        %v3165 = vadd.f32 %v3065, %v3133
        %v3166 = vadd.f32 %v3066, %v3134
        %v3167 = vadd.f32 %v3067, %v3135
        %v3168 = vadd.f32 %v3068, %v3136
        %v3169 = vadd.f32 %v3069, %v3137
        %v3170 = vadd.f32 %v3070, %v3138
        %v3171 = vadd.f32 %v3071, %v3139
        %v3172 = vadd.f32 %v3072, %v3140
        %v3173 = vadd.f32 %v3073, %v3141
        %v3174 = vadd.f32 %v3074, %v3142
        %v3175 = vadd.f32 %v3075, %v3143
        %v3176 = vadd.f32 %v3076, %v3144
        %v3177 = vadd.f32 %v3077, %v3145
        %v3178 = vadd.f32 %v3078, %v3146
        %v3179 = vadd.f32 %v3079, %v3147
        %v3180 = vadd.f32 %v3080, %v3148
        %v3181 = vadd.f32 %v3081, %v3149
        %v3182 = vadd.f32 %v3082, %v3150
        %v3183 = vadd.f32 %v3083, %v3151
        %v3184 = vadd.f32 %v3084, %v3152
        %v3185 = vadd.f32 %v3085, %v3153
        %v3186 = vadd.f32 %v3086, %v3154
        %v3187 = vadd.f32 %v3087, %v3155
        %v3188 = vadd.f32 %v3088, %v3156
        %v3189 = vadd.f32 %v3089, %v3157
        %v3190 = vadd.f32 %v3090, %v3158
        %v3191 = vld [vmem:[%s4] sm:$0x1]
        %v3193 = vlaneseq
        %v3194 = vshrl.u32 %v3193, 7
        %v3195 = vsub.s32 0, %v3194
        %v3196 = vrot.slane %v3191, %v3195
        %v3198 = vadd.f32 %v3159, %v3196
        %v3199 = vadd.f32 %v3160, %v3196
        %v3200 = vadd.f32 %v3161, %v3196
        %v3201 = vadd.f32 %v3162, %v3196
        %v3202 = vadd.f32 %v3163, %v3196
        %v3203 = vadd.f32 %v3164, %v3196
        %v3204 = vadd.f32 %v3165, %v3196
        %v3205 = vadd.f32 %v3166, %v3196
        %v3206 = vadd.f32 %v3167, %v3196
        %v3207 = vadd.f32 %v3168, %v3196
        %v3208 = vadd.f32 %v3169, %v3196
        %v3209 = vadd.f32 %v3170, %v3196
        %v3210 = vadd.f32 %v3171, %v3196
        %v3211 = vadd.f32 %v3172, %v3196
        %v3212 = vadd.f32 %v3173, %v3196
        %v3213 = vadd.f32 %v3174, %v3196
        %v3214 = vadd.f32 %v3175, %v3196
        %v3215 = vadd.f32 %v3176, %v3196
        %v3216 = vadd.f32 %v3177, %v3196
        %v3217 = vadd.f32 %v3178, %v3196
        %v3218 = vadd.f32 %v3179, %v3196
        %v3219 = vadd.f32 %v3180, %v3196
        %v3220 = vadd.f32 %v3181, %v3196
        %v3221 = vadd.f32 %v3182, %v3196
        %v3222 = vadd.f32 %v3183, %v3196
        %v3223 = vadd.f32 %v3184, %v3196
        %v3224 = vadd.f32 %v3185, %v3196
        %v3225 = vadd.f32 %v3186, %v3196
        %v3226 = vadd.f32 %v3187, %v3196
        %v3227 = vadd.f32 %v3188, %v3196
        %v3228 = vadd.f32 %v3189, %v3196
        %v3229 = vadd.f32 %v3190, %v3196
        %v3230 = vmax.f32 %v3198, 0.0
        %v3231 = vmax.f32 %v3199, 0.0
        %v3232 = vmax.f32 %v3200, 0.0
        %v3233 = vmax.f32 %v3201, 0.0
        %v3234 = vmax.f32 %v3202, 0.0
        %v3235 = vmax.f32 %v3203, 0.0
        %v3236 = vmax.f32 %v3204, 0.0
        %v3237 = vmax.f32 %v3205, 0.0
        %v3238 = vmax.f32 %v3206, 0.0
        %v3239 = vmax.f32 %v3207, 0.0
        %v3240 = vmax.f32 %v3208, 0.0
        %v3241 = vmax.f32 %v3209, 0.0
        %v3242 = vmax.f32 %v3210, 0.0
        %v3243 = vmax.f32 %v3211, 0.0
        %v3244 = vmax.f32 %v3212, 0.0
        %v3245 = vmax.f32 %v3213, 0.0
        %v3246 = vmax.f32 %v3214, 0.0
        %v3247 = vmax.f32 %v3215, 0.0
        %v3248 = vmax.f32 %v3216, 0.0
        %v3249 = vmax.f32 %v3217, 0.0
        %v3250 = vmax.f32 %v3218, 0.0
        %v3251 = vmax.f32 %v3219, 0.0
        %v3252 = vmax.f32 %v3220, 0.0
        %v3253 = vmax.f32 %v3221, 0.0
        %v3254 = vmax.f32 %v3222, 0.0
        %v3255 = vmax.f32 %v3223, 0.0
        %v3256 = vmax.f32 %v3224, 0.0
        %v3257 = vmax.f32 %v3225, 0.0
        %v3258 = vmax.f32 %v3226, 0.0
        %v3259 = vmax.f32 %v3227, 0.0
        %v3260 = vmax.f32 %v3228, 0.0
        %v3261 = vmax.f32 %v3229, 0.0
        %v3262 = vmin.f32 %v3230, 6.0
        %v3263 = vmin.f32 %v3231, 6.0
        %v3264 = vmin.f32 %v3232, 6.0
        %v3265 = vmin.f32 %v3233, 6.0
        %v3266 = vmin.f32 %v3234, 6.0
        %v3267 = vmin.f32 %v3235, 6.0
        %v3268 = vmin.f32 %v3236, 6.0
        %v3269 = vmin.f32 %v3237, 6.0
        %v3270 = vmin.f32 %v3238, 6.0
        %v3271 = vmin.f32 %v3239, 6.0
        %v3272 = vmin.f32 %v3240, 6.0
        %v3273 = vmin.f32 %v3241, 6.0
        %v3274 = vmin.f32 %v3242, 6.0
        %v3275 = vmin.f32 %v3243, 6.0
        %v3276 = vmin.f32 %v3244, 6.0
        %v3277 = vmin.f32 %v3245, 6.0
        %v3278 = vmin.f32 %v3246, 6.0
        %v3279 = vmin.f32 %v3247, 6.0
        %v3280 = vmin.f32 %v3248, 6.0
        %v3281 = vmin.f32 %v3249, 6.0
        %v3282 = vmin.f32 %v3250, 6.0
        %v3283 = vmin.f32 %v3251, 6.0
        %v3284 = vmin.f32 %v3252, 6.0
        %v3285 = vmin.f32 %v3253, 6.0
        %v3286 = vmin.f32 %v3254, 6.0
        %v3287 = vmin.f32 %v3255, 6.0
        %v3288 = vmin.f32 %v3256, 6.0
        %v3289 = vmin.f32 %v3257, 6.0
        %v3290 = vmin.f32 %v3258, 6.0
        %v3291 = vmin.f32 %v3259, 6.0
        %v3292 = vmin.f32 %v3260, 6.0
        %v3293 = vmin.f32 %v3261, 6.0
        %3294 = vst [vmem:[%s248] sm:$0xff] %v3262
        %3295 = vst [vmem:[%s248 + $0x8] sm:$0xff] %v3263
        %3296 = vst [vmem:[%s248 + $0x10] sm:$0xff] %v3264
        %3297 = vst [vmem:[%s248 + $0x18] sm:$0xff] %v3265
        %3298 = vst [vmem:[%s248 + $0x20] sm:$0xff] %v3266
        %3299 = vst [vmem:[%s248 + $0x28] sm:$0xff] %v3267
        %3300 = vst [vmem:[%s248 + $0x30] sm:$0xff] %v3268
        %3301 = vst [vmem:[%s248 + $0x38] sm:$0xff] %v3269
        %3302 = vst [vmem:[%s248 + $0x40] sm:$0xff] %v3270
        %3303 = vst [vmem:[%s248 + $0x48] sm:$0xff] %v3271
        %3304 = vst [vmem:[%s248 + $0x50] sm:$0xff] %v3272
        %3305 = vst [vmem:[%s248 + $0x58] sm:$0xff] %v3273
        %3306 = vst [vmem:[%s248 + $0x60] sm:$0xff] %v3274
        %3307 = vst [vmem:[%s248 + $0x68] sm:$0xff] %v3275
        %3308 = vst [vmem:[%s248 + $0x70] sm:$0xff] %v3276
        %3309 = vst [vmem:[%s248 + $0x78] sm:$0xff] %v3277
        %3310 = vst [vmem:[%s248 + $0x80] sm:$0xff] %v3278
        %3311 = vst [vmem:[%s248 + $0x88] sm:$0xff] %v3279
        %3312 = vst [vmem:[%s248 + $0x90] sm:$0xff] %v3280
        %3313 = vst [vmem:[%s248 + $0x98] sm:$0xff] %v3281
        %3314 = vst [vmem:[%s248 + $0xa0] sm:$0xff] %v3282
        %3315 = vst [vmem:[%s248 + $0xa8] sm:$0xff] %v3283
        %3316 = vst [vmem:[%s248 + $0xb0] sm:$0xff] %v3284
        %3317 = vst [vmem:[%s248 + $0xb8] sm:$0xff] %v3285
        %3318 = vst [vmem:[%s248 + $0xc0] sm:$0xff] %v3286
        %3319 = vst [vmem:[%s248 + $0xc8] sm:$0xff] %v3287
        %3320 = vst [vmem:[%s248 + $0xd0] sm:$0xff] %v3288
        %3321 = vst [vmem:[%s248 + $0xd8] sm:$0xff] %v3289
        %3322 = vst [vmem:[%s248 + $0xe0] sm:$0xff] %v3290
        %3323 = vst [vmem:[%s248 + $0xe8] sm:$0xff] %v3291
        %3324 = vst [vmem:[%s248 + $0xf0] sm:$0xff] %v3292
        %3325 = vst [vmem:[%s248 + $0xf8] sm:$0xff] %v3293
        %v3326 = vadd.f32 %v3262, %v3263
        %v3327 = vadd.f32 %v3326, %v3264
        %v3328 = vadd.f32 %v3327, %v3265
        %v3329 = vadd.f32 %v3328, %v3266
        %v3330 = vadd.f32 %v3329, %v3267
        %v3331 = vadd.f32 %v3330, %v3268
        %v3332 = vadd.f32 %v3331, %v3269
        %v3333 = vadd.f32 %v3332, %v3270
        %v3334 = vadd.f32 %v3333, %v3271
        %v3335 = vadd.f32 %v3334, %v3272
        %v3336 = vadd.f32 %v3335, %v3273
        %v3337 = vadd.f32 %v3336, %v3274
        %v3338 = vadd.f32 %v3337, %v3275
        %v3339 = vadd.f32 %v3338, %v3276
        %v3340 = vadd.f32 %v3339, %v3277
        %v3341 = vadd.f32 %v3340, %v3278
        %v3342 = vadd.f32 %v3341, %v3279
        %v3343 = vadd.f32 %v3342, %v3280
        %v3344 = vadd.f32 %v3343, %v3281
        %v3345 = vadd.f32 %v3344, %v3282
        %v3346 = vadd.f32 %v3345, %v3283
        %v3347 = vadd.f32 %v3346, %v3284
        %v3348 = vadd.f32 %v3347, %v3285
        %v3349 = vadd.f32 %v3348, %v3286
        %v3350 = vadd.f32 %v3349, %v3287
        %v3351 = vadd.f32 %v3350, %v3288
        %v3352 = vadd.f32 %v3351, %v3289
        %v3353 = vadd.f32 %v3352, %v3290
        %v3354 = vadd.f32 %v3353, %v3291
        %v3355 = vadd.f32 %v3354, %v3292
        %v3356 = vadd.f32 %v3355, %v3293
        %v3357 = vrot.slane %v3356, 4
        %v3358 = vadd.f32 %v3356, %v3357
        %v3359 = vrot.slane %v3358, 2
        %v3360 = vadd.f32 %v3358, %v3359
        %v3361 = vrot.slane %v3360, 1
        %v3362 = vadd.f32 %v3360, %v3361
        %3363 = vst [vmem:[%s254] sm:$0x1] %v3362
        %s3364 = sand.u32 %s142, 1
        %s3365 = scalar_lea.sflag [#allocation4], %s3364
        %s3366 = sand.u32 %s142, 1
        %s3367 = smul.addr %s3366, 256
        %s3368 = scalar_lea.vmem [#allocation3], %s3367
        %s3369 = sand.u32 %s168, 1
        %s3370 = scalar_lea.sflag [#allocation6], %s3369
        %s3371 = sand.u32 %s168, 1
        %s3372 = scalar_lea.vmem [#allocation5], %s3371
        // Predicated region
        $region41: #{tpu_custom_call.1} parent=39 // pred_check
          %p3373 = pneg %p152
        $region42: #{tpu_custom_call.1} parent=39 // pred_check_branch
          %3375 = sbr.rel (%p3373) target = $region44
        $region43: #{tpu_custom_call.1} parent=39 // pred_region
          %s3377 = ssub.s32 4096, 4096
          %3378 = vsyncadd %s3365, %s3377
          %s3379 = smul.addr %s24, 32
          %s3380 = smul.addr %s3379, 128
          %s3381 = scalar_lea.hbm %s5, %s3380
          %s3382 = sshll.u32 %s3368, 4
          %s3383 = int_to_ptr.vmem [resolvable:$true] %s3382
          %3388 = dma.vmem_to_hbm [thread:$0]  %s3383, 4096, %s3381, %s3365, 128, 128, 8
        $region44: #{tpu_custom_call.1} parent=39 // pred_fallthru
          _
        // Predicated region
        $region45: #{tpu_custom_call.1} parent=39 // pred_check
          %p3389 = pneg %p178
        $region46: #{tpu_custom_call.1} parent=39 // pred_check_branch
          %3391 = sbr.rel (%p3389) target = $region48
        $region47: #{tpu_custom_call.1} parent=39 // pred_region
          %s3393 = ssub.s32 16, 16
          %3394 = vsyncadd %s3370, %s3393
          %s3395 = smul.addr %s24, 16
          %s3396 = scalar_lea.hbm %s6, %s3395
          %s3398 = sshll.u32 %s3372, 4
          %s3399 = int_to_ptr.vmem [resolvable:$true] %s3398
          %3401 = dma.vmem_to_hbm [thread:$0]  %s3399, 16, %s3396, %s3370
        $region48: #{tpu_custom_call.1} parent=39 // pred_fallthru
          _
      $region40: #{tpu_custom_call.1} parent=5 // pred_fallthru
        _
      %p3402 = scmp.le.s32.totalorder 2, %s19
      // Predicated region
      $region49: #{tpu_custom_call.1} parent=5 // pred_check
        %p3403 = pneg %p3402
      $region50: #{tpu_custom_call.1} parent=5 // pred_check_branch
        %3405 = sbr.rel (%p3403) target = $region52
      $region51: #{tpu_custom_call.1} parent=5 // pred_region
        %s3406 = ssub.s32 %s19, 2
        // Predicated region
        $region53: #{tpu_custom_call.1} parent=51 // pred_check
          %p3407 = pneg %p158
        $region54: #{tpu_custom_call.1} parent=51 // pred_check_branch
          %3409 = sbr.rel (%p3407) target = $region56
        $region55: #{tpu_custom_call.1} parent=51 // pred_region
          %s3410 = sand.u32 %s143, 1
          %s3411 = scalar_lea.sflag [#allocation4], %s3410
          %s3412 = sand.u32 %s143, 1
          %s3413 = smul.addr %s3412, 256
          %s3414 = scalar_lea.vmem [#allocation3], %s3413
          %3415 = dma.done %s3411, 4096
        $region56: #{tpu_custom_call.1} parent=51 // pred_fallthru
          _
        // Predicated region
        $region57: #{tpu_custom_call.1} parent=51 // pred_check
          %p3416 = pneg %p184
        $region58: #{tpu_custom_call.1} parent=51 // pred_check_branch
          %3418 = sbr.rel (%p3416) target = $region60
        $region59: #{tpu_custom_call.1} parent=51 // pred_region
          %s3419 = sand.u32 %s169, 1
          %s3420 = scalar_lea.sflag [#allocation6], %s3419
          %s3421 = sand.u32 %s169, 1
          %s3422 = scalar_lea.vmem [#allocation5], %s3421
          %3423 = dma.done %s3420, 16
        $region60: #{tpu_custom_call.1} parent=51 // pred_fallthru
          _
      $region52: #{tpu_custom_call.1} parent=5 // pred_fallthru
        _
    $region6: #{tpu_custom_call.1} parent=1 // loop_footer
      %s23 = sadd.s32 1, %s19
    $region7: #{tpu_custom_call.1} parent=1 // loop_footer_branch
      %18 = sbr.rel target = $region3
    $region8: #{tpu_custom_call.1} parent=1 // loop_exit
      _
    %3424 = vsyncpa [#allocation4], 1
    %s3425 = scalar_lea.sflag [#allocation4], 1
    %3426 = vsyncpa %s3425, 1
    %3427 = vsyncpa [#allocation6], 1
    %s3428 = scalar_lea.sflag [#allocation6], 1
    %3429 = vsyncpa %s3428, 1

</llo_original>
